<compile_context>
chip_gen: v5e
topology: v5e:2x2
jax: 0.10.0
libtpu: 0.0.40
codegen_flags: <defaults>
</compile_context>

<pallas_src>
import math

import jax
import jax.numpy as jnp
from jax.experimental import pallas as pl
from jax.experimental.pallas import tpu as pltpu


# ------------------------------ tiling helper ------------------------------

def _pick_tile(dim, pref, mult):
    """Largest tile <= pref that divides `dim` and is a multiple of `mult`;
    falls back to the full dimension (always valid: full-dim blocks)."""
    if dim <= pref:
        return dim
    t = (pref // mult) * mult
    while t >= mult:
        if dim % t == 0:
            return t
        t -= mult
    return dim


# ----------------------------- Pallas kernels ------------------------------

def _make_linear_kernel(act, has_ln, has_res, l2norm):
    """Tiled matmul with optional fusions:
         o = [l2norm]( act( LN(x) @ w + b ) [+ residual] )
       K axis is grid axis 2.  LN fusion requires tk == K (full rows),
       l2norm fusion requires tn == N (full output rows)."""

    def kernel(*refs):
        x_ref, w_ref, b_ref = refs[0], refs[1], refs[2]
        pos = 3
        g_ref = be_ref = r_ref = None
        if has_ln:
            g_ref, be_ref = refs[pos], refs[pos + 1]
            pos += 2
        if has_res:
            r_ref = refs[pos]
            pos += 1
        o_ref, acc_ref = refs[pos], refs[pos + 1]

        k = pl.program_id(2)

        @pl.when(k == 0)
        def _():
            acc_ref[...] = jnp.zeros_like(acc_ref)

        x = x_ref[...]
        if has_ln:
            # Pre-matmul LayerNorm on the x tile (full rows, stats in f32),
            # eps=1e-5 matching nn.LayerNorm.
            xf = x.astype(jnp.float32)
            mu = jnp.mean(xf, axis=-1, keepdims=True)
            var = jnp.mean((xf - mu) ** 2, axis=-1, keepdims=True)
            xf = (xf - mu) * jax.lax.rsqrt(var + 1e-5)
            x = (xf * g_ref[...] + be_ref[...]).astype(jnp.bfloat16)

        acc_ref[...] += jnp.dot(x, w_ref[...], preferred_element_type=jnp.float32)

        @pl.when(k == pl.num_programs(2) - 1)
        def _():
            h = acc_ref[...] + b_ref[...]
            if act == "gelu":
                # TODO(synk): torch.nn.GELU default is exact erf-GELU; using the
                #             tanh approximation (erf lowering not guaranteed).
                c = math.sqrt(2.0 / math.pi)
                h = 0.5 * h * (1.0 + jnp.tanh(c * (h + 0.044715 * h * h * h)))
            if r_ref is not None:
                h = h + r_ref[...].astype(jnp.float32)
            if l2norm:
                # F.normalize(x, dim=-1): x * rsqrt(max(|x|^2, 1e-24))
                sq = jnp.sum(h * h, axis=-1, keepdims=True)
                h = h * jax.lax.rsqrt(jnp.maximum(sq, 1e-24))
            o_ref[...] = h.astype(o_ref.dtype)

    return kernel


def _layernorm_kernel(x_ref, g_ref, b_ref, o_ref):
    # Row-wise LayerNorm, statistics in f32, eps=1e-5 (matches nn.LayerNorm).
    x = x_ref[...].astype(jnp.float32)
    mu = jnp.mean(x, axis=-1, keepdims=True)
    var = jnp.mean((x - mu) ** 2, axis=-1, keepdims=True)
    y = (x - mu) * jax.lax.rsqrt(var + 1e-5)
    o_ref[...] = (y * g_ref[...] + b_ref[...]).astype(o_ref.dtype)


def _make_attn_kernel(heads, dh, causal, scale):
    """One batch element per grid step; all heads processed from the packed
    (S, 3D) qkv slab.  Causal mask built in-kernel (no mask DMA)."""
    D = heads * dh

    def kernel(qkv_ref, o_ref):
        qkv = qkv_ref[0]                      # (S, 3D) bf16
        S = qkv.shape[0]
        if causal:
            row = jax.lax.broadcasted_iota(jnp.int32, (S, S), 0)
            col = jax.lax.broadcasted_iota(jnp.int32, (S, S), 1)
            neg = jnp.where(col > row, -jnp.inf, 0.0).astype(jnp.float32)
        outs = []
        for h in range(heads):                # static unroll over heads
            q = qkv[:, h * dh:(h + 1) * dh]
            k = qkv[:, D + h * dh:D + (h + 1) * dh]
            v = qkv[:, 2 * D + h * dh:2 * D + (h + 1) * dh]
            s = jax.lax.dot_general(
                q, k, (((1,), (1,)), ((), ())),
                preferred_element_type=jnp.float32,
            ) * scale
            if causal:
                s = s + neg
            s = s - jnp.max(s, axis=-1, keepdims=True)
            p = jnp.exp(s)
            p = p * pl.reciprocal(jnp.sum(p, axis=-1, keepdims=True), approx=True)
            outs.append(jnp.dot(p.astype(v.dtype), v,
                                preferred_element_type=jnp.float32))
        o_ref[0] = jnp.concatenate(outs, axis=-1).astype(o_ref.dtype)

    return kernel


# ----------------------------- kernel wrappers -----------------------------

def pallas_linear(x, w, b=None, act=None, residual=None, ln=None, l2norm=False,
                  out_dtype=jnp.bfloat16, tm=256, tn=512, tk=512):
    """x: (M, K), w: (K, N).
    Tiled o = [l2norm](act(LN(x) @ w + b) [+ residual])."""
    M, K = x.shape
    N = w.shape[1]
    x = x.astype(jnp.bfloat16)
    w = w.astype(jnp.bfloat16)                       # no-op if stored as bf16
    if b is None:
        b = jnp.zeros((N,), jnp.float32)
    b2 = b.reshape(1, N).astype(jnp.float32)

    tm = _pick_tile(M, tm, 8)
    tk = K if ln is not None else _pick_tile(K, tk, 128)   # LN needs full rows
    tn = N if l2norm else _pick_tile(N, tn, 128)            # l2 needs full rows
    grid = (M // tm, N // tn, K // tk)

    in_specs = [
        pl.BlockSpec((tm, tk), lambda i, j, k: (i, k)),
        pl.BlockSpec((tk, tn), lambda i, j, k: (k, j)),
        pl.BlockSpec((1, tn), lambda i, j, k: (0, j)),
    ]
    args = [x, w, b2]
    if ln is not None:
        g, be = ln
        in_specs += [pl.BlockSpec((1, tk), lambda i, j, k: (0, k)),
                     pl.BlockSpec((1, tk), lambda i, j, k: (0, k))]
        args += [g.reshape(1, K).astype(jnp.float32),
                 be.reshape(1, K).astype(jnp.float32)]
    if residual is not None:
        in_specs.append(pl.BlockSpec((tm, tn), lambda i, j, k: (i, j)))
        args.append(residual)

    return pl.pallas_call(
        _make_linear_kernel(act, ln is not None, residual is not None, l2norm),
        out_shape=jax.ShapeDtypeStruct((M, N), out_dtype),
        grid=grid,
        in_specs=in_specs,
        out_specs=pl.BlockSpec((tm, tn), lambda i, j, k: (i, j)),
        scratch_shapes=[pltpu.VMEM((tm, tn), jnp.float32)],
        compiler_params=pltpu.CompilerParams(
            dimension_semantics=("parallel", "parallel", "arbitrary")),
    )(*args)


def pallas_layernorm(x, g, b, out_dtype=jnp.bfloat16, tm=256):
    """x: (M, D), g/b: (D,).  Row-tiled streaming LayerNorm (un-fused path,
    used where the LN output is itself the residual stream, e.g. ln_pre)."""
    M, D = x.shape
    tm = _pick_tile(M, tm, 8)
    return pl.pallas_call(
        _layernorm_kernel,
        out_shape=jax.ShapeDtypeStruct((M, D), out_dtype),
        grid=(M // tm,),
        in_specs=[
            pl.BlockSpec((tm, D), lambda i: (i, 0)),
            pl.BlockSpec((1, D), lambda i: (0, 0)),
            pl.BlockSpec((1, D), lambda i: (0, 0)),
        ],
        out_specs=pl.BlockSpec((tm, D), lambda i: (i, 0)),
        compiler_params=pltpu.CompilerParams(dimension_semantics=("parallel",)),
    )(x, g.reshape(1, D).astype(jnp.float32), b.reshape(1, D).astype(jnp.float32))


def pallas_attention(qkv, heads, causal):
    """qkv: (B, S, 3D) packed projection output.  Returns (B, S, D)."""
    B, S, D3 = qkv.shape
    D = D3 // 3
    dh = D // heads
    # TODO(synk): for very long sequences this should become a flash-style
    #             kernel tiled over q/kv; whole-sequence per batch is fine for
    #             CLIP-scale S (<= a few hundred tokens).
    return pl.pallas_call(
        _make_attn_kernel(heads, dh, causal, dh ** -0.5),
        out_shape=jax.ShapeDtypeStruct((B, S, D), qkv.dtype),
        grid=(B,),
        in_specs=[pl.BlockSpec((1, S, D3), lambda b: (b, 0, 0))],
        out_specs=pl.BlockSpec((1, S, D), lambda b: (b, 0, 0)),
        compiler_params=pltpu.CompilerParams(dimension_semantics=("parallel",)),
    )(qkv)


# --------------------------- transformer modules ---------------------------

def residual_attention_block(x, p, heads, causal):
    """x + attn(ln1(x)); then + mlp(ln2(.)).  LayerNorms fused into the
    matmuls that consume them; residual adds fused into out_proj / c_proj."""
    B, S, D = x.shape
    x2 = x.reshape(B * S, D)
    # ln_1 fused into the packed in-projection
    qkv = pallas_linear(x2, p["in_proj_w"], p["in_proj_b"],
                        ln=(p["ln1_g"], p["ln1_b"]))
    o = pallas_attention(qkv.reshape(B, S, 3 * D), heads, causal)     # (B,S,D)
    # out_proj with fused residual add (x + attn)
    x2 = pallas_linear(o.reshape(B * S, D), p["out_proj_w"], p["out_proj_b"],
                       residual=x2)
    # ln_2 fused into c_fc (+ GELU); c_proj with fused residual add
    h = pallas_linear(x2, p["fc_w"], p["fc_b"], act="gelu",
                      ln=(p["ln2_g"], p["ln2_b"]))
    x2 = pallas_linear(h, p["proj_w"], p["proj_b"], residual=x2)
    return x2.reshape(B, S, D)


# ------------------------------- CLIP towers -------------------------------

def encode_image(image, vp, cfg, normalize=True):
    B, C, H, W = image.shape
    P, D = cfg["patch_size"], cfg["vision_width"]
    gh, gw = H // P, W // P
    # conv1 (stride=kernel=patch, no bias) as im2col + tiled Pallas matmul
    patches = (
        image.reshape(B, C, gh, P, gw, P)
        .transpose(0, 2, 4, 1, 3, 5)
        .reshape(B * gh * gw, C * P * P)
    )
    x = pallas_linear(patches, vp["conv_w"], None).reshape(B, gh * gw, D)
    cls = jnp.broadcast_to(vp["cls"].reshape(1, 1, D).astype(x.dtype), (B, 1, D))
    x = jnp.concatenate([cls, x], axis=1)                           # (B, S, D)
    x = x + vp["pos"][None, :, :].astype(x.dtype)
    S = x.shape[1]
    # ln_pre output IS the residual stream -> must be materialized (un-fused)
    x = pallas_layernorm(x.reshape(B * S, D), vp["ln_pre_g"], vp["ln_pre_b"]).reshape(B, S, D)
    for blk in vp["blocks"]:
        x = residual_attention_block(x, blk, cfg["vision_heads"], causal=False)
    # cls-token pool.  LayerNorm is per-row, so pool-then-ln_post == ln_post-then-pool;
    # ln_post and the L2-normalize are fused into the projection matmul.
    pooled = x[:, 0]                                                # (B, D)
    return pallas_linear(pooled, vp["proj"], None,
                         ln=(vp["ln_post_g"], vp["ln_post_b"]),
                         l2norm=normalize, out_dtype=jnp.float32)


def encode_text(text, tp, cfg, normalize=True):
    B, S = text.shape
    D = cfg["text_width"]
    # token embedding as a gather (not a one-hot @ table matmul)
    x = jnp.take(tp["tok_emb"], text, axis=0)                       # (B, S, D) bf16
    x = x + tp["pos"][None, :, :].astype(x.dtype)
    for blk in tp["blocks"]:
        x = residual_attention_block(x, blk, cfg["text_heads"], causal=True)
    # EOT pool (argmax token id).  LayerNorm is per-row, so gather-then-ln_final
    # == ln_final-then-gather; ln_final + L2-normalize fused into the projection.
    eot = jnp.argmax(text, axis=-1)
    pooled = x[jnp.arange(B), eot]                                  # (B, D)
    return pallas_linear(pooled, tp["text_proj"], None,
                         ln=(tp["lnf_g"], tp["lnf_b"]),
                         l2norm=normalize, out_dtype=jnp.float32)


def clip_forward(image, text, params, cfg):
    img_f = encode_image(image, params["visual"], cfg, normalize=True)
    txt_f = encode_text(text, params["text"], cfg, normalize=True)
    return img_f, txt_f, jnp.exp(params["logit_scale"])


# ----------------------------- parameter init ------------------------------
# Matmul weights are stored in bf16 (cast once here, not per layer call);
# LayerNorm params and biases stay f32.

def _normal(key, shape, std, dtype=jnp.bfloat16):
    return (std * jax.random.normal(key, shape, dtype=jnp.float32)).astype(dtype)


def init_block(key, D, mlp):
    ks = jax.random.split(key, 4)
    return {
        "ln1_g": jnp.ones((D,), jnp.float32), "ln1_b": jnp.zeros((D,), jnp.float32),
        "in_proj_w": _normal(ks[0], (D, 3 * D), D ** -0.5),
        "in_proj_b": jnp.zeros((3 * D,), jnp.float32),
        "out_proj_w": _normal(ks[1], (D, D), D ** -0.5),
        "out_proj_b": jnp.zeros((D,), jnp.float32),
        "ln2_g": jnp.ones((D,), jnp.float32), "ln2_b": jnp.zeros((D,), jnp.float32),
        "fc_w": _normal(ks[2], (D, mlp), D ** -0.5),
        "fc_b": jnp.zeros((mlp,), jnp.float32),
        "proj_w": _normal(ks[3], (mlp, D), mlp ** -0.5),
        "proj_b": jnp.zeros((D,), jnp.float32),
    }


def init_params(key, cfg):
    kv, kt = jax.random.split(key, 2)
    D, E, P = cfg["vision_width"], cfg["embed_dim"], cfg["patch_size"]
    gh = cfg["image_size"] // P
    n_tok = gh * gh + 1
    kvs = jax.random.split(kv, 4 + cfg["vision_layers"])
    visual = {
        "conv_w": _normal(kvs[0], (3 * P * P, D), (3 * P * P) ** -0.5),
        "cls": _normal(kvs[1], (D,), D ** -0.5, jnp.float32),
        "pos": _normal(kvs[2], (n_tok, D), D ** -0.5, jnp.float32),
        "ln_pre_g": jnp.ones((D,), jnp.float32), "ln_pre_b": jnp.zeros((D,), jnp.float32),
        "ln_post_g": jnp.ones((D,), jnp.float32), "ln_post_b": jnp.zeros((D,), jnp.float32),
        "proj": _normal(kvs[3], (D, E), D ** -0.5),
        "blocks": [init_block(kvs[4 + i], D, cfg["vision_mlp"])
                   for i in range(cfg["vision_layers"])],
    }
    Dt, V, S = cfg["text_width"], cfg["vocab_size"], cfg["context_length"]
    kts = jax.random.split(kt, 3 + cfg["text_layers"])
    textp = {
        "tok_emb": _normal(kts[0], (V, Dt), 0.02),
        "pos": _normal(kts[1], (S, Dt), 0.01, jnp.float32),
        "lnf_g": jnp.ones((Dt,), jnp.float32), "lnf_b": jnp.zeros((Dt,), jnp.float32),
        "text_proj": _normal(kts[2], (Dt, E), Dt ** -0.5),
        "blocks": [init_block(kts[3 + i], Dt, cfg["text_mlp"])
                   for i in range(cfg["text_layers"])],
    }
    return {
        "visual": visual,
        "text": textp,
        "logit_scale": jnp.asarray(math.log(1.0 / 0.07), jnp.float32),
    }


# ---------------------------------- main -----------------------------------

if __name__ == "__main__":
    cfg = dict(
        embed_dim=32,
        image_size=16, patch_size=8, vision_width=32, vision_layers=2,
        vision_heads=2, vision_mlp=128,          # head_width = 16, mlp_ratio = 4
        context_length=8, vocab_size=64, text_width=32, text_layers=2,
        text_heads=2, text_mlp=128,
    )

    key = jax.random.PRNGKey(0)
    k_par, k_img, k_txt = jax.random.split(key, 3)
    params = init_params(k_par, cfg)

    image = jax.random.normal(k_img, (2, 3, 16, 16), dtype=jnp.float32)   # NCHW
    text = jax.random.randint(k_txt, (2, cfg["context_length"]), 1, cfg["vocab_size"] - 1)
    text = text.at[:, -1].set(cfg["vocab_size"] - 1)  # unique max token id -> EOT position

    fwd = jax.jit(lambda im, tx, pr: clip_forward(im, tx, pr, cfg))
    img_f, txt_f, logit_scale = fwd(image, text, params)
    jax.block_until_ready((img_f, txt_f, logit_scale))

    assert img_f.shape == (2, cfg["embed_dim"]) and txt_f.shape == (2, cfg["embed_dim"])
    print("KERNEL_OK")
</pallas_src>

<mosaic_0001>
module attributes {stable_mosaic.version = 11 : i64} {
  func.func @kernel(%arg0: i32, %arg1: i32, %arg2: i32, %arg3: memref<8x192xbf16, #tpu.memory_space<vmem>>, %arg4: memref<192x32xbf16, #tpu.memory_space<vmem>>, %arg5: memref<1x32xf32, #tpu.memory_space<vmem>>, %arg6: memref<8x32xbf16, #tpu.memory_space<vmem>>, %arg7: memref<8x32xf32, #tpu.memory_space<vmem>>) attributes {dimension_semantics = [#tpu.dimension_semantics<parallel>, #tpu.dimension_semantics<parallel>, #tpu.dimension_semantics<arbitrary>], iteration_bounds = array<i64: 1, 1, 1>, scalar_prefetch = 0 : i64, scratch_operands = 1 : i64, tpu.core_type = #tpu.core_type<tc>, window_params = [{transform_indices = @transform_0, window_bounds = array<i64: 8, 192>}, {transform_indices = @transform_1, window_bounds = array<i64: 192, 32>}, {transform_indices = @transform_2, window_bounds = array<i64: 1, 32>}, {transform_indices = @transform_3, window_bounds = array<i64: 8, 32>}]} {
    %c0_i32 = arith.constant 0 : i32
    %0 = arith.cmpi eq, %arg2, %c0_i32 : i32
    %1 = arith.extui %0 : i1 to i32
    %c0_i32_0 = arith.constant 0 : i32
    %2 = arith.cmpi ne, %1, %c0_i32_0 : i32
    scf.if %2 {
      %cst_10 = arith.constant 0.000000e+00 : f32
      %12 = vector.broadcast %cst_10 : f32 to vector<8x32xf32>
      %c0_11 = arith.constant 0 : index
      %c0_12 = arith.constant 0 : index
      %13 = vector.load %arg7[%c0_11, %c0_12] : memref<8x32xf32, #tpu.memory_space<vmem>>, vector<8x32xf32>
      tpu.vector_store %arg7[%c0_11, %c0_12], %12 {strides = array<i32>} : memref<8x32xf32, #tpu.memory_space<vmem>>, vector<8x32xf32>,
    } else {
    }
    %c0 = arith.constant 0 : index
    %c0_1 = arith.constant 0 : index
    %3 = vector.load %arg3[%c0, %c0_1] : memref<8x192xbf16, #tpu.memory_space<vmem>>, vector<8x192xbf16>
    %c0_2 = arith.constant 0 : index
    %c0_3 = arith.constant 0 : index
    %4 = vector.load %arg7[%c0_2, %c0_3] : memref<8x32xf32, #tpu.memory_space<vmem>>, vector<8x32xf32>
    %c0_4 = arith.constant 0 : index
    %c0_5 = arith.constant 0 : index
    %5 = vector.load %arg4[%c0_4, %c0_5] : memref<192x32xbf16, #tpu.memory_space<vmem>>, vector<192x32xbf16>
    %cst = arith.constant dense<0.000000e+00> : vector<8x32xf32>
    %6 = tpu.matmul %3, %5, %cst {dimension_numbers = #tpu.dot_dimension_numbers<[1], [0], [0], [1], [0, 0, 1, 1], [], []>} : vector<8x192xbf16>, vector<192x32xbf16>, vector<8x32xf32> -> vector<8x32xf32>
    %7 = arith.addf %4, %6 : vector<8x32xf32>
    %c0_6 = arith.constant 0 : index
    %c0_7 = arith.constant 0 : index
    %8 = vector.load %arg7[%c0_6, %c0_7] : memref<8x32xf32, #tpu.memory_space<vmem>>, vector<8x32xf32>
    tpu.vector_store %arg7[%c0_6, %c0_7], %7 {strides = array<i32>} : memref<8x32xf32, #tpu.memory_space<vmem>>, vector<8x32xf32>,
    %c0_i32_8 = arith.constant 0 : i32
    %9 = arith.cmpi eq, %arg2, %c0_i32_8 : i32
    %10 = arith.extui %9 : i1 to i32
    %c0_i32_9 = arith.constant 0 : i32
    %11 = arith.cmpi ne, %10, %c0_i32_9 : i32
    scf.if %11 {
      %c0_10 = arith.constant 0 : index
      %c0_11 = arith.constant 0 : index
      %12 = vector.load %arg7[%c0_10, %c0_11] : memref<8x32xf32, #tpu.memory_space<vmem>>, vector<8x32xf32>
      %c0_12 = arith.constant 0 : index
      %c0_13 = arith.constant 0 : index
      %13 = vector.load %arg5[%c0_12, %c0_13] : memref<1x32xf32, #tpu.memory_space<vmem>>, vector<1x32xf32>
      %14 = vector.broadcast %13 : vector<1x32xf32> to vector<8x32xf32>
      %15 = arith.addf %12, %14 : vector<8x32xf32>
      %16 = arith.truncf %15 : vector<8x32xf32> to vector<8x32xbf16>
      %c0_14 = arith.constant 0 : index
      %c0_15 = arith.constant 0 : index
      %17 = vector.load %arg6[%c0_14, %c0_15] : memref<8x32xbf16, #tpu.memory_space<vmem>>, vector<8x32xbf16>
      tpu.vector_store %arg6[%c0_14, %c0_15], %16 {strides = array<i32>} : memref<8x32xbf16, #tpu.memory_space<vmem>>, vector<8x32xbf16>,
    } else {
    }
    return
  }
  func.func @transform_0(%arg0: i32, %arg1: i32, %arg2: i32) -> (i32, i32) {
    %c0_i32 = arith.constant 0 : i32
    return %arg0, %arg2 : i32, i32
  }
  func.func @transform_1(%arg0: i32, %arg1: i32, %arg2: i32) -> (i32, i32) {
    %c0_i32 = arith.constant 0 : i32
    return %arg2, %arg1 : i32, i32
  }
  func.func @transform_2(%arg0: i32, %arg1: i32, %arg2: i32) -> (i32, i32) {
    %c0_i32 = arith.constant 0 : i32
    %c0_i32_0 = arith.constant 0 : i32
    return %c0_i32, %arg1 : i32, i32
  }
  func.func @transform_3(%arg0: i32, %arg1: i32, %arg2: i32) -> (i32, i32) {
    %c0_i32 = arith.constant 0 : i32
    return %arg0, %arg1 : i32, i32
  }
}

module attributes {stable_mosaic.version = 11 : i64} {
  func.func @_layernorm_kernel(%arg0: i32, %arg1: memref<10x32xbf16, #tpu.memory_space<vmem>>, %arg2: memref<1x32xf32, #tpu.memory_space<vmem>>, %arg3: memref<1x32xf32, #tpu.memory_space<vmem>>, %arg4: memref<10x32xbf16, #tpu.memory_space<vmem>>) attributes {dimension_semantics = [#tpu.dimension_semantics<parallel>], iteration_bounds = array<i64: 1>, scalar_prefetch = 0 : i64, scratch_operands = 0 : i64, tpu.core_type = #tpu.core_type<tc>, window_params = [{transform_indices = @transform_0, window_bounds = array<i64: 10, 32>}, {pipeline_mode = #tpu.pipeline_mode<synchronous>, transform_indices = @transform_1, window_bounds = array<i64: 1, 32>}, {pipeline_mode = #tpu.pipeline_mode<synchronous>, transform_indices = @transform_2, window_bounds = array<i64: 1, 32>}, {transform_indices = @transform_3, window_bounds = array<i64: 10, 32>}]} {
    %c0 = arith.constant 0 : index
    %c0_0 = arith.constant 0 : index
    %0 = vector.load %arg1[%c0, %c0_0] : memref<10x32xbf16, #tpu.memory_space<vmem>>, vector<10x32xbf16>
    %1 = arith.extf %0 : vector<10x32xbf16> to vector<10x32xf32>
    %cst = arith.constant dense<0.000000e+00> : vector<10xf32>
    %2 = vector.multi_reduction <add>, %1, %cst [1] : vector<10x32xf32> to vector<10xf32>
    %3 = vector.shape_cast %2 : vector<10xf32> to vector<10x1xf32>
    %cst_1 = arith.constant 3.200000e+01 : f32
    %4 = vector.broadcast %cst_1 : f32 to vector<10x1xf32>
    %5 = arith.divf %3, %4 : vector<10x1xf32>
    %6 = vector.broadcast %5 : vector<10x1xf32> to vector<10x32xf32>
    %7 = arith.subf %1, %6 : vector<10x32xf32>
    %8 = arith.mulf %7, %7 : vector<10x32xf32>
    %cst_2 = arith.constant dense<0.000000e+00> : vector<10xf32>
    %9 = vector.multi_reduction <add>, %8, %cst_2 [1] : vector<10x32xf32> to vector<10xf32>
    %10 = vector.shape_cast %9 : vector<10xf32> to vector<10x1xf32>
    %cst_3 = arith.constant 3.200000e+01 : f32
    %11 = vector.broadcast %cst_3 : f32 to vector<10x1xf32>
    %12 = arith.divf %10, %11 : vector<10x1xf32>
    %13 = vector.broadcast %5 : vector<10x1xf32> to vector<10x32xf32>
    %14 = arith.subf %1, %13 : vector<10x32xf32>
    %cst_4 = arith.constant 9.99999974E-6 : f32
    %15 = vector.broadcast %cst_4 : f32 to vector<10x1xf32>
    %16 = arith.addf %12, %15 : vector<10x1xf32>
    %17 = math.rsqrt %16 : vector<10x1xf32>
    %18 = vector.broadcast %17 : vector<10x1xf32> to vector<10x32xf32>
    %19 = arith.mulf %14, %18 : vector<10x32xf32>
    %c0_5 = arith.constant 0 : index
    %c0_6 = arith.constant 0 : index
    %20 = vector.load %arg2[%c0_5, %c0_6] : memref<1x32xf32, #tpu.memory_space<vmem>>, vector<1x32xf32>
    %21 = vector.broadcast %20 : vector<1x32xf32> to vector<10x32xf32>
    %22 = arith.mulf %19, %21 : vector<10x32xf32>
    %c0_7 = arith.constant 0 : index
    %c0_8 = arith.constant 0 : index
    %23 = vector.load %arg3[%c0_7, %c0_8] : memref<1x32xf32, #tpu.memory_space<vmem>>, vector<1x32xf32>
    %24 = vector.broadcast %23 : vector<1x32xf32> to vector<10x32xf32>
    %25 = arith.addf %22, %24 : vector<10x32xf32>
    %26 = arith.truncf %25 : vector<10x32xf32> to vector<10x32xbf16>
    %c0_9 = arith.constant 0 : index
    %c0_10 = arith.constant 0 : index
    %27 = vector.load %arg4[%c0_9, %c0_10] : memref<10x32xbf16, #tpu.memory_space<vmem>>, vector<10x32xbf16>
    tpu.vector_store %arg4[%c0_9, %c0_10], %26 {strides = array<i32>} : memref<10x32xbf16, #tpu.memory_space<vmem>>, vector<10x32xbf16>,
    return
  }
  func.func @transform_0(%arg0: i32) -> (i32, i32) {
    %c0_i32 = arith.constant 0 : i32
    %c0_i32_0 = arith.constant 0 : i32
    return %arg0, %c0_i32 : i32, i32
  }
  func.func @transform_1(%arg0: i32) -> (i32, i32) {
    %c0_i32 = arith.constant 0 : i32
    %c0_i32_0 = arith.constant 0 : i32
    %c0_i32_1 = arith.constant 0 : i32
    return %c0_i32, %c0_i32_0 : i32, i32
  }
  func.func @transform_2(%arg0: i32) -> (i32, i32) {
    %c0_i32 = arith.constant 0 : i32
    %c0_i32_0 = arith.constant 0 : i32
    %c0_i32_1 = arith.constant 0 : i32
    return %c0_i32, %c0_i32_0 : i32, i32
  }
  func.func @transform_3(%arg0: i32) -> (i32, i32) {
    %c0_i32 = arith.constant 0 : i32
    %c0_i32_0 = arith.constant 0 : i32
    return %arg0, %c0_i32 : i32, i32
  }
}

module attributes {stable_mosaic.version = 11 : i64} {
  func.func @kernel(%arg0: i32, %arg1: i32, %arg2: i32, %arg3: memref<10x32xbf16, #tpu.memory_space<vmem>>, %arg4: memref<32x96xbf16, #tpu.memory_space<vmem>>, %arg5: memref<1x96xf32, #tpu.memory_space<vmem>>, %arg6: memref<1x32xf32, #tpu.memory_space<vmem>>, %arg7: memref<1x32xf32, #tpu.memory_space<vmem>>, %arg8: memref<10x96xbf16, #tpu.memory_space<vmem>>, %arg9: memref<10x96xf32, #tpu.memory_space<vmem>>) attributes {dimension_semantics = [#tpu.dimension_semantics<parallel>, #tpu.dimension_semantics<parallel>, #tpu.dimension_semantics<arbitrary>], iteration_bounds = array<i64: 1, 1, 1>, scalar_prefetch = 0 : i64, scratch_operands = 1 : i64, tpu.core_type = #tpu.core_type<tc>, window_params = [{transform_indices = @transform_0, window_bounds = array<i64: 10, 32>}, {transform_indices = @transform_1, window_bounds = array<i64: 32, 96>}, {transform_indices = @transform_2, window_bounds = array<i64: 1, 96>}, {transform_indices = @transform_3, window_bounds = array<i64: 1, 32>}, {transform_indices = @transform_4, window_bounds = array<i64: 1, 32>}, {transform_indices = @transform_5, window_bounds = array<i64: 10, 96>}]} {
    %c0_i32 = arith.constant 0 : i32
    %0 = arith.cmpi eq, %arg2, %c0_i32 : i32
    %1 = arith.extui %0 : i1 to i32
    %c0_i32_0 = arith.constant 0 : i32
    %2 = arith.cmpi ne, %1, %c0_i32_0 : i32
    scf.if %2 {
      %cst_19 = arith.constant 0.000000e+00 : f32
      %38 = vector.broadcast %cst_19 : f32 to vector<10x96xf32>
      %c0_20 = arith.constant 0 : index
      %c0_21 = arith.constant 0 : index
      %39 = vector.load %arg9[%c0_20, %c0_21] : memref<10x96xf32, #tpu.memory_space<vmem>>, vector<10x96xf32>
      tpu.vector_store %arg9[%c0_20, %c0_21], %38 {strides = array<i32>} : memref<10x96xf32, #tpu.memory_space<vmem>>, vector<10x96xf32>,
    } else {
    }
    %c0 = arith.constant 0 : index
    %c0_1 = arith.constant 0 : index
    %3 = vector.load %arg3[%c0, %c0_1] : memref<10x32xbf16, #tpu.memory_space<vmem>>, vector<10x32xbf16>
    %4 = arith.extf %3 : vector<10x32xbf16> to vector<10x32xf32>
    %cst = arith.constant dense<0.000000e+00> : vector<10xf32>
    %5 = vector.multi_reduction <add>, %4, %cst [1] : vector<10x32xf32> to vector<10xf32>
    %6 = vector.shape_cast %5 : vector<10xf32> to vector<10x1xf32>
    %cst_2 = arith.constant 3.200000e+01 : f32
    %7 = vector.broadcast %cst_2 : f32 to vector<10x1xf32>
    %8 = arith.divf %6, %7 : vector<10x1xf32>
    %9 = vector.broadcast %8 : vector<10x1xf32> to vector<10x32xf32>
    %10 = arith.subf %4, %9 : vector<10x32xf32>
    %11 = arith.mulf %10, %10 : vector<10x32xf32>
    %cst_3 = arith.constant dense<0.000000e+00> : vector<10xf32>
    %12 = vector.multi_reduction <add>, %11, %cst_3 [1] : vector<10x32xf32> to vector<10xf32>
    %13 = vector.shape_cast %12 : vector<10xf32> to vector<10x1xf32>
    %cst_4 = arith.constant 3.200000e+01 : f32
    %14 = vector.broadcast %cst_4 : f32 to vector<10x1xf32>
    %15 = arith.divf %13, %14 : vector<10x1xf32>
    %16 = vector.broadcast %8 : vector<10x1xf32> to vector<10x32xf32>
    %17 = arith.subf %4, %16 : vector<10x32xf32>
    %cst_5 = arith.constant 9.99999974E-6 : f32
    %18 = vector.broadcast %cst_5 : f32 to vector<10x1xf32>
    %19 = arith.addf %15, %18 : vector<10x1xf32>
    %20 = math.rsqrt %19 : vector<10x1xf32>
    %21 = vector.broadcast %20 : vector<10x1xf32> to vector<10x32xf32>
    %22 = arith.mulf %17, %21 : vector<10x32xf32>
    %c0_6 = arith.constant 0 : index
    %c0_7 = arith.constant 0 : index
    %23 = vector.load %arg6[%c0_6, %c0_7] : memref<1x32xf32, #tpu.memory_space<vmem>>, vector<1x32xf32>
    %24 = vector.broadcast %23 : vector<1x32xf32> to vector<10x32xf32>
    %25 = arith.mulf %22, %24 : vector<10x32xf32>
    %c0_8 = arith.constant 0 : index
    %c0_9 = arith.constant 0 : index
    %26 = vector.load %arg7[%c0_8, %c0_9] : memref<1x32xf32, #tpu.memory_space<vmem>>, vector<1x32xf32>
    %27 = vector.broadcast %26 : vector<1x32xf32> to vector<10x32xf32>
    %28 = arith.addf %25, %27 : vector<10x32xf32>
    %29 = arith.truncf %28 : vector<10x32xf32> to vector<10x32xbf16>
    %c0_10 = arith.constant 0 : index
    %c0_11 = arith.constant 0 : index
    %30 = vector.load %arg9[%c0_10, %c0_11] : memref<10x96xf32, #tpu.memory_space<vmem>>, vector<10x96xf32>
    %c0_12 = arith.constant 0 : index
    %c0_13 = arith.constant 0 : index
    %31 = vector.load %arg4[%c0_12, %c0_13] : memref<32x96xbf16, #tpu.memory_space<vmem>>, vector<32x96xbf16>
    %cst_14 = arith.constant dense<0.000000e+00> : vector<10x96xf32>
    %32 = tpu.matmul %29, %31, %cst_14 {dimension_numbers = #tpu.dot_dimension_numbers<[1], [0], [0], [1], [0, 0, 1, 1], [], []>} : vector<10x32xbf16>, vector<32x96xbf16>, vector<10x96xf32> -> vector<10x96xf32>
    %33 = arith.addf %30, %32 : vector<10x96xf32>
    %c0_15 = arith.constant 0 : index
    %c0_16 = arith.constant 0 : index
    %34 = vector.load %arg9[%c0_15, %c0_16] : memref<10x96xf32, #tpu.memory_space<vmem>>, vector<10x96xf32>
    tpu.vector_store %arg9[%c0_15, %c0_16], %33 {strides = array<i32>} : memref<10x96xf32, #tpu.memory_space<vmem>>, vector<10x96xf32>,
    %c0_i32_17 = arith.constant 0 : i32
    %35 = arith.cmpi eq, %arg2, %c0_i32_17 : i32
    %36 = arith.extui %35 : i1 to i32
    %c0_i32_18 = arith.constant 0 : i32
    %37 = arith.cmpi ne, %36, %c0_i32_18 : i32
    scf.if %37 {
      %c0_19 = arith.constant 0 : index
      %c0_20 = arith.constant 0 : index
      %38 = vector.load %arg9[%c0_19, %c0_20] : memref<10x96xf32, #tpu.memory_space<vmem>>, vector<10x96xf32>
      %c0_21 = arith.constant 0 : index
      %c0_22 = arith.constant 0 : index
      %39 = vector.load %arg5[%c0_21, %c0_22] : memref<1x96xf32, #tpu.memory_space<vmem>>, vector<1x96xf32>
      %40 = vector.broadcast %39 : vector<1x96xf32> to vector<10x96xf32>
      %41 = arith.addf %38, %40 : vector<10x96xf32>
      %42 = arith.truncf %41 : vector<10x96xf32> to vector<10x96xbf16>
      %c0_23 = arith.constant 0 : index
      %c0_24 = arith.constant 0 : index
      %43 = vector.load %arg8[%c0_23, %c0_24] : memref<10x96xbf16, #tpu.memory_space<vmem>>, vector<10x96xbf16>
      tpu.vector_store %arg8[%c0_23, %c0_24], %42 {strides = array<i32>} : memref<10x96xbf16, #tpu.memory_space<vmem>>, vector<10x96xbf16>,
    } else {
    }
    return
  }
  func.func @transform_0(%arg0: i32, %arg1: i32, %arg2: i32) -> (i32, i32) {
    %c0_i32 = arith.constant 0 : i32
    return %arg0, %arg2 : i32, i32
  }
  func.func @transform_1(%arg0: i32, %arg1: i32, %arg2: i32) -> (i32, i32) {
    %c0_i32 = arith.constant 0 : i32
    return %arg2, %arg1 : i32, i32
  }
  func.func @transform_2(%arg0: i32, %arg1: i32, %arg2: i32) -> (i32, i32) {
    %c0_i32 = arith.constant 0 : i32
    %c0_i32_0 = arith.constant 0 : i32
    return %c0_i32, %arg1 : i32, i32
  }
  func.func @transform_3(%arg0: i32, %arg1: i32, %arg2: i32) -> (i32, i32) {
    %c0_i32 = arith.constant 0 : i32
    %c0_i32_0 = arith.constant 0 : i32
    return %c0_i32, %arg2 : i32, i32
  }
  func.func @transform_4(%arg0: i32, %arg1: i32, %arg2: i32) -> (i32, i32) {
    %c0_i32 = arith.constant 0 : i32
    %c0_i32_0 = arith.constant 0 : i32
    return %c0_i32, %arg2 : i32, i32
  }
  func.func @transform_5(%arg0: i32, %arg1: i32, %arg2: i32) -> (i32, i32) {
    %c0_i32 = arith.constant 0 : i32
    return %arg0, %arg1 : i32, i32
  }
}

module attributes {stable_mosaic.version = 11 : i64} {
  func.func @kernel(%arg0: i32, %arg1: memref<1x5x96xbf16, #tpu.memory_space<vmem>>, %arg2: memref<1x5x32xbf16, #tpu.memory_space<vmem>>) attributes {dimension_semantics = [#tpu.dimension_semantics<parallel>], iteration_bounds = array<i64: 2>, scalar_prefetch = 0 : i64, scratch_operands = 0 : i64, tpu.core_type = #tpu.core_type<tc>, window_params = [{transform_indices = @transform_0, window_bounds = array<i64: 1, 5, 96>}, {transform_indices = @transform_1, window_bounds = array<i64: 1, 5, 32>}]} {
    %c0 = arith.constant 0 : index
    %c0_0 = arith.constant 0 : index
    %c0_1 = arith.constant 0 : index
    %0 = vector.load %arg1[%c0, %c0_0, %c0_1] : memref<1x5x96xbf16, #tpu.memory_space<vmem>>, vector<1x5x96xbf16>
    %1 = vector.shape_cast %0 : vector<1x5x96xbf16> to vector<5x96xbf16>
    %2 = vector.extract_strided_slice %1 {offsets = [0, 0], sizes = [5, 16], strides = [1, 1]} : vector<5x96xbf16> to vector<5x16xbf16>
    %3 = vector.extract_strided_slice %1 {offsets = [0, 32], sizes = [5, 16], strides = [1, 1]} : vector<5x96xbf16> to vector<5x16xbf16>
    %4 = vector.extract_strided_slice %1 {offsets = [0, 64], sizes = [5, 16], strides = [1, 1]} : vector<5x96xbf16> to vector<5x16xbf16>
    %cst = arith.constant dense<0.000000e+00> : vector<5x5xf32>
    %5 = tpu.matmul %2, %3, %cst {dimension_numbers = #tpu.dot_dimension_numbers<[1], [1], [0], [0], [0, 0, 1, 0], [], []>} : vector<5x16xbf16>, vector<5x16xbf16>, vector<5x5xf32> -> vector<5x5xf32>
    %cst_2 = arith.constant 2.500000e-01 : f32
    %6 = vector.broadcast %cst_2 : f32 to vector<5x5xf32>
    %7 = arith.mulf %5, %6 : vector<5x5xf32>
    %cst_3 = arith.constant dense<0xFF800000> : vector<5xf32>
    %8 = vector.multi_reduction <maximumf>, %7, %cst_3 [1] : vector<5x5xf32> to vector<5xf32>
    %9 = vector.shape_cast %8 : vector<5xf32> to vector<5x1xf32>
    %10 = vector.broadcast %9 : vector<5x1xf32> to vector<5x5xf32>
    %11 = arith.subf %7, %10 : vector<5x5xf32>
    %12 = math.exp %11 : vector<5x5xf32>
    %cst_4 = arith.constant dense<0.000000e+00> : vector<5xf32>
    %13 = vector.multi_reduction <add>, %12, %cst_4 [1] : vector<5x5xf32> to vector<5xf32>
    %14 = vector.shape_cast %13 : vector<5xf32> to vector<5x1xf32>
    %15 = tpu.reciprocal %14 {approx = true} : vector<5x1xf32> -> vector<5x1xf32>
    %16 = vector.broadcast %15 : vector<5x1xf32> to vector<5x5xf32>
    %17 = arith.mulf %12, %16 : vector<5x5xf32>
    %18 = arith.truncf %17 : vector<5x5xf32> to vector<5x5xbf16>
    %cst_5 = arith.constant dense<0.000000e+00> : vector<5x16xf32>
    %19 = tpu.matmul %18, %4, %cst_5 {dimension_numbers = #tpu.dot_dimension_numbers<[1], [0], [0], [1], [0, 0, 1, 1], [], []>} : vector<5x5xbf16>, vector<5x16xbf16>, vector<5x16xf32> -> vector<5x16xf32>
    %20 = vector.extract_strided_slice %1 {offsets = [0, 16], sizes = [5, 16], strides = [1, 1]} : vector<5x96xbf16> to vector<5x16xbf16>
    %21 = vector.extract_strided_slice %1 {offsets = [0, 48], sizes = [5, 16], strides = [1, 1]} : vector<5x96xbf16> to vector<5x16xbf16>
    %22 = vector.extract_strided_slice %1 {offsets = [0, 80], sizes = [5, 16], strides = [1, 1]} : vector<5x96xbf16> to vector<5x16xbf16>
    %cst_6 = arith.constant dense<0.000000e+00> : vector<5x5xf32>
    %23 = tpu.matmul %20, %21, %cst_6 {dimension_numbers = #tpu.dot_dimension_numbers<[1], [1], [0], [0], [0, 0, 1, 0], [], []>} : vector<5x16xbf16>, vector<5x16xbf16>, vector<5x5xf32> -> vector<5x5xf32>
    %cst_7 = arith.constant 2.500000e-01 : f32
    %24 = vector.broadcast %cst_7 : f32 to vector<5x5xf32>
    %25 = arith.mulf %23, %24 : vector<5x5xf32>
    %cst_8 = arith.constant dense<0xFF800000> : vector<5xf32>
    %26 = vector.multi_reduction <maximumf>, %25, %cst_8 [1] : vector<5x5xf32> to vector<5xf32>
    %27 = vector.shape_cast %26 : vector<5xf32> to vector<5x1xf32>
    %28 = vector.broadcast %27 : vector<5x1xf32> to vector<5x5xf32>
    %29 = arith.subf %25, %28 : vector<5x5xf32>
    %30 = math.exp %29 : vector<5x5xf32>
    %cst_9 = arith.constant dense<0.000000e+00> : vector<5xf32>
    %31 = vector.multi_reduction <add>, %30, %cst_9 [1] : vector<5x5xf32> to vector<5xf32>
    %32 = vector.shape_cast %31 : vector<5xf32> to vector<5x1xf32>
    %33 = tpu.reciprocal %32 {approx = true} : vector<5x1xf32> -> vector<5x1xf32>
    %34 = vector.broadcast %33 : vector<5x1xf32> to vector<5x5xf32>
    %35 = arith.mulf %30, %34 : vector<5x5xf32>
    %36 = arith.truncf %35 : vector<5x5xf32> to vector<5x5xbf16>
    %cst_10 = arith.constant dense<0.000000e+00> : vector<5x16xf32>
    %37 = tpu.matmul %36, %22, %cst_10 {dimension_numbers = #tpu.dot_dimension_numbers<[1], [0], [0], [1], [0, 0, 1, 1], [], []>} : vector<5x5xbf16>, vector<5x16xbf16>, vector<5x16xf32> -> vector<5x16xf32>
    %38 = tpu.concatenate %19, %37 in 1 : vector<5x16xf32>, vector<5x16xf32> -> vector<5x32xf32>
    %39 = arith.truncf %38 : vector<5x32xf32> to vector<5x32xbf16>
    %c0_11 = arith.constant 0 : index
    %c0_12 = arith.constant 0 : index
    %c0_13 = arith.constant 0 : index
    %40 = vector.load %arg2[%c0_11, %c0_12, %c0_13] : memref<1x5x32xbf16, #tpu.memory_space<vmem>>, vector<1x5x32xbf16>
    %41 = vector.shape_cast %40 : vector<1x5x32xbf16> to vector<5x32xbf16>
    %42 = vector.shape_cast %39 : vector<5x32xbf16> to vector<1x5x32xbf16>
    tpu.vector_store %arg2[%c0_11, %c0_12, %c0_13], %42 {strides = array<i32>} : memref<1x5x32xbf16, #tpu.memory_space<vmem>>, vector<1x5x32xbf16>,
    return
  }
  func.func @transform_0(%arg0: i32) -> (i32, i32, i32) {
    %c0_i32 = arith.constant 0 : i32
    %c0_i32_0 = arith.constant 0 : i32
    %c0_i32_1 = arith.constant 0 : i32
    return %arg0, %c0_i32, %c0_i32_0 : i32, i32, i32
  }
  func.func @transform_1(%arg0: i32) -> (i32, i32, i32) {
    %c0_i32 = arith.constant 0 : i32
    %c0_i32_0 = arith.constant 0 : i32
    %c0_i32_1 = arith.constant 0 : i32
    return %arg0, %c0_i32, %c0_i32_0 : i32, i32, i32
  }
}

module attributes {stable_mosaic.version = 11 : i64} {
  func.func @kernel(%arg0: i32, %arg1: i32, %arg2: i32, %arg3: memref<10x32xbf16, #tpu.memory_space<vmem>>, %arg4: memref<32x32xbf16, #tpu.memory_space<vmem>>, %arg5: memref<1x32xf32, #tpu.memory_space<vmem>>, %arg6: memref<10x32xbf16, #tpu.memory_space<vmem>>, %arg7: memref<10x32xbf16, #tpu.memory_space<vmem>>, %arg8: memref<10x32xf32, #tpu.memory_space<vmem>>) attributes {dimension_semantics = [#tpu.dimension_semantics<parallel>, #tpu.dimension_semantics<parallel>, #tpu.dimension_semantics<arbitrary>], iteration_bounds = array<i64: 1, 1, 1>, scalar_prefetch = 0 : i64, scratch_operands = 1 : i64, tpu.core_type = #tpu.core_type<tc>, window_params = [{transform_indices = @transform_0, window_bounds = array<i64: 10, 32>}, {transform_indices = @transform_1, window_bounds = array<i64: 32, 32>}, {transform_indices = @transform_2, window_bounds = array<i64: 1, 32>}, {transform_indices = @transform_3, window_bounds = array<i64: 10, 32>}, {transform_indices = @transform_4, window_bounds = array<i64: 10, 32>}]} {
    %c0_i32 = arith.constant 0 : i32
    %0 = arith.cmpi eq, %arg2, %c0_i32 : i32
    %1 = arith.extui %0 : i1 to i32
    %c0_i32_0 = arith.constant 0 : i32
    %2 = arith.cmpi ne, %1, %c0_i32_0 : i32
    scf.if %2 {
      %cst_10 = arith.constant 0.000000e+00 : f32
      %12 = vector.broadcast %cst_10 : f32 to vector<10x32xf32>
      %c0_11 = arith.constant 0 : index
      %c0_12 = arith.constant 0 : index
      %13 = vector.load %arg8[%c0_11, %c0_12] : memref<10x32xf32, #tpu.memory_space<vmem>>, vector<10x32xf32>
      tpu.vector_store %arg8[%c0_11, %c0_12], %12 {strides = array<i32>} : memref<10x32xf32, #tpu.memory_space<vmem>>, vector<10x32xf32>,
    } else {
    }
    %c0 = arith.constant 0 : index
    %c0_1 = arith.constant 0 : index
    %3 = vector.load %arg3[%c0, %c0_1] : memref<10x32xbf16, #tpu.memory_space<vmem>>, vector<10x32xbf16>
    %c0_2 = arith.constant 0 : index
    %c0_3 = arith.constant 0 : index
    %4 = vector.load %arg8[%c0_2, %c0_3] : memref<10x32xf32, #tpu.memory_space<vmem>>, vector<10x32xf32>
    %c0_4 = arith.constant 0 : index
    %c0_5 = arith.constant 0 : index
    %5 = vector.load %arg4[%c0_4, %c0_5] : memref<32x32xbf16, #tpu.memory_space<vmem>>, vector<32x32xbf16>
    %cst = arith.constant dense<0.000000e+00> : vector<10x32xf32>
    %6 = tpu.matmul %3, %5, %cst {dimension_numbers = #tpu.dot_dimension_numbers<[1], [0], [0], [1], [0, 0, 1, 1], [], []>} : vector<10x32xbf16>, vector<32x32xbf16>, vector<10x32xf32> -> vector<10x32xf32>
    %7 = arith.addf %4, %6 : vector<10x32xf32>
    %c0_6 = arith.constant 0 : index
    %c0_7 = arith.constant 0 : index
    %8 = vector.load %arg8[%c0_6, %c0_7] : memref<10x32xf32, #tpu.memory_space<vmem>>, vector<10x32xf32>
    tpu.vector_store %arg8[%c0_6, %c0_7], %7 {strides = array<i32>} : memref<10x32xf32, #tpu.memory_space<vmem>>, vector<10x32xf32>,
    %c0_i32_8 = arith.constant 0 : i32
    %9 = arith.cmpi eq, %arg2, %c0_i32_8 : i32
    %10 = arith.extui %9 : i1 to i32
    %c0_i32_9 = arith.constant 0 : i32
    %11 = arith.cmpi ne, %10, %c0_i32_9 : i32
    scf.if %11 {
      %c0_10 = arith.constant 0 : index
      %c0_11 = arith.constant 0 : index
      %12 = vector.load %arg8[%c0_10, %c0_11] : memref<10x32xf32, #tpu.memory_space<vmem>>, vector<10x32xf32>
      %c0_12 = arith.constant 0 : index
      %c0_13 = arith.constant 0 : index
      %13 = vector.load %arg5[%c0_12, %c0_13] : memref<1x32xf32, #tpu.memory_space<vmem>>, vector<1x32xf32>
      %14 = vector.broadcast %13 : vector<1x32xf32> to vector<10x32xf32>
      %15 = arith.addf %12, %14 : vector<10x32xf32>
      %c0_14 = arith.constant 0 : index
      %c0_15 = arith.constant 0 : index
      %16 = vector.load %arg6[%c0_14, %c0_15] : memref<10x32xbf16, #tpu.memory_space<vmem>>, vector<10x32xbf16>
      %17 = arith.extf %16 : vector<10x32xbf16> to vector<10x32xf32>
      %18 = arith.addf %15, %17 : vector<10x32xf32>
      %19 = arith.truncf %18 : vector<10x32xf32> to vector<10x32xbf16>
      %c0_16 = arith.constant 0 : index
      %c0_17 = arith.constant 0 : index
      %20 = vector.load %arg7[%c0_16, %c0_17] : memref<10x32xbf16, #tpu.memory_space<vmem>>, vector<10x32xbf16>
      tpu.vector_store %arg7[%c0_16, %c0_17], %19 {strides = array<i32>} : memref<10x32xbf16, #tpu.memory_space<vmem>>, vector<10x32xbf16>,
    } else {
    }
    return
  }
  func.func @transform_0(%arg0: i32, %arg1: i32, %arg2: i32) -> (i32, i32) {
    %c0_i32 = arith.constant 0 : i32
    return %arg0, %arg2 : i32, i32
  }
  func.func @transform_1(%arg0: i32, %arg1: i32, %arg2: i32) -> (i32, i32) {
    %c0_i32 = arith.constant 0 : i32
    return %arg2, %arg1 : i32, i32
  }
  func.func @transform_2(%arg0: i32, %arg1: i32, %arg2: i32) -> (i32, i32) {
    %c0_i32 = arith.constant 0 : i32
    %c0_i32_0 = arith.constant 0 : i32
    return %c0_i32, %arg1 : i32, i32
  }
  func.func @transform_3(%arg0: i32, %arg1: i32, %arg2: i32) -> (i32, i32) {
    %c0_i32 = arith.constant 0 : i32
    return %arg0, %arg1 : i32, i32
  }
  func.func @transform_4(%arg0: i32, %arg1: i32, %arg2: i32) -> (i32, i32) {
    %c0_i32 = arith.constant 0 : i32
    return %arg0, %arg1 : i32, i32
  }
}

module attributes {stable_mosaic.version = 11 : i64} {
  func.func @kernel(%arg0: i32, %arg1: i32, %arg2: i32, %arg3: memref<10x128xbf16, #tpu.memory_space<vmem>>, %arg4: memref<128x32xbf16, #tpu.memory_space<vmem>>, %arg5: memref<1x32xf32, #tpu.memory_space<vmem>>, %arg6: memref<10x32xbf16, #tpu.memory_space<vmem>>, %arg7: memref<10x32xbf16, #tpu.memory_space<vmem>>, %arg8: memref<10x32xf32, #tpu.memory_space<vmem>>) attributes {dimension_semantics = [#tpu.dimension_semantics<parallel>, #tpu.dimension_semantics<parallel>, #tpu.dimension_semantics<arbitrary>], iteration_bounds = array<i64: 1, 1, 1>, scalar_prefetch = 0 : i64, scratch_operands = 1 : i64, tpu.core_type = #tpu.core_type<tc>, window_params = [{transform_indices = @transform_0, window_bounds = array<i64: 10, 128>}, {transform_indices = @transform_1, window_bounds = array<i64: 128, 32>}, {transform_indices = @transform_2, window_bounds = array<i64: 1, 32>}, {transform_indices = @transform_3, window_bounds = array<i64: 10, 32>}, {transform_indices = @transform_4, window_bounds = array<i64: 10, 32>}]} {
    %c0_i32 = arith.constant 0 : i32
    %0 = arith.cmpi eq, %arg2, %c0_i32 : i32
    %1 = arith.extui %0 : i1 to i32
    %c0_i32_0 = arith.constant 0 : i32
    %2 = arith.cmpi ne, %1, %c0_i32_0 : i32
    scf.if %2 {
      %cst_10 = arith.constant 0.000000e+00 : f32
      %12 = vector.broadcast %cst_10 : f32 to vector<10x32xf32>
      %c0_11 = arith.constant 0 : index
      %c0_12 = arith.constant 0 : index
      %13 = vector.load %arg8[%c0_11, %c0_12] : memref<10x32xf32, #tpu.memory_space<vmem>>, vector<10x32xf32>
      tpu.vector_store %arg8[%c0_11, %c0_12], %12 {strides = array<i32>} : memref<10x32xf32, #tpu.memory_space<vmem>>, vector<10x32xf32>,
    } else {
    }
    %c0 = arith.constant 0 : index
    %c0_1 = arith.constant 0 : index
    %3 = vector.load %arg3[%c0, %c0_1] : memref<10x128xbf16, #tpu.memory_space<vmem>>, vector<10x128xbf16>
    %c0_2 = arith.constant 0 : index
    %c0_3 = arith.constant 0 : index
    %4 = vector.load %arg8[%c0_2, %c0_3] : memref<10x32xf32, #tpu.memory_space<vmem>>, vector<10x32xf32>
    %c0_4 = arith.constant 0 : index
    %c0_5 = arith.constant 0 : index
    %5 = vector.load %arg4[%c0_4, %c0_5] : memref<128x32xbf16, #tpu.memory_space<vmem>>, vector<128x32xbf16>
    %cst = arith.constant dense<0.000000e+00> : vector<10x32xf32>
    %6 = tpu.matmul %3, %5, %cst {dimension_numbers = #tpu.dot_dimension_numbers<[1], [0], [0], [1], [0, 0, 1, 1], [], []>} : vector<10x128xbf16>, vector<128x32xbf16>, vector<10x32xf32> -> vector<10x32xf32>
    %7 = arith.addf %4, %6 : vector<10x32xf32>
    %c0_6 = arith.constant 0 : index
    %c0_7 = arith.constant 0 : index
    %8 = vector.load %arg8[%c0_6, %c0_7] : memref<10x32xf32, #tpu.memory_space<vmem>>, vector<10x32xf32>
    tpu.vector_store %arg8[%c0_6, %c0_7], %7 {strides = array<i32>} : memref<10x32xf32, #tpu.memory_space<vmem>>, vector<10x32xf32>,
    %c0_i32_8 = arith.constant 0 : i32
    %9 = arith.cmpi eq, %arg2, %c0_i32_8 : i32
    %10 = arith.extui %9 : i1 to i32
    %c0_i32_9 = arith.constant 0 : i32
    %11 = arith.cmpi ne, %10, %c0_i32_9 : i32
    scf.if %11 {
      %c0_10 = arith.constant 0 : index
      %c0_11 = arith.constant 0 : index
      %12 = vector.load %arg8[%c0_10, %c0_11] : memref<10x32xf32, #tpu.memory_space<vmem>>, vector<10x32xf32>
      %c0_12 = arith.constant 0 : index
      %c0_13 = arith.constant 0 : index
      %13 = vector.load %arg5[%c0_12, %c0_13] : memref<1x32xf32, #tpu.memory_space<vmem>>, vector<1x32xf32>
      %14 = vector.broadcast %13 : vector<1x32xf32> to vector<10x32xf32>
      %15 = arith.addf %12, %14 : vector<10x32xf32>
      %c0_14 = arith.constant 0 : index
      %c0_15 = arith.constant 0 : index
      %16 = vector.load %arg6[%c0_14, %c0_15] : memref<10x32xbf16, #tpu.memory_space<vmem>>, vector<10x32xbf16>
      %17 = arith.extf %16 : vector<10x32xbf16> to vector<10x32xf32>
      %18 = arith.addf %15, %17 : vector<10x32xf32>
      %19 = arith.truncf %18 : vector<10x32xf32> to vector<10x32xbf16>
      %c0_16 = arith.constant 0 : index
      %c0_17 = arith.constant 0 : index
      %20 = vector.load %arg7[%c0_16, %c0_17] : memref<10x32xbf16, #tpu.memory_space<vmem>>, vector<10x32xbf16>
      tpu.vector_store %arg7[%c0_16, %c0_17], %19 {strides = array<i32>} : memref<10x32xbf16, #tpu.memory_space<vmem>>, vector<10x32xbf16>,
    } else {
    }
    return
  }
  func.func @transform_0(%arg0: i32, %arg1: i32, %arg2: i32) -> (i32, i32) {
    %c0_i32 = arith.constant 0 : i32
    return %arg0, %arg2 : i32, i32
  }
  func.func @transform_1(%arg0: i32, %arg1: i32, %arg2: i32) -> (i32, i32) {
    %c0_i32 = arith.constant 0 : i32
    return %arg2, %arg1 : i32, i32
  }
  func.func @transform_2(%arg0: i32, %arg1: i32, %arg2: i32) -> (i32, i32) {
    %c0_i32 = arith.constant 0 : i32
    %c0_i32_0 = arith.constant 0 : i32
    return %c0_i32, %arg1 : i32, i32
  }
  func.func @transform_3(%arg0: i32, %arg1: i32, %arg2: i32) -> (i32, i32) {
    %c0_i32 = arith.constant 0 : i32
    return %arg0, %arg1 : i32, i32
  }
  func.func @transform_4(%arg0: i32, %arg1: i32, %arg2: i32) -> (i32, i32) {
    %c0_i32 = arith.constant 0 : i32
    return %arg0, %arg1 : i32, i32
  }
}

module attributes {stable_mosaic.version = 11 : i64} {
  func.func @kernel(%arg0: i32, %arg1: i32, %arg2: i32, %arg3: memref<2x32xbf16, #tpu.memory_space<vmem>>, %arg4: memref<32x32xbf16, #tpu.memory_space<vmem>>, %arg5: memref<1x32xf32, #tpu.memory_space<vmem>>, %arg6: memref<1x32xf32, #tpu.memory_space<vmem>>, %arg7: memref<1x32xf32, #tpu.memory_space<vmem>>, %arg8: memref<2x32xf32, #tpu.memory_space<vmem>>, %arg9: memref<2x32xf32, #tpu.memory_space<vmem>>) attributes {dimension_semantics = [#tpu.dimension_semantics<parallel>, #tpu.dimension_semantics<parallel>, #tpu.dimension_semantics<arbitrary>], iteration_bounds = array<i64: 1, 1, 1>, scalar_prefetch = 0 : i64, scratch_operands = 1 : i64, tpu.core_type = #tpu.core_type<tc>, window_params = [{transform_indices = @transform_0, window_bounds = array<i64: 2, 32>}, {transform_indices = @transform_1, window_bounds = array<i64: 32, 32>}, {transform_indices = @transform_2, window_bounds = array<i64: 1, 32>}, {transform_indices = @transform_3, window_bounds = array<i64: 1, 32>}, {transform_indices = @transform_4, window_bounds = array<i64: 1, 32>}, {transform_indices = @transform_5, window_bounds = array<i64: 2, 32>}]} {
    %c0_i32 = arith.constant 0 : i32
    %0 = arith.cmpi eq, %arg2, %c0_i32 : i32
    %1 = arith.extui %0 : i1 to i32
    %c0_i32_0 = arith.constant 0 : i32
    %2 = arith.cmpi ne, %1, %c0_i32_0 : i32
    scf.if %2 {
      %cst_19 = arith.constant 0.000000e+00 : f32
      %38 = vector.broadcast %cst_19 : f32 to vector<2x32xf32>
      %c0_20 = arith.constant 0 : index
      %c0_21 = arith.constant 0 : index
      %39 = vector.load %arg9[%c0_20, %c0_21] : memref<2x32xf32, #tpu.memory_space<vmem>>, vector<2x32xf32>
      tpu.vector_store %arg9[%c0_20, %c0_21], %38 {strides = array<i32>} : memref<2x32xf32, #tpu.memory_space<vmem>>, vector<2x32xf32>,
    } else {
    }
    %c0 = arith.constant 0 : index
    %c0_1 = arith.constant 0 : index
    %3 = vector.load %arg3[%c0, %c0_1] : memref<2x32xbf16, #tpu.memory_space<vmem>>, vector<2x32xbf16>
    %4 = arith.extf %3 : vector<2x32xbf16> to vector<2x32xf32>
    %cst = arith.constant dense<0.000000e+00> : vector<2xf32>
    %5 = vector.multi_reduction <add>, %4, %cst [1] : vector<2x32xf32> to vector<2xf32>
    %6 = vector.shape_cast %5 : vector<2xf32> to vector<2x1xf32>
    %cst_2 = arith.constant 3.200000e+01 : f32
    %7 = vector.broadcast %cst_2 : f32 to vector<2x1xf32>
    %8 = arith.divf %6, %7 : vector<2x1xf32>
    %9 = vector.broadcast %8 : vector<2x1xf32> to vector<2x32xf32>
    %10 = arith.subf %4, %9 : vector<2x32xf32>
    %11 = arith.mulf %10, %10 : vector<2x32xf32>
    %cst_3 = arith.constant dense<0.000000e+00> : vector<2xf32>
    %12 = vector.multi_reduction <add>, %11, %cst_3 [1] : vector<2x32xf32> to vector<2xf32>
    %13 = vector.shape_cast %12 : vector<2xf32> to vector<2x1xf32>
    %cst_4 = arith.constant 3.200000e+01 : f32
    %14 = vector.broadcast %cst_4 : f32 to vector<2x1xf32>
    %15 = arith.divf %13, %14 : vector<2x1xf32>
    %16 = vector.broadcast %8 : vector<2x1xf32> to vector<2x32xf32>
    %17 = arith.subf %4, %16 : vector<2x32xf32>
    %cst_5 = arith.constant 9.99999974E-6 : f32
    %18 = vector.broadcast %cst_5 : f32 to vector<2x1xf32>
    %19 = arith.addf %15, %18 : vector<2x1xf32>
    %20 = math.rsqrt %19 : vector<2x1xf32>
    %21 = vector.broadcast %20 : vector<2x1xf32> to vector<2x32xf32>
    %22 = arith.mulf %17, %21 : vector<2x32xf32>
    %c0_6 = arith.constant 0 : index
    %c0_7 = arith.constant 0 : index
    %23 = vector.load %arg6[%c0_6, %c0_7] : memref<1x32xf32, #tpu.memory_space<vmem>>, vector<1x32xf32>
    %24 = vector.broadcast %23 : vector<1x32xf32> to vector<2x32xf32>
    %25 = arith.mulf %22, %24 : vector<2x32xf32>
    %c0_8 = arith.constant 0 : index
    %c0_9 = arith.constant 0 : index
    %26 = vector.load %arg7[%c0_8, %c0_9] : memref<1x32xf32, #tpu.memory_space<vmem>>, vector<1x32xf32>
    %27 = vector.broadcast %26 : vector<1x32xf32> to vector<2x32xf32>
    %28 = arith.addf %25, %27 : vector<2x32xf32>
    %29 = arith.truncf %28 : vector<2x32xf32> to vector<2x32xbf16>
    %c0_10 = arith.constant 0 : index
    %c0_11 = arith.constant 0 : index
    %30 = vector.load %arg9[%c0_10, %c0_11] : memref<2x32xf32, #tpu.memory_space<vmem>>, vector<2x32xf32>
    %c0_12 = arith.constant 0 : index
    %c0_13 = arith.constant 0 : index
    %31 = vector.load %arg4[%c0_12, %c0_13] : memref<32x32xbf16, #tpu.memory_space<vmem>>, vector<32x32xbf16>
    %cst_14 = arith.constant dense<0.000000e+00> : vector<2x32xf32>
    %32 = tpu.matmul %29, %31, %cst_14 {dimension_numbers = #tpu.dot_dimension_numbers<[1], [0], [0], [1], [0, 0, 1, 1], [], []>} : vector<2x32xbf16>, vector<32x32xbf16>, vector<2x32xf32> -> vector<2x32xf32>
    %33 = arith.addf %30, %32 : vector<2x32xf32>
    %c0_15 = arith.constant 0 : index
    %c0_16 = arith.constant 0 : index
    %34 = vector.load %arg9[%c0_15, %c0_16] : memref<2x32xf32, #tpu.memory_space<vmem>>, vector<2x32xf32>
    tpu.vector_store %arg9[%c0_15, %c0_16], %33 {strides = array<i32>} : memref<2x32xf32, #tpu.memory_space<vmem>>, vector<2x32xf32>,
    %c0_i32_17 = arith.constant 0 : i32
    %35 = arith.cmpi eq, %arg2, %c0_i32_17 : i32
    %36 = arith.extui %35 : i1 to i32
    %c0_i32_18 = arith.constant 0 : i32
    %37 = arith.cmpi ne, %36, %c0_i32_18 : i32
    scf.if %37 {
      %c0_19 = arith.constant 0 : index
      %c0_20 = arith.constant 0 : index
      %38 = vector.load %arg9[%c0_19, %c0_20] : memref<2x32xf32, #tpu.memory_space<vmem>>, vector<2x32xf32>
      %c0_21 = arith.constant 0 : index
      %c0_22 = arith.constant 0 : index
      %39 = vector.load %arg5[%c0_21, %c0_22] : memref<1x32xf32, #tpu.memory_space<vmem>>, vector<1x32xf32>
      %40 = vector.broadcast %39 : vector<1x32xf32> to vector<2x32xf32>
      %41 = arith.addf %38, %40 : vector<2x32xf32>
      %42 = arith.mulf %41, %41 : vector<2x32xf32>
      %cst_23 = arith.constant dense<0.000000e+00> : vector<2xf32>
      %43 = vector.multi_reduction <add>, %42, %cst_23 [1] : vector<2x32xf32> to vector<2xf32>
      %44 = vector.shape_cast %43 : vector<2xf32> to vector<2x1xf32>
      %cst_24 = arith.constant 1.000000e-24 : f32
      %45 = vector.broadcast %cst_24 : f32 to vector<2x1xf32>
      %46 = arith.maximumf %44, %45 : vector<2x1xf32>
      %47 = math.rsqrt %46 : vector<2x1xf32>
      %48 = vector.broadcast %47 : vector<2x1xf32> to vector<2x32xf32>
      %49 = arith.mulf %41, %48 : vector<2x32xf32>
      %c0_25 = arith.constant 0 : index
      %c0_26 = arith.constant 0 : index
      %50 = vector.load %arg8[%c0_25, %c0_26] : memref<2x32xf32, #tpu.memory_space<vmem>>, vector<2x32xf32>
      tpu.vector_store %arg8[%c0_25, %c0_26], %49 {strides = array<i32>} : memref<2x32xf32, #tpu.memory_space<vmem>>, vector<2x32xf32>,
    } else {
    }
    return
  }
  func.func @transform_0(%arg0: i32, %arg1: i32, %arg2: i32) -> (i32, i32) {
    %c0_i32 = arith.constant 0 : i32
    return %arg0, %arg2 : i32, i32
  }
  func.func @transform_1(%arg0: i32, %arg1: i32, %arg2: i32) -> (i32, i32) {
    %c0_i32 = arith.constant 0 : i32
    return %arg2, %arg1 : i32, i32
  }
  func.func @transform_2(%arg0: i32, %arg1: i32, %arg2: i32) -> (i32, i32) {
    %c0_i32 = arith.constant 0 : i32
    %c0_i32_0 = arith.constant 0 : i32
    return %c0_i32, %arg1 : i32, i32
  }
  func.func @transform_3(%arg0: i32, %arg1: i32, %arg2: i32) -> (i32, i32) {
    %c0_i32 = arith.constant 0 : i32
    %c0_i32_0 = arith.constant 0 : i32
    return %c0_i32, %arg2 : i32, i32
  }
  func.func @transform_4(%arg0: i32, %arg1: i32, %arg2: i32) -> (i32, i32) {
    %c0_i32 = arith.constant 0 : i32
    %c0_i32_0 = arith.constant 0 : i32
    return %c0_i32, %arg2 : i32, i32
  }
  func.func @transform_5(%arg0: i32, %arg1: i32, %arg2: i32) -> (i32, i32) {
    %c0_i32 = arith.constant 0 : i32
    return %arg0, %arg1 : i32, i32
  }
}

module attributes {stable_mosaic.version = 11 : i64} {
  func.func @kernel(%arg0: i32, %arg1: i32, %arg2: i32, %arg3: memref<10x32xbf16, #tpu.memory_space<vmem>>, %arg4: memref<32x128xbf16, #tpu.memory_space<vmem>>, %arg5: memref<1x128xf32, #tpu.memory_space<vmem>>, %arg6: memref<1x32xf32, #tpu.memory_space<vmem>>, %arg7: memref<1x32xf32, #tpu.memory_space<vmem>>, %arg8: memref<10x128xbf16, #tpu.memory_space<vmem>>, %arg9: memref<10x128xf32, #tpu.memory_space<vmem>>) attributes {dimension_semantics = [#tpu.dimension_semantics<parallel>, #tpu.dimension_semantics<parallel>, #tpu.dimension_semantics<arbitrary>], iteration_bounds = array<i64: 1, 1, 1>, scalar_prefetch = 0 : i64, scratch_operands = 1 : i64, tpu.core_type = #tpu.core_type<tc>, window_params = [{transform_indices = @transform_0, window_bounds = array<i64: 10, 32>}, {transform_indices = @transform_1, window_bounds = array<i64: 32, 128>}, {transform_indices = @transform_2, window_bounds = array<i64: 1, 128>}, {transform_indices = @transform_3, window_bounds = array<i64: 1, 32>}, {transform_indices = @transform_4, window_bounds = array<i64: 1, 32>}, {transform_indices = @transform_5, window_bounds = array<i64: 10, 128>}]} {
    %c0_i32 = arith.constant 0 : i32
    %0 = arith.cmpi eq, %arg2, %c0_i32 : i32
    %1 = arith.extui %0 : i1 to i32
    %c0_i32_0 = arith.constant 0 : i32
    %2 = arith.cmpi ne, %1, %c0_i32_0 : i32
    scf.if %2 {
      %cst_19 = arith.constant 0.000000e+00 : f32
      %38 = vector.broadcast %cst_19 : f32 to vector<10x128xf32>
      %c0_20 = arith.constant 0 : index
      %c0_21 = arith.constant 0 : index
      %39 = vector.load %arg9[%c0_20, %c0_21] : memref<10x128xf32, #tpu.memory_space<vmem>>, vector<10x128xf32>
      tpu.vector_store %arg9[%c0_20, %c0_21], %38 {strides = array<i32>} : memref<10x128xf32, #tpu.memory_space<vmem>>, vector<10x128xf32>,
    } else {
    }
    %c0 = arith.constant 0 : index
    %c0_1 = arith.constant 0 : index
    %3 = vector.load %arg3[%c0, %c0_1] : memref<10x32xbf16, #tpu.memory_space<vmem>>, vector<10x32xbf16>
    %4 = arith.extf %3 : vector<10x32xbf16> to vector<10x32xf32>
    %cst = arith.constant dense<0.000000e+00> : vector<10xf32>
    %5 = vector.multi_reduction <add>, %4, %cst [1] : vector<10x32xf32> to vector<10xf32>
    %6 = vector.shape_cast %5 : vector<10xf32> to vector<10x1xf32>
    %cst_2 = arith.constant 3.200000e+01 : f32
    %7 = vector.broadcast %cst_2 : f32 to vector<10x1xf32>
    %8 = arith.divf %6, %7 : vector<10x1xf32>
    %9 = vector.broadcast %8 : vector<10x1xf32> to vector<10x32xf32>
    %10 = arith.subf %4, %9 : vector<10x32xf32>
    %11 = arith.mulf %10, %10 : vector<10x32xf32>
    %cst_3 = arith.constant dense<0.000000e+00> : vector<10xf32>
    %12 = vector.multi_reduction <add>, %11, %cst_3 [1] : vector<10x32xf32> to vector<10xf32>
    %13 = vector.shape_cast %12 : vector<10xf32> to vector<10x1xf32>
    %cst_4 = arith.constant 3.200000e+01 : f32
    %14 = vector.broadcast %cst_4 : f32 to vector<10x1xf32>
    %15 = arith.divf %13, %14 : vector<10x1xf32>
    %16 = vector.broadcast %8 : vector<10x1xf32> to vector<10x32xf32>
    %17 = arith.subf %4, %16 : vector<10x32xf32>
    %cst_5 = arith.constant 9.99999974E-6 : f32
    %18 = vector.broadcast %cst_5 : f32 to vector<10x1xf32>
    %19 = arith.addf %15, %18 : vector<10x1xf32>
    %20 = math.rsqrt %19 : vector<10x1xf32>
    %21 = vector.broadcast %20 : vector<10x1xf32> to vector<10x32xf32>
    %22 = arith.mulf %17, %21 : vector<10x32xf32>
    %c0_6 = arith.constant 0 : index
    %c0_7 = arith.constant 0 : index
    %23 = vector.load %arg6[%c0_6, %c0_7] : memref<1x32xf32, #tpu.memory_space<vmem>>, vector<1x32xf32>
    %24 = vector.broadcast %23 : vector<1x32xf32> to vector<10x32xf32>
    %25 = arith.mulf %22, %24 : vector<10x32xf32>
    %c0_8 = arith.constant 0 : index
    %c0_9 = arith.constant 0 : index
    %26 = vector.load %arg7[%c0_8, %c0_9] : memref<1x32xf32, #tpu.memory_space<vmem>>, vector<1x32xf32>
    %27 = vector.broadcast %26 : vector<1x32xf32> to vector<10x32xf32>
    %28 = arith.addf %25, %27 : vector<10x32xf32>
    %29 = arith.truncf %28 : vector<10x32xf32> to vector<10x32xbf16>
    %c0_10 = arith.constant 0 : index
    %c0_11 = arith.constant 0 : index
    %30 = vector.load %arg9[%c0_10, %c0_11] : memref<10x128xf32, #tpu.memory_space<vmem>>, vector<10x128xf32>
    %c0_12 = arith.constant 0 : index
    %c0_13 = arith.constant 0 : index
    %31 = vector.load %arg4[%c0_12, %c0_13] : memref<32x128xbf16, #tpu.memory_space<vmem>>, vector<32x128xbf16>
    %cst_14 = arith.constant dense<0.000000e+00> : vector<10x128xf32>
    %32 = tpu.matmul %29, %31, %cst_14 {dimension_numbers = #tpu.dot_dimension_numbers<[1], [0], [0], [1], [0, 0, 1, 1], [], []>} : vector<10x32xbf16>, vector<32x128xbf16>, vector<10x128xf32> -> vector<10x128xf32>
    %33 = arith.addf %30, %32 : vector<10x128xf32>
    %c0_15 = arith.constant 0 : index
    %c0_16 = arith.constant 0 : index
    %34 = vector.load %arg9[%c0_15, %c0_16] : memref<10x128xf32, #tpu.memory_space<vmem>>, vector<10x128xf32>
    tpu.vector_store %arg9[%c0_15, %c0_16], %33 {strides = array<i32>} : memref<10x128xf32, #tpu.memory_space<vmem>>, vector<10x128xf32>,
    %c0_i32_17 = arith.constant 0 : i32
    %35 = arith.cmpi eq, %arg2, %c0_i32_17 : i32
    %36 = arith.extui %35 : i1 to i32
    %c0_i32_18 = arith.constant 0 : i32
    %37 = arith.cmpi ne, %36, %c0_i32_18 : i32
    scf.if %37 {
      %c0_19 = arith.constant 0 : index
      %c0_20 = arith.constant 0 : index
      %38 = vector.load %arg9[%c0_19, %c0_20] : memref<10x128xf32, #tpu.memory_space<vmem>>, vector<10x128xf32>
      %c0_21 = arith.constant 0 : index
      %c0_22 = arith.constant 0 : index
      %39 = vector.load %arg5[%c0_21, %c0_22] : memref<1x128xf32, #tpu.memory_space<vmem>>, vector<1x128xf32>
      %40 = vector.broadcast %39 : vector<1x128xf32> to vector<10x128xf32>
      %41 = arith.addf %38, %40 : vector<10x128xf32>
      %cst_23 = arith.constant 5.000000e-01 : f32
      %42 = vector.broadcast %cst_23 : f32 to vector<10x128xf32>
      %43 = arith.mulf %42, %41 : vector<10x128xf32>
      %cst_24 = arith.constant 4.471500e-02 : f32
      %44 = vector.broadcast %cst_24 : f32 to vector<10x128xf32>
      %45 = arith.mulf %44, %41 : vector<10x128xf32>
      %46 = arith.mulf %45, %41 : vector<10x128xf32>
      %47 = arith.mulf %46, %41 : vector<10x128xf32>
      %48 = arith.addf %41, %47 : vector<10x128xf32>
      %cst_25 = arith.constant 0.797884583 : f32
      %49 = vector.broadcast %cst_25 : f32 to vector<10x128xf32>
      %50 = arith.mulf %49, %48 : vector<10x128xf32>
      %51 = math.tanh %50 : vector<10x128xf32>
      %cst_26 = arith.constant 1.000000e+00 : f32
      %52 = vector.broadcast %cst_26 : f32 to vector<10x128xf32>
      %53 = arith.addf %52, %51 : vector<10x128xf32>
      %54 = arith.mulf %43, %53 : vector<10x128xf32>
      %55 = arith.truncf %54 : vector<10x128xf32> to vector<10x128xbf16>
      %c0_27 = arith.constant 0 : index
      %c0_28 = arith.constant 0 : index
      %56 = vector.load %arg8[%c0_27, %c0_28] : memref<10x128xbf16, #tpu.memory_space<vmem>>, vector<10x128xbf16>
      tpu.vector_store %arg8[%c0_27, %c0_28], %55 {strides = array<i32>} : memref<10x128xbf16, #tpu.memory_space<vmem>>, vector<10x128xbf16>,
    } else {
    }
    return
  }
  func.func @transform_0(%arg0: i32, %arg1: i32, %arg2: i32) -> (i32, i32) {
    %c0_i32 = arith.constant 0 : i32
    return %arg0, %arg2 : i32, i32
  }
  func.func @transform_1(%arg0: i32, %arg1: i32, %arg2: i32) -> (i32, i32) {
    %c0_i32 = arith.constant 0 : i32
    return %arg2, %arg1 : i32, i32
  }
  func.func @transform_2(%arg0: i32, %arg1: i32, %arg2: i32) -> (i32, i32) {
    %c0_i32 = arith.constant 0 : i32
    %c0_i32_0 = arith.constant 0 : i32
    return %c0_i32, %arg1 : i32, i32
  }
  func.func @transform_3(%arg0: i32, %arg1: i32, %arg2: i32) -> (i32, i32) {
    %c0_i32 = arith.constant 0 : i32
    %c0_i32_0 = arith.constant 0 : i32
    return %c0_i32, %arg2 : i32, i32
  }
  func.func @transform_4(%arg0: i32, %arg1: i32, %arg2: i32) -> (i32, i32) {
    %c0_i32 = arith.constant 0 : i32
    %c0_i32_0 = arith.constant 0 : i32
    return %c0_i32, %arg2 : i32, i32
  }
  func.func @transform_5(%arg0: i32, %arg1: i32, %arg2: i32) -> (i32, i32) {
    %c0_i32 = arith.constant 0 : i32
    return %arg0, %arg1 : i32, i32
  }
}

module attributes {stable_mosaic.version = 11 : i64} {
  func.func @kernel(%arg0: i32, %arg1: i32, %arg2: i32, %arg3: memref<16x32xbf16, #tpu.memory_space<vmem>>, %arg4: memref<32x32xbf16, #tpu.memory_space<vmem>>, %arg5: memref<1x32xf32, #tpu.memory_space<vmem>>, %arg6: memref<16x32xbf16, #tpu.memory_space<vmem>>, %arg7: memref<16x32xbf16, #tpu.memory_space<vmem>>, %arg8: memref<16x32xf32, #tpu.memory_space<vmem>>) attributes {dimension_semantics = [#tpu.dimension_semantics<parallel>, #tpu.dimension_semantics<parallel>, #tpu.dimension_semantics<arbitrary>], iteration_bounds = array<i64: 1, 1, 1>, scalar_prefetch = 0 : i64, scratch_operands = 1 : i64, tpu.core_type = #tpu.core_type<tc>, window_params = [{transform_indices = @transform_0, window_bounds = array<i64: 16, 32>}, {transform_indices = @transform_1, window_bounds = array<i64: 32, 32>}, {transform_indices = @transform_2, window_bounds = array<i64: 1, 32>}, {transform_indices = @transform_3, window_bounds = array<i64: 16, 32>}, {transform_indices = @transform_4, window_bounds = array<i64: 16, 32>}]} {
    %c0_i32 = arith.constant 0 : i32
    %0 = arith.cmpi eq, %arg2, %c0_i32 : i32
    %1 = arith.extui %0 : i1 to i32
    %c0_i32_0 = arith.constant 0 : i32
    %2 = arith.cmpi ne, %1, %c0_i32_0 : i32
    scf.if %2 {
      %cst_10 = arith.constant 0.000000e+00 : f32
      %12 = vector.broadcast %cst_10 : f32 to vector<16x32xf32>
      %c0_11 = arith.constant 0 : index
      %c0_12 = arith.constant 0 : index
      %13 = vector.load %arg8[%c0_11, %c0_12] : memref<16x32xf32, #tpu.memory_space<vmem>>, vector<16x32xf32>
      tpu.vector_store %arg8[%c0_11, %c0_12], %12 {strides = array<i32>} : memref<16x32xf32, #tpu.memory_space<vmem>>, vector<16x32xf32>,
    } else {
    }
    %c0 = arith.constant 0 : index
    %c0_1 = arith.constant 0 : index
    %3 = vector.load %arg3[%c0, %c0_1] : memref<16x32xbf16, #tpu.memory_space<vmem>>, vector<16x32xbf16>
    %c0_2 = arith.constant 0 : index
    %c0_3 = arith.constant 0 : index
    %4 = vector.load %arg8[%c0_2, %c0_3] : memref<16x32xf32, #tpu.memory_space<vmem>>, vector<16x32xf32>
    %c0_4 = arith.constant 0 : index
    %c0_5 = arith.constant 0 : index
    %5 = vector.load %arg4[%c0_4, %c0_5] : memref<32x32xbf16, #tpu.memory_space<vmem>>, vector<32x32xbf16>
    %cst = arith.constant dense<0.000000e+00> : vector<16x32xf32>
    %6 = tpu.matmul %3, %5, %cst {dimension_numbers = #tpu.dot_dimension_numbers<[1], [0], [0], [1], [0, 0, 1, 1], [], []>} : vector<16x32xbf16>, vector<32x32xbf16>, vector<16x32xf32> -> vector<16x32xf32>
    %7 = arith.addf %4, %6 : vector<16x32xf32>
    %c0_6 = arith.constant 0 : index
    %c0_7 = arith.constant 0 : index
    %8 = vector.load %arg8[%c0_6, %c0_7] : memref<16x32xf32, #tpu.memory_space<vmem>>, vector<16x32xf32>
    tpu.vector_store %arg8[%c0_6, %c0_7], %7 {strides = array<i32>} : memref<16x32xf32, #tpu.memory_space<vmem>>, vector<16x32xf32>,
    %c0_i32_8 = arith.constant 0 : i32
    %9 = arith.cmpi eq, %arg2, %c0_i32_8 : i32
    %10 = arith.extui %9 : i1 to i32
    %c0_i32_9 = arith.constant 0 : i32
    %11 = arith.cmpi ne, %10, %c0_i32_9 : i32
    scf.if %11 {
      %c0_10 = arith.constant 0 : index
      %c0_11 = arith.constant 0 : index
      %12 = vector.load %arg8[%c0_10, %c0_11] : memref<16x32xf32, #tpu.memory_space<vmem>>, vector<16x32xf32>
      %c0_12 = arith.constant 0 : index
      %c0_13 = arith.constant 0 : index
      %13 = vector.load %arg5[%c0_12, %c0_13] : memref<1x32xf32, #tpu.memory_space<vmem>>, vector<1x32xf32>
      %14 = vector.broadcast %13 : vector<1x32xf32> to vector<16x32xf32>
      %15 = arith.addf %12, %14 : vector<16x32xf32>
      %c0_14 = arith.constant 0 : index
      %c0_15 = arith.constant 0 : index
      %16 = vector.load %arg6[%c0_14, %c0_15] : memref<16x32xbf16, #tpu.memory_space<vmem>>, vector<16x32xbf16>
      %17 = arith.extf %16 : vector<16x32xbf16> to vector<16x32xf32>
      %18 = arith.addf %15, %17 : vector<16x32xf32>
      %19 = arith.truncf %18 : vector<16x32xf32> to vector<16x32xbf16>
      %c0_16 = arith.constant 0 : index
      %c0_17 = arith.constant 0 : index
      %20 = vector.load %arg7[%c0_16, %c0_17] : memref<16x32xbf16, #tpu.memory_space<vmem>>, vector<16x32xbf16>
      tpu.vector_store %arg7[%c0_16, %c0_17], %19 {strides = array<i32>} : memref<16x32xbf16, #tpu.memory_space<vmem>>, vector<16x32xbf16>,
    } else {
    }
    return
  }
  func.func @transform_0(%arg0: i32, %arg1: i32, %arg2: i32) -> (i32, i32) {
    %c0_i32 = arith.constant 0 : i32
    return %arg0, %arg2 : i32, i32
  }
  func.func @transform_1(%arg0: i32, %arg1: i32, %arg2: i32) -> (i32, i32) {
    %c0_i32 = arith.constant 0 : i32
    return %arg2, %arg1 : i32, i32
  }
  func.func @transform_2(%arg0: i32, %arg1: i32, %arg2: i32) -> (i32, i32) {
    %c0_i32 = arith.constant 0 : i32
    %c0_i32_0 = arith.constant 0 : i32
    return %c0_i32, %arg1 : i32, i32
  }
  func.func @transform_3(%arg0: i32, %arg1: i32, %arg2: i32) -> (i32, i32) {
    %c0_i32 = arith.constant 0 : i32
    return %arg0, %arg1 : i32, i32
  }
  func.func @transform_4(%arg0: i32, %arg1: i32, %arg2: i32) -> (i32, i32) {
    %c0_i32 = arith.constant 0 : i32
    return %arg0, %arg1 : i32, i32
  }
}

module attributes {stable_mosaic.version = 11 : i64} {
  func.func @kernel(%arg0: i32, %arg1: memref<1x8x96xbf16, #tpu.memory_space<vmem>>, %arg2: memref<1x8x32xbf16, #tpu.memory_space<vmem>>) attributes {dimension_semantics = [#tpu.dimension_semantics<parallel>], iteration_bounds = array<i64: 2>, scalar_prefetch = 0 : i64, scratch_operands = 0 : i64, tpu.core_type = #tpu.core_type<tc>, window_params = [{transform_indices = @transform_0, window_bounds = array<i64: 1, 8, 96>}, {transform_indices = @transform_1, window_bounds = array<i64: 1, 8, 32>}]} {
    %c0 = arith.constant 0 : index
    %c0_0 = arith.constant 0 : index
    %c0_1 = arith.constant 0 : index
    %0 = vector.load %arg1[%c0, %c0_0, %c0_1] : memref<1x8x96xbf16, #tpu.memory_space<vmem>>, vector<1x8x96xbf16>
    %1 = vector.shape_cast %0 : vector<1x8x96xbf16> to vector<8x96xbf16>
    %2 = tpu.iota {dimensions = array<i32: 0>} : vector<8x8xi32>
    %3 = tpu.iota {dimensions = array<i32: 1>} : vector<8x8xi32>
    %4 = arith.cmpi sgt, %3, %2 : vector<8x8xi32>
    %cst = arith.constant 0xFF800000 : f32
    %cst_2 = arith.constant 0.000000e+00 : f32
    %5 = vector.broadcast %cst : f32 to vector<8x8xf32>
    %6 = vector.broadcast %cst_2 : f32 to vector<8x8xf32>
    %7 = arith.select %4, %5, %6 : vector<8x8xi1>, vector<8x8xf32>
    %8 = vector.extract_strided_slice %1 {offsets = [0, 0], sizes = [8, 16], strides = [1, 1]} : vector<8x96xbf16> to vector<8x16xbf16>
    %9 = vector.extract_strided_slice %1 {offsets = [0, 32], sizes = [8, 16], strides = [1, 1]} : vector<8x96xbf16> to vector<8x16xbf16>
    %10 = vector.extract_strided_slice %1 {offsets = [0, 64], sizes = [8, 16], strides = [1, 1]} : vector<8x96xbf16> to vector<8x16xbf16>
    %cst_3 = arith.constant dense<0.000000e+00> : vector<8x8xf32>
    %11 = tpu.matmul %8, %9, %cst_3 {dimension_numbers = #tpu.dot_dimension_numbers<[1], [1], [0], [0], [0, 0, 1, 0], [], []>} : vector<8x16xbf16>, vector<8x16xbf16>, vector<8x8xf32> -> vector<8x8xf32>
    %cst_4 = arith.constant 2.500000e-01 : f32
    %12 = vector.broadcast %cst_4 : f32 to vector<8x8xf32>
    %13 = arith.mulf %11, %12 : vector<8x8xf32>
    %14 = arith.addf %13, %7 : vector<8x8xf32>
    %cst_5 = arith.constant dense<0xFF800000> : vector<8xf32>
    %15 = vector.multi_reduction <maximumf>, %14, %cst_5 [1] : vector<8x8xf32> to vector<8xf32>
    %16 = vector.shape_cast %15 : vector<8xf32> to vector<8x1xf32>
    %17 = vector.broadcast %16 : vector<8x1xf32> to vector<8x8xf32>
    %18 = arith.subf %14, %17 : vector<8x8xf32>
    %19 = math.exp %18 : vector<8x8xf32>
    %cst_6 = arith.constant dense<0.000000e+00> : vector<8xf32>
    %20 = vector.multi_reduction <add>, %19, %cst_6 [1] : vector<8x8xf32> to vector<8xf32>
    %21 = vector.shape_cast %20 : vector<8xf32> to vector<8x1xf32>
    %22 = tpu.reciprocal %21 {approx = true} : vector<8x1xf32> -> vector<8x1xf32>
    %23 = vector.broadcast %22 : vector<8x1xf32> to vector<8x8xf32>
    %24 = arith.mulf %19, %23 : vector<8x8xf32>
    %25 = arith.truncf %24 : vector<8x8xf32> to vector<8x8xbf16>
    %cst_7 = arith.constant dense<0.000000e+00> : vector<8x16xf32>
    %26 = tpu.matmul %25, %10, %cst_7 {dimension_numbers = #tpu.dot_dimension_numbers<[1], [0], [0], [1], [0, 0, 1, 1], [], []>} : vector<8x8xbf16>, vector<8x16xbf16>, vector<8x16xf32> -> vector<8x16xf32>
    %27 = vector.extract_strided_slice %1 {offsets = [0, 16], sizes = [8, 16], strides = [1, 1]} : vector<8x96xbf16> to vector<8x16xbf16>
    %28 = vector.extract_strided_slice %1 {offsets = [0, 48], sizes = [8, 16], strides = [1, 1]} : vector<8x96xbf16> to vector<8x16xbf16>
    %29 = vector.extract_strided_slice %1 {offsets = [0, 80], sizes = [8, 16], strides = [1, 1]} : vector<8x96xbf16> to vector<8x16xbf16>
    %cst_8 = arith.constant dense<0.000000e+00> : vector<8x8xf32>
    %30 = tpu.matmul %27, %28, %cst_8 {dimension_numbers = #tpu.dot_dimension_numbers<[1], [1], [0], [0], [0, 0, 1, 0], [], []>} : vector<8x16xbf16>, vector<8x16xbf16>, vector<8x8xf32> -> vector<8x8xf32>
    %cst_9 = arith.constant 2.500000e-01 : f32
    %31 = vector.broadcast %cst_9 : f32 to vector<8x8xf32>
    %32 = arith.mulf %30, %31 : vector<8x8xf32>
    %33 = arith.addf %32, %7 : vector<8x8xf32>
    %cst_10 = arith.constant dense<0xFF800000> : vector<8xf32>
    %34 = vector.multi_reduction <maximumf>, %33, %cst_10 [1] : vector<8x8xf32> to vector<8xf32>
    %35 = vector.shape_cast %34 : vector<8xf32> to vector<8x1xf32>
    %36 = vector.broadcast %35 : vector<8x1xf32> to vector<8x8xf32>
    %37 = arith.subf %33, %36 : vector<8x8xf32>
    %38 = math.exp %37 : vector<8x8xf32>
    %cst_11 = arith.constant dense<0.000000e+00> : vector<8xf32>
    %39 = vector.multi_reduction <add>, %38, %cst_11 [1] : vector<8x8xf32> to vector<8xf32>
    %40 = vector.shape_cast %39 : vector<8xf32> to vector<8x1xf32>
    %41 = tpu.reciprocal %40 {approx = true} : vector<8x1xf32> -> vector<8x1xf32>
    %42 = vector.broadcast %41 : vector<8x1xf32> to vector<8x8xf32>
    %43 = arith.mulf %38, %42 : vector<8x8xf32>
    %44 = arith.truncf %43 : vector<8x8xf32> to vector<8x8xbf16>
    %cst_12 = arith.constant dense<0.000000e+00> : vector<8x16xf32>
    %45 = tpu.matmul %44, %29, %cst_12 {dimension_numbers = #tpu.dot_dimension_numbers<[1], [0], [0], [1], [0, 0, 1, 1], [], []>} : vector<8x8xbf16>, vector<8x16xbf16>, vector<8x16xf32> -> vector<8x16xf32>
    %46 = tpu.concatenate %26, %45 in 1 : vector<8x16xf32>, vector<8x16xf32> -> vector<8x32xf32>
    %47 = arith.truncf %46 : vector<8x32xf32> to vector<8x32xbf16>
    %c0_13 = arith.constant 0 : index
    %c0_14 = arith.constant 0 : index
    %c0_15 = arith.constant 0 : index
    %48 = vector.load %arg2[%c0_13, %c0_14, %c0_15] : memref<1x8x32xbf16, #tpu.memory_space<vmem>>, vector<1x8x32xbf16>
    %49 = vector.shape_cast %48 : vector<1x8x32xbf16> to vector<8x32xbf16>
    %50 = vector.shape_cast %47 : vector<8x32xbf16> to vector<1x8x32xbf16>
    tpu.vector_store %arg2[%c0_13, %c0_14, %c0_15], %50 {strides = array<i32>} : memref<1x8x32xbf16, #tpu.memory_space<vmem>>, vector<1x8x32xbf16>,
    return
  }
  func.func @transform_0(%arg0: i32) -> (i32, i32, i32) {
    %c0_i32 = arith.constant 0 : i32
    %c0_i32_0 = arith.constant 0 : i32
    %c0_i32_1 = arith.constant 0 : i32
    return %arg0, %c0_i32, %c0_i32_0 : i32, i32, i32
  }
  func.func @transform_1(%arg0: i32) -> (i32, i32, i32) {
    %c0_i32 = arith.constant 0 : i32
    %c0_i32_0 = arith.constant 0 : i32
    %c0_i32_1 = arith.constant 0 : i32
    return %arg0, %c0_i32, %c0_i32_0 : i32, i32, i32
  }
}

module attributes {stable_mosaic.version = 11 : i64} {
  func.func @kernel(%arg0: i32, %arg1: i32, %arg2: i32, %arg3: memref<16x32xbf16, #tpu.memory_space<vmem>>, %arg4: memref<32x96xbf16, #tpu.memory_space<vmem>>, %arg5: memref<1x96xf32, #tpu.memory_space<vmem>>, %arg6: memref<1x32xf32, #tpu.memory_space<vmem>>, %arg7: memref<1x32xf32, #tpu.memory_space<vmem>>, %arg8: memref<16x96xbf16, #tpu.memory_space<vmem>>, %arg9: memref<16x96xf32, #tpu.memory_space<vmem>>) attributes {dimension_semantics = [#tpu.dimension_semantics<parallel>, #tpu.dimension_semantics<parallel>, #tpu.dimension_semantics<arbitrary>], iteration_bounds = array<i64: 1, 1, 1>, scalar_prefetch = 0 : i64, scratch_operands = 1 : i64, tpu.core_type = #tpu.core_type<tc>, window_params = [{transform_indices = @transform_0, window_bounds = array<i64: 16, 32>}, {transform_indices = @transform_1, window_bounds = array<i64: 32, 96>}, {transform_indices = @transform_2, window_bounds = array<i64: 1, 96>}, {transform_indices = @transform_3, window_bounds = array<i64: 1, 32>}, {transform_indices = @transform_4, window_bounds = array<i64: 1, 32>}, {transform_indices = @transform_5, window_bounds = array<i64: 16, 96>}]} {
    %c0_i32 = arith.constant 0 : i32
    %0 = arith.cmpi eq, %arg2, %c0_i32 : i32
    %1 = arith.extui %0 : i1 to i32
    %c0_i32_0 = arith.constant 0 : i32
    %2 = arith.cmpi ne, %1, %c0_i32_0 : i32
    scf.if %2 {
      %cst_19 = arith.constant 0.000000e+00 : f32
      %38 = vector.broadcast %cst_19 : f32 to vector<16x96xf32>
      %c0_20 = arith.constant 0 : index
      %c0_21 = arith.constant 0 : index
      %39 = vector.load %arg9[%c0_20, %c0_21] : memref<16x96xf32, #tpu.memory_space<vmem>>, vector<16x96xf32>
      tpu.vector_store %arg9[%c0_20, %c0_21], %38 {strides = array<i32>} : memref<16x96xf32, #tpu.memory_space<vmem>>, vector<16x96xf32>,
    } else {
    }
    %c0 = arith.constant 0 : index
    %c0_1 = arith.constant 0 : index
    %3 = vector.load %arg3[%c0, %c0_1] : memref<16x32xbf16, #tpu.memory_space<vmem>>, vector<16x32xbf16>
    %4 = arith.extf %3 : vector<16x32xbf16> to vector<16x32xf32>
    %cst = arith.constant dense<0.000000e+00> : vector<16xf32>
    %5 = vector.multi_reduction <add>, %4, %cst [1] : vector<16x32xf32> to vector<16xf32>
    %6 = vector.shape_cast %5 : vector<16xf32> to vector<16x1xf32>
    %cst_2 = arith.constant 3.200000e+01 : f32
    %7 = vector.broadcast %cst_2 : f32 to vector<16x1xf32>
    %8 = arith.divf %6, %7 : vector<16x1xf32>
    %9 = vector.broadcast %8 : vector<16x1xf32> to vector<16x32xf32>
    %10 = arith.subf %4, %9 : vector<16x32xf32>
    %11 = arith.mulf %10, %10 : vector<16x32xf32>
    %cst_3 = arith.constant dense<0.000000e+00> : vector<16xf32>
    %12 = vector.multi_reduction <add>, %11, %cst_3 [1] : vector<16x32xf32> to vector<16xf32>
    %13 = vector.shape_cast %12 : vector<16xf32> to vector<16x1xf32>
    %cst_4 = arith.constant 3.200000e+01 : f32
    %14 = vector.broadcast %cst_4 : f32 to vector<16x1xf32>
    %15 = arith.divf %13, %14 : vector<16x1xf32>
    %16 = vector.broadcast %8 : vector<16x1xf32> to vector<16x32xf32>
    %17 = arith.subf %4, %16 : vector<16x32xf32>
    %cst_5 = arith.constant 9.99999974E-6 : f32
    %18 = vector.broadcast %cst_5 : f32 to vector<16x1xf32>
    %19 = arith.addf %15, %18 : vector<16x1xf32>
    %20 = math.rsqrt %19 : vector<16x1xf32>
    %21 = vector.broadcast %20 : vector<16x1xf32> to vector<16x32xf32>
    %22 = arith.mulf %17, %21 : vector<16x32xf32>
    %c0_6 = arith.constant 0 : index
    %c0_7 = arith.constant 0 : index
    %23 = vector.load %arg6[%c0_6, %c0_7] : memref<1x32xf32, #tpu.memory_space<vmem>>, vector<1x32xf32>
    %24 = vector.broadcast %23 : vector<1x32xf32> to vector<16x32xf32>
    %25 = arith.mulf %22, %24 : vector<16x32xf32>
    %c0_8 = arith.constant 0 : index
    %c0_9 = arith.constant 0 : index
    %26 = vector.load %arg7[%c0_8, %c0_9] : memref<1x32xf32, #tpu.memory_space<vmem>>, vector<1x32xf32>
    %27 = vector.broadcast %26 : vector<1x32xf32> to vector<16x32xf32>
    %28 = arith.addf %25, %27 : vector<16x32xf32>
    %29 = arith.truncf %28 : vector<16x32xf32> to vector<16x32xbf16>
    %c0_10 = arith.constant 0 : index
    %c0_11 = arith.constant 0 : index
    %30 = vector.load %arg9[%c0_10, %c0_11] : memref<16x96xf32, #tpu.memory_space<vmem>>, vector<16x96xf32>
    %c0_12 = arith.constant 0 : index
    %c0_13 = arith.constant 0 : index
    %31 = vector.load %arg4[%c0_12, %c0_13] : memref<32x96xbf16, #tpu.memory_space<vmem>>, vector<32x96xbf16>
    %cst_14 = arith.constant dense<0.000000e+00> : vector<16x96xf32>
    %32 = tpu.matmul %29, %31, %cst_14 {dimension_numbers = #tpu.dot_dimension_numbers<[1], [0], [0], [1], [0, 0, 1, 1], [], []>} : vector<16x32xbf16>, vector<32x96xbf16>, vector<16x96xf32> -> vector<16x96xf32>
    %33 = arith.addf %30, %32 : vector<16x96xf32>
    %c0_15 = arith.constant 0 : index
    %c0_16 = arith.constant 0 : index
    %34 = vector.load %arg9[%c0_15, %c0_16] : memref<16x96xf32, #tpu.memory_space<vmem>>, vector<16x96xf32>
    tpu.vector_store %arg9[%c0_15, %c0_16], %33 {strides = array<i32>} : memref<16x96xf32, #tpu.memory_space<vmem>>, vector<16x96xf32>,
    %c0_i32_17 = arith.constant 0 : i32
    %35 = arith.cmpi eq, %arg2, %c0_i32_17 : i32
    %36 = arith.extui %35 : i1 to i32
    %c0_i32_18 = arith.constant 0 : i32
    %37 = arith.cmpi ne, %36, %c0_i32_18 : i32
    scf.if %37 {
      %c0_19 = arith.constant 0 : index
      %c0_20 = arith.constant 0 : index
      %38 = vector.load %arg9[%c0_19, %c0_20] : memref<16x96xf32, #tpu.memory_space<vmem>>, vector<16x96xf32>
      %c0_21 = arith.constant 0 : index
      %c0_22 = arith.constant 0 : index
      %39 = vector.load %arg5[%c0_21, %c0_22] : memref<1x96xf32, #tpu.memory_space<vmem>>, vector<1x96xf32>
      %40 = vector.broadcast %39 : vector<1x96xf32> to vector<16x96xf32>
      %41 = arith.addf %38, %40 : vector<16x96xf32>
      %42 = arith.truncf %41 : vector<16x96xf32> to vector<16x96xbf16>
      %c0_23 = arith.constant 0 : index
      %c0_24 = arith.constant 0 : index
      %43 = vector.load %arg8[%c0_23, %c0_24] : memref<16x96xbf16, #tpu.memory_space<vmem>>, vector<16x96xbf16>
      tpu.vector_store %arg8[%c0_23, %c0_24], %42 {strides = array<i32>} : memref<16x96xbf16, #tpu.memory_space<vmem>>, vector<16x96xbf16>,
    } else {
    }
    return
  }
  func.func @transform_0(%arg0: i32, %arg1: i32, %arg2: i32) -> (i32, i32) {
    %c0_i32 = arith.constant 0 : i32
    return %arg0, %arg2 : i32, i32
  }
  func.func @transform_1(%arg0: i32, %arg1: i32, %arg2: i32) -> (i32, i32) {
    %c0_i32 = arith.constant 0 : i32
    return %arg2, %arg1 : i32, i32
  }
  func.func @transform_2(%arg0: i32, %arg1: i32, %arg2: i32) -> (i32, i32) {
    %c0_i32 = arith.constant 0 : i32
    %c0_i32_0 = arith.constant 0 : i32
    return %c0_i32, %arg1 : i32, i32
  }
  func.func @transform_3(%arg0: i32, %arg1: i32, %arg2: i32) -> (i32, i32) {
    %c0_i32 = arith.constant 0 : i32
    %c0_i32_0 = arith.constant 0 : i32
    return %c0_i32, %arg2 : i32, i32
  }
  func.func @transform_4(%arg0: i32, %arg1: i32, %arg2: i32) -> (i32, i32) {
    %c0_i32 = arith.constant 0 : i32
    %c0_i32_0 = arith.constant 0 : i32
    return %c0_i32, %arg2 : i32, i32
  }
  func.func @transform_5(%arg0: i32, %arg1: i32, %arg2: i32) -> (i32, i32) {
    %c0_i32 = arith.constant 0 : i32
    return %arg0, %arg1 : i32, i32
  }
}

module attributes {stable_mosaic.version = 11 : i64} {
  func.func @kernel(%arg0: i32, %arg1: i32, %arg2: i32, %arg3: memref<16x32xbf16, #tpu.memory_space<vmem>>, %arg4: memref<32x128xbf16, #tpu.memory_space<vmem>>, %arg5: memref<1x128xf32, #tpu.memory_space<vmem>>, %arg6: memref<1x32xf32, #tpu.memory_space<vmem>>, %arg7: memref<1x32xf32, #tpu.memory_space<vmem>>, %arg8: memref<16x128xbf16, #tpu.memory_space<vmem>>, %arg9: memref<16x128xf32, #tpu.memory_space<vmem>>) attributes {dimension_semantics = [#tpu.dimension_semantics<parallel>, #tpu.dimension_semantics<parallel>, #tpu.dimension_semantics<arbitrary>], iteration_bounds = array<i64: 1, 1, 1>, scalar_prefetch = 0 : i64, scratch_operands = 1 : i64, tpu.core_type = #tpu.core_type<tc>, window_params = [{transform_indices = @transform_0, window_bounds = array<i64: 16, 32>}, {transform_indices = @transform_1, window_bounds = array<i64: 32, 128>}, {transform_indices = @transform_2, window_bounds = array<i64: 1, 128>}, {transform_indices = @transform_3, window_bounds = array<i64: 1, 32>}, {transform_indices = @transform_4, window_bounds = array<i64: 1, 32>}, {transform_indices = @transform_5, window_bounds = array<i64: 16, 128>}]} {
    %c0_i32 = arith.constant 0 : i32
    %0 = arith.cmpi eq, %arg2, %c0_i32 : i32
    %1 = arith.extui %0 : i1 to i32
    %c0_i32_0 = arith.constant 0 : i32
    %2 = arith.cmpi ne, %1, %c0_i32_0 : i32
    scf.if %2 {
      %cst_19 = arith.constant 0.000000e+00 : f32
      %38 = vector.broadcast %cst_19 : f32 to vector<16x128xf32>
      %c0_20 = arith.constant 0 : index
      %c0_21 = arith.constant 0 : index
      %39 = vector.load %arg9[%c0_20, %c0_21] : memref<16x128xf32, #tpu.memory_space<vmem>>, vector<16x128xf32>
      tpu.vector_store %arg9[%c0_20, %c0_21], %38 {strides = array<i32>} : memref<16x128xf32, #tpu.memory_space<vmem>>, vector<16x128xf32>,
    } else {
    }
    %c0 = arith.constant 0 : index
    %c0_1 = arith.constant 0 : index
    %3 = vector.load %arg3[%c0, %c0_1] : memref<16x32xbf16, #tpu.memory_space<vmem>>, vector<16x32xbf16>
    %4 = arith.extf %3 : vector<16x32xbf16> to vector<16x32xf32>
    %cst = arith.constant dense<0.000000e+00> : vector<16xf32>
    %5 = vector.multi_reduction <add>, %4, %cst [1] : vector<16x32xf32> to vector<16xf32>
    %6 = vector.shape_cast %5 : vector<16xf32> to vector<16x1xf32>
    %cst_2 = arith.constant 3.200000e+01 : f32
    %7 = vector.broadcast %cst_2 : f32 to vector<16x1xf32>
    %8 = arith.divf %6, %7 : vector<16x1xf32>
    %9 = vector.broadcast %8 : vector<16x1xf32> to vector<16x32xf32>
    %10 = arith.subf %4, %9 : vector<16x32xf32>
    %11 = arith.mulf %10, %10 : vector<16x32xf32>
    %cst_3 = arith.constant dense<0.000000e+00> : vector<16xf32>
    %12 = vector.multi_reduction <add>, %11, %cst_3 [1] : vector<16x32xf32> to vector<16xf32>
    %13 = vector.shape_cast %12 : vector<16xf32> to vector<16x1xf32>
    %cst_4 = arith.constant 3.200000e+01 : f32
    %14 = vector.broadcast %cst_4 : f32 to vector<16x1xf32>
    %15 = arith.divf %13, %14 : vector<16x1xf32>
    %16 = vector.broadcast %8 : vector<16x1xf32> to vector<16x32xf32>
    %17 = arith.subf %4, %16 : vector<16x32xf32>
    %cst_5 = arith.constant 9.99999974E-6 : f32
    %18 = vector.broadcast %cst_5 : f32 to vector<16x1xf32>
    %19 = arith.addf %15, %18 : vector<16x1xf32>
    %20 = math.rsqrt %19 : vector<16x1xf32>
    %21 = vector.broadcast %20 : vector<16x1xf32> to vector<16x32xf32>
    %22 = arith.mulf %17, %21 : vector<16x32xf32>
    %c0_6 = arith.constant 0 : index
    %c0_7 = arith.constant 0 : index
    %23 = vector.load %arg6[%c0_6, %c0_7] : memref<1x32xf32, #tpu.memory_space<vmem>>, vector<1x32xf32>
    %24 = vector.broadcast %23 : vector<1x32xf32> to vector<16x32xf32>
    %25 = arith.mulf %22, %24 : vector<16x32xf32>
    %c0_8 = arith.constant 0 : index
    %c0_9 = arith.constant 0 : index
    %26 = vector.load %arg7[%c0_8, %c0_9] : memref<1x32xf32, #tpu.memory_space<vmem>>, vector<1x32xf32>
    %27 = vector.broadcast %26 : vector<1x32xf32> to vector<16x32xf32>
    %28 = arith.addf %25, %27 : vector<16x32xf32>
    %29 = arith.truncf %28 : vector<16x32xf32> to vector<16x32xbf16>
    %c0_10 = arith.constant 0 : index
    %c0_11 = arith.constant 0 : index
    %30 = vector.load %arg9[%c0_10, %c0_11] : memref<16x128xf32, #tpu.memory_space<vmem>>, vector<16x128xf32>
    %c0_12 = arith.constant 0 : index
    %c0_13 = arith.constant 0 : index
    %31 = vector.load %arg4[%c0_12, %c0_13] : memref<32x128xbf16, #tpu.memory_space<vmem>>, vector<32x128xbf16>
    %cst_14 = arith.constant dense<0.000000e+00> : vector<16x128xf32>
    %32 = tpu.matmul %29, %31, %cst_14 {dimension_numbers = #tpu.dot_dimension_numbers<[1], [0], [0], [1], [0, 0, 1, 1], [], []>} : vector<16x32xbf16>, vector<32x128xbf16>, vector<16x128xf32> -> vector<16x128xf32>
    %33 = arith.addf %30, %32 : vector<16x128xf32>
    %c0_15 = arith.constant 0 : index
    %c0_16 = arith.constant 0 : index
    %34 = vector.load %arg9[%c0_15, %c0_16] : memref<16x128xf32, #tpu.memory_space<vmem>>, vector<16x128xf32>
    tpu.vector_store %arg9[%c0_15, %c0_16], %33 {strides = array<i32>} : memref<16x128xf32, #tpu.memory_space<vmem>>, vector<16x128xf32>,
    %c0_i32_17 = arith.constant 0 : i32
    %35 = arith.cmpi eq, %arg2, %c0_i32_17 : i32
    %36 = arith.extui %35 : i1 to i32
    %c0_i32_18 = arith.constant 0 : i32
    %37 = arith.cmpi ne, %36, %c0_i32_18 : i32
    scf.if %37 {
      %c0_19 = arith.constant 0 : index
      %c0_20 = arith.constant 0 : index
      %38 = vector.load %arg9[%c0_19, %c0_20] : memref<16x128xf32, #tpu.memory_space<vmem>>, vector<16x128xf32>
      %c0_21 = arith.constant 0 : index
      %c0_22 = arith.constant 0 : index
      %39 = vector.load %arg5[%c0_21, %c0_22] : memref<1x128xf32, #tpu.memory_space<vmem>>, vector<1x128xf32>
      %40 = vector.broadcast %39 : vector<1x128xf32> to vector<16x128xf32>
      %41 = arith.addf %38, %40 : vector<16x128xf32>
      %cst_23 = arith.constant 5.000000e-01 : f32
      %42 = vector.broadcast %cst_23 : f32 to vector<16x128xf32>
      %43 = arith.mulf %42, %41 : vector<16x128xf32>
      %cst_24 = arith.constant 4.471500e-02 : f32
      %44 = vector.broadcast %cst_24 : f32 to vector<16x128xf32>
      %45 = arith.mulf %44, %41 : vector<16x128xf32>
      %46 = arith.mulf %45, %41 : vector<16x128xf32>
      %47 = arith.mulf %46, %41 : vector<16x128xf32>
      %48 = arith.addf %41, %47 : vector<16x128xf32>
      %cst_25 = arith.constant 0.797884583 : f32
      %49 = vector.broadcast %cst_25 : f32 to vector<16x128xf32>
      %50 = arith.mulf %49, %48 : vector<16x128xf32>
      %51 = math.tanh %50 : vector<16x128xf32>
      %cst_26 = arith.constant 1.000000e+00 : f32
      %52 = vector.broadcast %cst_26 : f32 to vector<16x128xf32>
      %53 = arith.addf %52, %51 : vector<16x128xf32>
      %54 = arith.mulf %43, %53 : vector<16x128xf32>
      %55 = arith.truncf %54 : vector<16x128xf32> to vector<16x128xbf16>
      %c0_27 = arith.constant 0 : index
      %c0_28 = arith.constant 0 : index
      %56 = vector.load %arg8[%c0_27, %c0_28] : memref<16x128xbf16, #tpu.memory_space<vmem>>, vector<16x128xbf16>
      tpu.vector_store %arg8[%c0_27, %c0_28], %55 {strides = array<i32>} : memref<16x128xbf16, #tpu.memory_space<vmem>>, vector<16x128xbf16>,
    } else {
    }
    return
  }
  func.func @transform_0(%arg0: i32, %arg1: i32, %arg2: i32) -> (i32, i32) {
    %c0_i32 = arith.constant 0 : i32
    return %arg0, %arg2 : i32, i32
  }
  func.func @transform_1(%arg0: i32, %arg1: i32, %arg2: i32) -> (i32, i32) {
    %c0_i32 = arith.constant 0 : i32
    return %arg2, %arg1 : i32, i32
  }
  func.func @transform_2(%arg0: i32, %arg1: i32, %arg2: i32) -> (i32, i32) {
    %c0_i32 = arith.constant 0 : i32
    %c0_i32_0 = arith.constant 0 : i32
    return %c0_i32, %arg1 : i32, i32
  }
  func.func @transform_3(%arg0: i32, %arg1: i32, %arg2: i32) -> (i32, i32) {
    %c0_i32 = arith.constant 0 : i32
    %c0_i32_0 = arith.constant 0 : i32
    return %c0_i32, %arg2 : i32, i32
  }
  func.func @transform_4(%arg0: i32, %arg1: i32, %arg2: i32) -> (i32, i32) {
    %c0_i32 = arith.constant 0 : i32
    %c0_i32_0 = arith.constant 0 : i32
    return %c0_i32, %arg2 : i32, i32
  }
  func.func @transform_5(%arg0: i32, %arg1: i32, %arg2: i32) -> (i32, i32) {
    %c0_i32 = arith.constant 0 : i32
    return %arg0, %arg1 : i32, i32
  }
}

module attributes {stable_mosaic.version = 11 : i64} {
  func.func @kernel(%arg0: i32, %arg1: i32, %arg2: i32, %arg3: memref<16x128xbf16, #tpu.memory_space<vmem>>, %arg4: memref<128x32xbf16, #tpu.memory_space<vmem>>, %arg5: memref<1x32xf32, #tpu.memory_space<vmem>>, %arg6: memref<16x32xbf16, #tpu.memory_space<vmem>>, %arg7: memref<16x32xbf16, #tpu.memory_space<vmem>>, %arg8: memref<16x32xf32, #tpu.memory_space<vmem>>) attributes {dimension_semantics = [#tpu.dimension_semantics<parallel>, #tpu.dimension_semantics<parallel>, #tpu.dimension_semantics<arbitrary>], iteration_bounds = array<i64: 1, 1, 1>, scalar_prefetch = 0 : i64, scratch_operands = 1 : i64, tpu.core_type = #tpu.core_type<tc>, window_params = [{transform_indices = @transform_0, window_bounds = array<i64: 16, 128>}, {transform_indices = @transform_1, window_bounds = array<i64: 128, 32>}, {transform_indices = @transform_2, window_bounds = array<i64: 1, 32>}, {transform_indices = @transform_3, window_bounds = array<i64: 16, 32>}, {transform_indices = @transform_4, window_bounds = array<i64: 16, 32>}]} {
    %c0_i32 = arith.constant 0 : i32
    %0 = arith.cmpi eq, %arg2, %c0_i32 : i32
    %1 = arith.extui %0 : i1 to i32
    %c0_i32_0 = arith.constant 0 : i32
    %2 = arith.cmpi ne, %1, %c0_i32_0 : i32
    scf.if %2 {
      %cst_10 = arith.constant 0.000000e+00 : f32
      %12 = vector.broadcast %cst_10 : f32 to vector<16x32xf32>
      %c0_11 = arith.constant 0 : index
      %c0_12 = arith.constant 0 : index
      %13 = vector.load %arg8[%c0_11, %c0_12] : memref<16x32xf32, #tpu.memory_space<vmem>>, vector<16x32xf32>
      tpu.vector_store %arg8[%c0_11, %c0_12], %12 {strides = array<i32>} : memref<16x32xf32, #tpu.memory_space<vmem>>, vector<16x32xf32>,
    } else {
    }
    %c0 = arith.constant 0 : index
    %c0_1 = arith.constant 0 : index
    %3 = vector.load %arg3[%c0, %c0_1] : memref<16x128xbf16, #tpu.memory_space<vmem>>, vector<16x128xbf16>
    %c0_2 = arith.constant 0 : index
    %c0_3 = arith.constant 0 : index
    %4 = vector.load %arg8[%c0_2, %c0_3] : memref<16x32xf32, #tpu.memory_space<vmem>>, vector<16x32xf32>
    %c0_4 = arith.constant 0 : index
    %c0_5 = arith.constant 0 : index
    %5 = vector.load %arg4[%c0_4, %c0_5] : memref<128x32xbf16, #tpu.memory_space<vmem>>, vector<128x32xbf16>
    %cst = arith.constant dense<0.000000e+00> : vector<16x32xf32>
    %6 = tpu.matmul %3, %5, %cst {dimension_numbers = #tpu.dot_dimension_numbers<[1], [0], [0], [1], [0, 0, 1, 1], [], []>} : vector<16x128xbf16>, vector<128x32xbf16>, vector<16x32xf32> -> vector<16x32xf32>
    %7 = arith.addf %4, %6 : vector<16x32xf32>
    %c0_6 = arith.constant 0 : index
    %c0_7 = arith.constant 0 : index
    %8 = vector.load %arg8[%c0_6, %c0_7] : memref<16x32xf32, #tpu.memory_space<vmem>>, vector<16x32xf32>
    tpu.vector_store %arg8[%c0_6, %c0_7], %7 {strides = array<i32>} : memref<16x32xf32, #tpu.memory_space<vmem>>, vector<16x32xf32>,
    %c0_i32_8 = arith.constant 0 : i32
    %9 = arith.cmpi eq, %arg2, %c0_i32_8 : i32
    %10 = arith.extui %9 : i1 to i32
    %c0_i32_9 = arith.constant 0 : i32
    %11 = arith.cmpi ne, %10, %c0_i32_9 : i32
    scf.if %11 {
      %c0_10 = arith.constant 0 : index
      %c0_11 = arith.constant 0 : index
      %12 = vector.load %arg8[%c0_10, %c0_11] : memref<16x32xf32, #tpu.memory_space<vmem>>, vector<16x32xf32>
      %c0_12 = arith.constant 0 : index
      %c0_13 = arith.constant 0 : index
      %13 = vector.load %arg5[%c0_12, %c0_13] : memref<1x32xf32, #tpu.memory_space<vmem>>, vector<1x32xf32>
      %14 = vector.broadcast %13 : vector<1x32xf32> to vector<16x32xf32>
      %15 = arith.addf %12, %14 : vector<16x32xf32>
      %c0_14 = arith.constant 0 : index
      %c0_15 = arith.constant 0 : index
      %16 = vector.load %arg6[%c0_14, %c0_15] : memref<16x32xbf16, #tpu.memory_space<vmem>>, vector<16x32xbf16>
      %17 = arith.extf %16 : vector<16x32xbf16> to vector<16x32xf32>
      %18 = arith.addf %15, %17 : vector<16x32xf32>
      %19 = arith.truncf %18 : vector<16x32xf32> to vector<16x32xbf16>
      %c0_16 = arith.constant 0 : index
      %c0_17 = arith.constant 0 : index
      %20 = vector.load %arg7[%c0_16, %c0_17] : memref<16x32xbf16, #tpu.memory_space<vmem>>, vector<16x32xbf16>
      tpu.vector_store %arg7[%c0_16, %c0_17], %19 {strides = array<i32>} : memref<16x32xbf16, #tpu.memory_space<vmem>>, vector<16x32xbf16>,
    } else {
    }
    return
  }
  func.func @transform_0(%arg0: i32, %arg1: i32, %arg2: i32) -> (i32, i32) {
    %c0_i32 = arith.constant 0 : i32
    return %arg0, %arg2 : i32, i32
  }
  func.func @transform_1(%arg0: i32, %arg1: i32, %arg2: i32) -> (i32, i32) {
    %c0_i32 = arith.constant 0 : i32
    return %arg2, %arg1 : i32, i32
  }
  func.func @transform_2(%arg0: i32, %arg1: i32, %arg2: i32) -> (i32, i32) {
    %c0_i32 = arith.constant 0 : i32
    %c0_i32_0 = arith.constant 0 : i32
    return %c0_i32, %arg1 : i32, i32
  }
  func.func @transform_3(%arg0: i32, %arg1: i32, %arg2: i32) -> (i32, i32) {
    %c0_i32 = arith.constant 0 : i32
    return %arg0, %arg1 : i32, i32
  }
  func.func @transform_4(%arg0: i32, %arg1: i32, %arg2: i32) -> (i32, i32) {
    %c0_i32 = arith.constant 0 : i32
    return %arg0, %arg1 : i32, i32
  }
}

</mosaic_0001>

<llo_original>
// kernel: _lambda_.25
$region0: #{_lambda_.25}
  #allocation0 [shape = 'u32[]', space=smem, size = 0x4, offset = 0x4, fixed_abs, tag = 'smem constant byte address 0x4 - core index']
  #allocation1 [shape = 'u32[72,128]{1,0:T(1,128)}', space=vmem, size = 0x9000, scoped, tag = 'internal scratch']
  %s0 = inlined_call_operand.vmem [shape: bf16[10,32], index: 0, kind: input, shape index: {}]
  %s1 = inlined_call_operand.vmem [shape: f32[1,32], index: 1, kind: input, shape index: {}]
  %s2 = inlined_call_operand.vmem [shape: f32[1,32], index: 2, kind: input, shape index: {}]
  %s3 = inlined_call_operand.vmem [shape: bf16[10,32], index: 3, kind: output, shape index: {}]
  %s4 = sld [smem:[#allocation0]]
  $region22: #{_lambda_.25} parent=0
    _
  %s6 = ssub.s32 1, %s4
  %s7 = scalar_select 0, %s6, %s4
  // Predicated region
  $region2: #{_lambda_.25} parent=0 // pred_check
    _
  $region3: #{_lambda_.25} parent=0 // pred_check_branch
    %9 = sbr.rel (0) target = $region5
  $region4: #{_lambda_.25} parent=0 // pred_region
    _
  $region5: #{_lambda_.25} parent=0 // pred_fallthru
    _
  // Predicated region
  $region6: #{_lambda_.25} parent=0 // pred_check
    _
  $region7: #{_lambda_.25} parent=0 // pred_check_branch
    %11 = sbr.rel (0) target = $region9
  $region8: #{_lambda_.25} parent=0 // pred_region
    _
  $region9: #{_lambda_.25} parent=0 // pred_fallthru
    _
  // Predicated region
  $region10: #{_lambda_.25} parent=0 // pred_check
    _
  $region11: #{_lambda_.25} parent=0 // pred_check_branch
    %13 = sbr.rel (0) target = $region13
  $region12: #{_lambda_.25} parent=0 // pred_region
    _
  $region13: #{_lambda_.25} parent=0 // pred_fallthru
    _
  %v14 = vld [vmem:[%s0] sm:$0xf]
  %v15 = vld [vmem:[%s0 + $0x4] sm:$0x1]
  %v16 = vunpack.c.l.bf16 %v14
  %v17 = vunpack.c.l.bf16 %v15
  %vm18 = vcmask 261120
  %v19 = vsel %vm18, %v16, 0.0
  %20 = vadd.xlane.f32.xlu0 %v19
  %v21 = vpop.xlane.xlu0 %20
  %vm22 = vcmask 254976
  %v23 = vsel %vm22, %v17, 0.0
  %24 = vadd.xlane.f32.xlu0 %v23
  %v25 = vpop.xlane.xlu0 %24
  %v26 = vrcp.pop 32.0
  %v27 = vmul.f32 32.0, %v26
  %v28 = vsub.f32 1.0, %v27
  %v29 = vmul.f32 %v26, %v28
  %v30 = vadd.f32 %v26, %v29
  %vm31 = vweird.f32 %v26
  %v32 = vsel %vm31, %v26, %v30
  %v33 = vmul.f32 %v21, %v32
  %v34 = vmul.f32 %v25, %v32
  %v35 = vsub.f32 %v16, %v33
  %v36 = vsub.f32 %v17, %v34
  %v37 = vmul.f32 %v35, %v35
  %v38 = vmul.f32 %v36, %v36
  %v39 = vsel %vm18, %v37, 0.0
  %40 = vadd.xlane.f32.xlu0 %v39
  %v41 = vpop.xlane.xlu0 %40
  %v42 = vsel %vm22, %v38, 0.0
  %43 = vadd.xlane.f32.xlu0 %v42
  %v44 = vpop.xlane.xlu0 %43
  %v45 = vmul.f32 %v41, %v32
  %v46 = vmul.f32 %v44, %v32
  %v47 = vadd.f32 %v45, 1e-05
  %v48 = vadd.f32 %v46, 1e-05
  %v49 = vrsqrt.pop %v47
  %v50 = vmul.f32 %v49, %v47
  %v51 = vmul.f32 %v50, %v49
  %v52 = vmul.f32 0.5, %v51
  %v53 = vsub.f32 1.5, %v52
  %v54 = vmul.f32 %v49, %v53
  %vm55 = vweird.f32 %v47
  %vm56 = vweird.f32 %v49
  %vm57 = vmor %vm55, %vm56
  %v58 = vsel %vm57, %v49, %v54
  %v59 = vrsqrt.pop %v48
  %v60 = vmul.f32 %v59, %v48
  %v61 = vmul.f32 %v60, %v59
  %v62 = vmul.f32 0.5, %v61
  %v63 = vsub.f32 1.5, %v62
  %v64 = vmul.f32 %v59, %v63
  %vm65 = vweird.f32 %v48
  %vm66 = vweird.f32 %v59
  %vm67 = vmor %vm65, %vm66
  %v68 = vsel %vm67, %v59, %v64
  %v69 = vmul.f32 %v35, %v58
  %v70 = vmul.f32 %v36, %v68
  %v71 = vld [vmem:[%s1] sm:$0x1]
  %v73 = vperm.slane %v71, 0
  %v75 = vmul.f32 %v69, %v73
  %v76 = vmul.f32 %v70, %v73
  %v77 = vld [vmem:[%s2] sm:$0x1]
  %v79 = vperm.slane %v77, 0
  %v81 = vadd.f32 %v75, %v79
  %v82 = vadd.f32 %v76, %v79
  %v83 = vpack.c.bf16 %v81, %v81
  %v84 = vpack.c.bf16 %v82, %v82
  %vm85 = vcmask 257024
  %86 = vst.msk [vmem:[%s3] sm:$0xf] %vm85, %v83
  %vm87 = vcmask 253952
  %88 = vst.msk [vmem:[%s3 + $0x4] sm:$0x1] %vm87, %v84
  // Predicated region
  $region14: #{_lambda_.25} parent=0 // pred_check
    _
  $region15: #{_lambda_.25} parent=0 // pred_check_branch
    %90 = sbr.rel (0) target = $region17
  $region16: #{_lambda_.25} parent=0 // pred_region
    _
  $region17: #{_lambda_.25} parent=0 // pred_fallthru
    _
  // Predicated region
  $region18: #{_lambda_.25} parent=0 // pred_check
    _
  $region19: #{_lambda_.25} parent=0 // pred_check_branch
    %92 = sbr.rel (0) target = $region21
  $region20: #{_lambda_.25} parent=0 // pred_region
    _
  $region21: #{_lambda_.25} parent=0 // pred_fallthru
    _

// kernel: _lambda_.26
$region0: #{_lambda_.26}
  #allocation0 [shape = 'u32[]', space=smem, size = 0x4, offset = 0x4, fixed_abs, tag = 'smem constant byte address 0x4 - core index']
  #allocation1 [shape = 'u32[72,128]{1,0:T(1,128)}', space=vmem, size = 0x9000, scoped, tag = 'internal scratch']
  #allocation2 [shape = 'f32[10,96]{1,0:T(8,128)}', space=vmem, size = 0x2000, scoped, tag = 'scratch operand']
  %s0 = inlined_call_operand.vmem [shape: bf16[10,32], index: 0, kind: input, shape index: {}]
  %s1 = inlined_call_operand.vmem [shape: bf16[32,96], index: 1, kind: input, shape index: {}]
  %s2 = inlined_call_operand.vmem [shape: f32[1,96], index: 2, kind: input, shape index: {}]
  %s3 = inlined_call_operand.vmem [shape: f32[1,32], index: 3, kind: input, shape index: {}]
  %s4 = inlined_call_operand.vmem [shape: f32[1,32], index: 4, kind: input, shape index: {}]
  %s5 = inlined_call_operand.vmem [shape: bf16[10,96], index: 5, kind: output, shape index: {}]
  %s6 = sld [smem:[#allocation0]]
  $region38: #{_lambda_.26} parent=0
    _
  %s8 = ssub.s32 1, %s6
  %s9 = scalar_select 0, %s8, %s6
  // Predicated region
  $region2: #{_lambda_.26} parent=0 // pred_check
    _
  $region3: #{_lambda_.26} parent=0 // pred_check_branch
    %11 = sbr.rel (0) target = $region5
  $region4: #{_lambda_.26} parent=0 // pred_region
    _
  $region5: #{_lambda_.26} parent=0 // pred_fallthru
    _
  // Predicated region
  $region6: #{_lambda_.26} parent=0 // pred_check
    _
  $region7: #{_lambda_.26} parent=0 // pred_check_branch
    %13 = sbr.rel (0) target = $region9
  $region8: #{_lambda_.26} parent=0 // pred_region
    _
  $region9: #{_lambda_.26} parent=0 // pred_fallthru
    _
  // Predicated region
  $region10: #{_lambda_.26} parent=0 // pred_check
    _
  $region11: #{_lambda_.26} parent=0 // pred_check_branch
    %15 = sbr.rel (0) target = $region13
  $region12: #{_lambda_.26} parent=0 // pred_region
    _
  $region13: #{_lambda_.26} parent=0 // pred_fallthru
    _
  // Predicated region
  $region14: #{_lambda_.26} parent=0 // pred_check
    _
  $region15: #{_lambda_.26} parent=0 // pred_check_branch
    %17 = sbr.rel (0) target = $region17
  $region16: #{_lambda_.26} parent=0 // pred_region
    _
  $region17: #{_lambda_.26} parent=0 // pred_fallthru
    _
  // Predicated region
  $region18: #{_lambda_.26} parent=0 // pred_check
    _
  $region19: #{_lambda_.26} parent=0 // pred_check_branch
    %19 = sbr.rel (0) target = $region21
  $region20: #{_lambda_.26} parent=0 // pred_region
    _
  $region21: #{_lambda_.26} parent=0 // pred_fallthru
    _
  %p21 = scmp.eq.s32.totalorder 0, 0
  // Predicated region
  $region22: #{_lambda_.26} parent=0 // pred_check
    %p22 = pneg %p21
  $region23: #{_lambda_.26} parent=0 // pred_check_branch
    %24 = sbr.rel (%p22) target = $region25
  $region24: #{_lambda_.26} parent=0 // pred_region
    %vm25 = vcmask 785408
    %26 = vst.msk [vmem:[#allocation2] sm:$0xff] %vm25, 0.0
    %vm27 = vcmask 779264
    %28 = vst.msk [vmem:[#allocation2 + $0x8] sm:$0x3] %vm27, 0.0
  $region25: #{_lambda_.26} parent=0 // pred_fallthru
    _
  %v29 = vld [vmem:[%s0] sm:$0xf]
  %v30 = vld [vmem:[%s0 + $0x4] sm:$0x1]
  %v31 = vunpack.c.l.bf16 %v29
  %v32 = vunpack.c.l.bf16 %v30
  %vm33 = vcmask 261120
  %v34 = vsel %vm33, %v31, 0.0
  %35 = vadd.xlane.f32.xlu0 %v34
  %v36 = vpop.xlane.xlu0 %35
  %vm37 = vcmask 254976
  %v38 = vsel %vm37, %v32, 0.0
  %39 = vadd.xlane.f32.xlu0 %v38
  %v40 = vpop.xlane.xlu0 %39
  %v41 = vrcp.pop 32.0
  %v42 = vmul.f32 32.0, %v41
  %v43 = vsub.f32 1.0, %v42
  %v44 = vmul.f32 %v41, %v43
  %v45 = vadd.f32 %v41, %v44
  %vm46 = vweird.f32 %v41
  %v47 = vsel %vm46, %v41, %v45
  %v48 = vmul.f32 %v36, %v47
  %v49 = vmul.f32 %v40, %v47
  %v50 = vsub.f32 %v31, %v48
  %v51 = vsub.f32 %v32, %v49
  %v52 = vmul.f32 %v50, %v50
  %v53 = vmul.f32 %v51, %v51
  %v54 = vsel %vm33, %v52, 0.0
  %55 = vadd.xlane.f32.xlu0 %v54
  %v56 = vpop.xlane.xlu0 %55
  %v57 = vsel %vm37, %v53, 0.0
  %58 = vadd.xlane.f32.xlu0 %v57
  %v59 = vpop.xlane.xlu0 %58
  %v60 = vmul.f32 %v56, %v47
  %v61 = vmul.f32 %v59, %v47
  %v62 = vadd.f32 %v60, 1e-05
  %v63 = vadd.f32 %v61, 1e-05
  %v64 = vrsqrt.pop %v62
  %v65 = vmul.f32 %v64, %v62
  %v66 = vmul.f32 %v65, %v64
  %v67 = vmul.f32 0.5, %v66
  %v68 = vsub.f32 1.5, %v67
  %v69 = vmul.f32 %v64, %v68
  %vm70 = vweird.f32 %v62
  %vm71 = vweird.f32 %v64
  %vm72 = vmor %vm70, %vm71
  %v73 = vsel %vm72, %v64, %v69
  %v74 = vrsqrt.pop %v63
  %v75 = vmul.f32 %v74, %v63
  %v76 = vmul.f32 %v75, %v74
  %v77 = vmul.f32 0.5, %v76
  %v78 = vsub.f32 1.5, %v77
  %v79 = vmul.f32 %v74, %v78
  %vm80 = vweird.f32 %v63
  %vm81 = vweird.f32 %v74
  %vm82 = vmor %vm80, %vm81
  %v83 = vsel %vm82, %v74, %v79
  %v84 = vmul.f32 %v50, %v73
  %v85 = vmul.f32 %v51, %v83
  %v86 = vld [vmem:[%s3] sm:$0x1]
  %v88 = vperm.slane %v86, 0
  %v90 = vmul.f32 %v84, %v88
  %v91 = vmul.f32 %v85, %v88
  %v92 = vld [vmem:[%s4] sm:$0x1]
  %v94 = vperm.slane %v92, 0
  %v96 = vadd.f32 %v90, %v94
  %v97 = vadd.f32 %v91, %v94
  %v98 = vpack.c.bf16 %v97, %v96
  %v99 = vld [vmem:[#allocation2] sm:$0xff]
  %v100 = vld [vmem:[#allocation2 + $0x8] sm:$0x3]
  %v101 = vld [vmem:[%s1] sm:$0xf]
  %v102 = vld [vmem:[%s1 + $0x4] sm:$0xf]
  %v103 = vld [vmem:[%s1 + $0x8] sm:$0xf]
  %v104 = vld [vmem:[%s1 + $0xc] sm:$0xf]
  %v109 = vunpack.c.l.b16 %v101
  %v110 = vunpack.c.l.b16 %v102
  %v111 = vunpack.c.l.b16 %v103
  %v112 = vunpack.c.l.b16 %v104
  %v113 = vpack.c.b16 %v110, %v109
  %v114 = vpack.c.b16 %v112, %v111
  %v118 = vsel %vm33, %v98, 0
  %120 = vmatpush.bf16.msra.mxu0 0
  %121 = vmatpush.bf16.msra.mxu0 0
  %122 = vmatpush.bf16.msra.mxu0 0
  %123 = vmatpush.bf16.msra.mxu0 0
  %124 = vmatpush.bf16.msra.mxu0 0
  %125 = vmatpush.bf16.msra.mxu0 0
  %126 = vmatpush.bf16.msra.mxu0 %v114
  %127 = vmatpush.bf16.msra.mxu0 %v113
  %128 = vmatmul.bf16.gmra.mxu0 %v118
  %v129 = vpop.f32.mrf.mxu0
  %v130 = vadd.f32 0.0, %v129
  %v131 = vpop.f32.mrf.mxu0
  %v132 = vadd.f32 0.0, %v131
  %133 = vdwg.mxu0
  %v134 = vadd.f32 %v99, %v130
  %v135 = vadd.f32 %v100, %v132
  %vm136 = vcmask 785408
  %137 = vst.msk [vmem:[#allocation2] sm:$0xff] %vm136, %v134
  %vm138 = vcmask 779264
  %139 = vst.msk [vmem:[#allocation2 + $0x8] sm:$0x3] %vm138, %v135
  // Predicated region
  $region26: #{_lambda_.26} parent=0 // pred_check
    %p140 = pneg %p21
  $region27: #{_lambda_.26} parent=0 // pred_check_branch
    %142 = sbr.rel (%p140) target = $region29
  $region28: #{_lambda_.26} parent=0 // pred_region
    %v143 = vld [vmem:[#allocation2] sm:$0xff]
    %v144 = vld [vmem:[#allocation2 + $0x8] sm:$0x3]
    %v145 = vld [vmem:[%s2] sm:$0x1]
    %v147 = vperm.slane %v145, 0
    %v149 = vadd.f32 %v143, %v147
    %v150 = vadd.f32 %v144, %v147
    %v151 = vpack.c.bf16 %v149, %v149
    %v152 = vpack.c.bf16 %v150, %v150
    %vm153 = vcmask 781312
    %154 = vst.msk [vmem:[%s5] sm:$0xf] %vm153, %v151
    %vm155 = vcmask 778240
    %156 = vst.msk [vmem:[%s5 + $0x4] sm:$0x1] %vm155, %v152
  $region29: #{_lambda_.26} parent=0 // pred_fallthru
    _
  // Predicated region
  $region30: #{_lambda_.26} parent=0 // pred_check
    _
  $region31: #{_lambda_.26} parent=0 // pred_check_branch
    %158 = sbr.rel (0) target = $region33
  $region32: #{_lambda_.26} parent=0 // pred_region
    _
  $region33: #{_lambda_.26} parent=0 // pred_fallthru
    _
  // Predicated region
  $region34: #{_lambda_.26} parent=0 // pred_check
    _
  $region35: #{_lambda_.26} parent=0 // pred_check_branch
    %160 = sbr.rel (0) target = $region37
  $region36: #{_lambda_.26} parent=0 // pred_region
    _
  $region37: #{_lambda_.26} parent=0 // pred_fallthru
    _

// kernel: _lambda_.24
$region0: #{_lambda_.24}
  #allocation0 [shape = 'u32[]', space=smem, size = 0x4, offset = 0x4, fixed_abs, tag = 'smem constant byte address 0x4 - core index']
  #allocation1 [shape = 'u32[72,128]{1,0:T(1,128)}', space=vmem, size = 0x9000, scoped, tag = 'internal scratch']
  #allocation2 [shape = 'f32[8,32]{1,0:T(8,128)}', space=vmem, size = 0x1000, scoped, tag = 'scratch operand']
  %s0 = inlined_call_operand.vmem [shape: bf16[8,192], index: 0, kind: input, shape index: {}]
  %s1 = inlined_call_operand.vmem [shape: bf16[192,32], index: 1, kind: input, shape index: {}]
  %s2 = inlined_call_operand.vmem [shape: f32[1,32], index: 2, kind: input, shape index: {}]
  %s3 = inlined_call_operand.vmem [shape: bf16[8,32], index: 3, kind: output, shape index: {}]
  %s4 = sld [smem:[#allocation0]]
  $region30: #{_lambda_.24} parent=0
    _
  %s6 = ssub.s32 1, %s4
  %s7 = scalar_select 0, %s6, %s4
  // Predicated region
  $region2: #{_lambda_.24} parent=0 // pred_check
    _
  $region3: #{_lambda_.24} parent=0 // pred_check_branch
    %9 = sbr.rel (0) target = $region5
  $region4: #{_lambda_.24} parent=0 // pred_region
    _
  $region5: #{_lambda_.24} parent=0 // pred_fallthru
    _
  // Predicated region
  $region6: #{_lambda_.24} parent=0 // pred_check
    _
  $region7: #{_lambda_.24} parent=0 // pred_check_branch
    %11 = sbr.rel (0) target = $region9
  $region8: #{_lambda_.24} parent=0 // pred_region
    _
  $region9: #{_lambda_.24} parent=0 // pred_fallthru
    _
  // Predicated region
  $region10: #{_lambda_.24} parent=0 // pred_check
    _
  $region11: #{_lambda_.24} parent=0 // pred_check_branch
    %13 = sbr.rel (0) target = $region13
  $region12: #{_lambda_.24} parent=0 // pred_region
    _
  $region13: #{_lambda_.24} parent=0 // pred_fallthru
    _
  %p15 = scmp.eq.s32.totalorder 0, 0
  // Predicated region
  $region14: #{_lambda_.24} parent=0 // pred_check
    %p16 = pneg %p15
  $region15: #{_lambda_.24} parent=0 // pred_check_branch
    %18 = sbr.rel (%p16) target = $region17
  $region16: #{_lambda_.24} parent=0 // pred_region
    %vm19 = vcmask 261120
    %20 = vst.msk [vmem:[#allocation2] sm:$0xff] %vm19, 0.0
  $region17: #{_lambda_.24} parent=0 // pred_fallthru
    _
  %v21 = vld [vmem:[%s0] sm:$0xff]
  %v22 = vld [vmem:[#allocation2] sm:$0xff]
  %v23 = vld [vmem:[%s1] sm:$0xf]
  %v24 = vld [vmem:[%s1 + $0x4] sm:$0xf]
  %v25 = vld [vmem:[%s1 + $0x8] sm:$0xf]
  %v26 = vld [vmem:[%s1 + $0xc] sm:$0xf]
  %v27 = vld [vmem:[%s1 + $0x10] sm:$0xf]
  %v28 = vld [vmem:[%s1 + $0x14] sm:$0xf]
  %v29 = vld [vmem:[%s1 + $0x18] sm:$0xf]
  %v30 = vld [vmem:[%s1 + $0x1c] sm:$0xf]
  %v31 = vld [vmem:[%s1 + $0x20] sm:$0xf]
  %v32 = vld [vmem:[%s1 + $0x24] sm:$0xf]
  %v33 = vld [vmem:[%s1 + $0x28] sm:$0xf]
  %v34 = vld [vmem:[%s1 + $0x2c] sm:$0xf]
  %v35 = vld [vmem:[%s1 + $0x30] sm:$0xf]
  %v36 = vld [vmem:[%s1 + $0x34] sm:$0xf]
  %v37 = vld [vmem:[%s1 + $0x38] sm:$0xf]
  %v38 = vld [vmem:[%s1 + $0x3c] sm:$0xf]
  %v39 = vld [vmem:[%s1 + $0x40] sm:$0xf]
  %v40 = vld [vmem:[%s1 + $0x44] sm:$0xf]
  %v41 = vld [vmem:[%s1 + $0x48] sm:$0xf]
  %v42 = vld [vmem:[%s1 + $0x4c] sm:$0xf]
  %v43 = vld [vmem:[%s1 + $0x50] sm:$0xf]
  %v44 = vld [vmem:[%s1 + $0x54] sm:$0xf]
  %v45 = vld [vmem:[%s1 + $0x58] sm:$0xf]
  %v46 = vld [vmem:[%s1 + $0x5c] sm:$0xf]
  %v48 = vunpack.c.l.b16 %v21
  %v49 = vunpack.c.h.b16 %v21
  %v50 = vpack.c.b16 %v48, %v48
  %v51 = vpack.c.b16 %v49, %v49
  %v77 = vunpack.c.l.b16 %v23
  %v78 = vunpack.c.l.b16 %v24
  %v79 = vunpack.c.l.b16 %v25
  %v80 = vunpack.c.l.b16 %v26
  %v81 = vunpack.c.l.b16 %v27
  %v82 = vunpack.c.l.b16 %v28
  %v83 = vunpack.c.l.b16 %v29
  %v84 = vunpack.c.l.b16 %v30
  %v85 = vunpack.c.l.b16 %v31
  %v86 = vunpack.c.l.b16 %v32
  %v87 = vunpack.c.l.b16 %v33
  %v88 = vunpack.c.l.b16 %v34
  %v89 = vunpack.c.l.b16 %v35
  %v90 = vunpack.c.l.b16 %v36
  %v91 = vunpack.c.l.b16 %v37
  %v92 = vunpack.c.l.b16 %v38
  %v93 = vunpack.c.l.b16 %v39
  %v94 = vunpack.c.l.b16 %v40
  %v95 = vunpack.c.l.b16 %v41
  %v96 = vunpack.c.l.b16 %v42
  %v97 = vunpack.c.l.b16 %v43
  %v98 = vunpack.c.l.b16 %v44
  %v99 = vunpack.c.l.b16 %v45
  %v100 = vunpack.c.l.b16 %v46
  %v101 = vpack.c.b16 %v78, %v77
  %v102 = vpack.c.b16 %v80, %v79
  %v103 = vpack.c.b16 %v82, %v81
  %v104 = vpack.c.b16 %v84, %v83
  %v105 = vpack.c.b16 %v86, %v85
  %v106 = vpack.c.b16 %v88, %v87
  %v107 = vpack.c.b16 %v90, %v89
  %v108 = vpack.c.b16 %v92, %v91
  %v109 = vpack.c.b16 %v94, %v93
  %v110 = vpack.c.b16 %v96, %v95
  %v111 = vpack.c.b16 %v98, %v97
  %v112 = vpack.c.b16 %v100, %v99
  %vm125 = vcmask 523264
  %v127 = vsel %vm125, %v51, 0
  %129 = vmatpush.bf16.msra.mxu0 %v108
  %130 = vmatpush.bf16.msra.mxu0 %v107
  %131 = vmatpush.bf16.msra.mxu0 %v106
  %132 = vmatpush.bf16.msra.mxu0 %v105
  %133 = vmatpush.bf16.msra.mxu0 %v104
  %134 = vmatpush.bf16.msra.mxu0 %v103
  %135 = vmatpush.bf16.msra.mxu0 %v102
  %136 = vmatpush.bf16.msra.mxu0 %v101
  %137 = vmatmul.bf16.gmra.mxu0 %v50
  %v138 = vpop.f32.mrf.mxu0
  %v139 = vadd.f32 0.0, %v138
  %v140 = vpop.f32.mrf.mxu0
  %141 = vdwg.mxu0
  %142 = vmatpush.bf16.msra.mxu0 0
  %143 = vmatpush.bf16.msra.mxu0 0
  %144 = vmatpush.bf16.msra.mxu0 0
  %145 = vmatpush.bf16.msra.mxu0 0
  %146 = vmatpush.bf16.msra.mxu0 %v112
  %147 = vmatpush.bf16.msra.mxu0 %v111
  %148 = vmatpush.bf16.msra.mxu0 %v110
  %149 = vmatpush.bf16.msra.mxu0 %v109
  %150 = vmatmul.bf16.gmra.mxu0 %v127
  %v151 = vpop.f32.mrf.mxu0
  %v152 = vadd.f32 %v139, %v151
  %v153 = vpop.f32.mrf.mxu0
  %154 = vdwg.mxu0
  %v155 = vadd.f32 %v22, %v152
  %vm156 = vcmask 261120
  %157 = vst.msk [vmem:[#allocation2] sm:$0xff] %vm156, %v155
  // Predicated region
  $region18: #{_lambda_.24} parent=0 // pred_check
    %p158 = pneg %p15
  $region19: #{_lambda_.24} parent=0 // pred_check_branch
    %160 = sbr.rel (%p158) target = $region21
  $region20: #{_lambda_.24} parent=0 // pred_region
    %v161 = vld [vmem:[#allocation2] sm:$0xff]
    %v162 = vld [vmem:[%s2] sm:$0x1]
    %v164 = vperm.slane %v162, 0
    %v166 = vadd.f32 %v161, %v164
    %v167 = vpack.c.bf16 %v166, %v166
    %vm168 = vcmask 257024
    %169 = vst.msk [vmem:[%s3] sm:$0xf] %vm168, %v167
  $region21: #{_lambda_.24} parent=0 // pred_fallthru
    _
  // Predicated region
  $region22: #{_lambda_.24} parent=0 // pred_check
    _
  $region23: #{_lambda_.24} parent=0 // pred_check_branch
    %171 = sbr.rel (0) target = $region25
  $region24: #{_lambda_.24} parent=0 // pred_region
    _
  $region25: #{_lambda_.24} parent=0 // pred_fallthru
    _
  // Predicated region
  $region26: #{_lambda_.24} parent=0 // pred_check
    _
  $region27: #{_lambda_.24} parent=0 // pred_check_branch
    %173 = sbr.rel (0) target = $region29
  $region28: #{_lambda_.24} parent=0 // pred_region
    _
  $region29: #{_lambda_.24} parent=0 // pred_fallthru
    _

// kernel: _lambda_.27
$region0: #{_lambda_.27}
  #allocation0 [shape = 'u32[]', space=smem, size = 0x4, offset = 0x4, fixed_abs, tag = 'smem constant byte address 0x4 - core index']
  #allocation1 [shape = 'u32[72,128]{1,0:T(1,128)}', space=vmem, size = 0x9000, scoped, tag = 'internal scratch']
  %s0 = inlined_call_operand.vmem [shape: bf16[2,5,96], index: 0, kind: input, shape index: {}]
  %s1 = inlined_call_operand.vmem [shape: bf16[2,5,32], index: 1, kind: output, shape index: {}]
  %s2 = sld [smem:[#allocation0]]
  $region37: #{_lambda_.27} parent=0
    _
  %s4 = ssub.s32 1, %s2
  %s5 = scalar_select 0, %s4, %s2
  loop: start=0, step=1, limit=4
  $region2: #{_lambda_.27} parent=0 // loop_pre_header
    _
  $region3: #{_lambda_.27} parent=0 // loop_header
    %s7 = sphi 0, %s11
    %p8 = scmp.ge.s32.totalorder %s7, 4
    %s17 = sphi 0, %s19
    %s20 = sphi 0, %s17
    %s21 = sphi 0, %s20
    %s37 = sphi 0, %s21
    %s43 = sphi 0, %s45
    %s46 = sphi 0, %s43
    %s47 = sphi 0, %s46
    %s63 = sphi 0, %s47
  $region4: #{_lambda_.27} parent=0 // loop_header_branch
    %10 = sbr.rel (%p8) target = $region8
  $region5: #{_lambda_.27} parent=0 // loop_body
    %s12 = ssub.s32 %s7, 1
    %s13 = ssub.s32 %s7, 2
    %s14 = sadd.s32 %s7, 1
    %s15 = ssub.s32 %s7, %s14
    %p16 = scmp.eq.s32.totalorder %s15, 0
    %s18 = sadd.s32 %s17, 1
    %s19 = scalar_select %p16, %s17, %s18
    %p22 = pneg %p16
    %p23 = scmp.eq.s32.totalorder %s7, 1
    %p24 = por %p22, %p23
    %p25 = scmp.ne.s32.totalorder %s17, %s20
    %p26 = scmp.eq.s32.totalorder %s7, 0
    %p27 = por %p25, %p26
    %p28 = scmp.ne.s32.totalorder %s17, %s20
    %p29 = scmp.eq.s32.totalorder %s12, 1
    %p30 = por %p28, %p29
    %p31 = scmp.ne.s32.totalorder %s20, %s21
    %p32 = scmp.eq.s32.totalorder %s12, 0
    %p33 = por %p31, %p32
    %p34 = scmp.ne.s32.totalorder %s20, %s21
    %p35 = scmp.eq.s32.totalorder %s13, 1
    %p36 = por %p34, %p35
    %p38 = scmp.ne.s32.totalorder %s21, %s37
    %p39 = scmp.eq.s32.totalorder %s13, 0
    %p40 = por %p38, %p39
    %s41 = ssub.s32 %s7, %s14
    %p42 = scmp.eq.s32.totalorder %s41, 0
    %s44 = sadd.s32 %s43, 1
    %s45 = scalar_select %p42, %s43, %s44
    %p48 = pneg %p42
    %p49 = scmp.eq.s32.totalorder %s7, 1
    %p50 = por %p48, %p49
    %p51 = scmp.ne.s32.totalorder %s43, %s46
    %p52 = scmp.eq.s32.totalorder %s7, 0
    %p53 = por %p51, %p52
    %p54 = scmp.ne.s32.totalorder %s43, %s46
    %p55 = scmp.eq.s32.totalorder %s12, 1
    %p56 = por %p54, %p55
    %p57 = scmp.ne.s32.totalorder %s46, %s47
    %p58 = scmp.eq.s32.totalorder %s12, 0
    %p59 = por %p57, %p58
    %p60 = scmp.ne.s32.totalorder %s46, %s47
    %p61 = scmp.eq.s32.totalorder %s13, 1
    %p62 = por %p60, %p61
    %p64 = scmp.ne.s32.totalorder %s47, %s63
    %p65 = scmp.eq.s32.totalorder %s13, 0
    %p66 = por %p64, %p65
    %p67 = scmp.le.s32.totalorder 1, %s7
    %p68 = scmp.lt.s32.totalorder %s7, 3
    %p69 = pnand %p67, %p68
    %p70 = pneg %p69
    // Predicated region
    $region9: #{_lambda_.27} parent=5 // pred_check
      _
    $region10: #{_lambda_.27} parent=5 // pred_check_branch
      %72 = sbr.rel (%p69) target = $region12
    $region11: #{_lambda_.27} parent=5 // pred_region
      %s73 = ssub.s32 %s7, 1
    $region12: #{_lambda_.27} parent=5 // pred_fallthru
      _
    %p74 = scmp.lt.s32.totalorder %s7, 2
    // Predicated region
    $region13: #{_lambda_.27} parent=5 // pred_check
      %p75 = pneg %p74
    $region14: #{_lambda_.27} parent=5 // pred_check_branch
      %77 = sbr.rel (%p75) target = $region16
    $region15: #{_lambda_.27} parent=5 // pred_region
      // Predicated region
      $region17: #{_lambda_.27} parent=15 // pred_check
        %p78 = pneg %p27
      $region18: #{_lambda_.27} parent=15 // pred_check_branch
        %80 = sbr.rel (%p78) target = $region20
      $region19: #{_lambda_.27} parent=15 // pred_region
        %p81 = scmp.lt.s32.totalorder %s7, 1
        %s82 = scalar_select %p81, %s7, 1
        %s83 = smul.addr %s82, 4
        %s84 = scalar_lea.vmem %s0, %s83
      $region20: #{_lambda_.27} parent=15 // pred_fallthru
        _
    $region16: #{_lambda_.27} parent=5 // pred_fallthru
      _
    %p85 = scmp.le.s32.totalorder 1, %s7
    %p86 = scmp.lt.s32.totalorder %s7, 3
    %p87 = pnand %p85, %p86
    %p88 = pneg %p87
    // Predicated region
    $region21: #{_lambda_.27} parent=5 // pred_check
      _
    $region22: #{_lambda_.27} parent=5 // pred_check_branch
      %90 = sbr.rel (%p87) target = $region24
    $region23: #{_lambda_.27} parent=5 // pred_region
      %s91 = ssub.s32 %s7, 1
      %p92 = scmp.lt.s32.totalorder %s12, 1
      %s93 = scalar_select %p92, %s12, 1
      %s94 = smul.addr %s93, 4
      %s95 = scalar_lea.vmem %s0, %s94
      %p96 = pneg %p33
      %p97 = pneg %p30
      %p98 = pneg %p59
      %p99 = pneg %p56
      %p100 = scmp.lt.s32.totalorder %s12, 1
      %s101 = scalar_select %p100, %s12, 1
      %s102 = smul.addr %s101, 4
      %s103 = scalar_lea.vmem %s1, %s102
      %p104 = scmp.lt.s32.totalorder %s12, 1
      %s105 = scalar_select %p104, %s12, 1
      %s106 = smul.addr %s105, 4
      %s107 = scalar_lea.vmem %s0, %s106
      %p108 = scmp.lt.s32.totalorder %s12, 1
      %s109 = scalar_select %p108, %s12, 1
      %s110 = smul.addr %s109, 4
      %s111 = scalar_lea.vmem %s1, %s110
      %v113 = vld [vmem:[%s107] sm:$0x7]
      %v115 = vunpack.c.l.b16 %v113
      %v116 = vpack.c.b16 %v115, %v115
      %117 = vrot.lane.b32.xlu0 %v116, 96
      %v118 = vpop.permute.xlu0 %117
      %vm119 = vcmask 130048
      %v121 = vsel %vm119, %v113, 0
      %v124 = vsel %vm119, %v118, 0
      %126 = vmatpush.bf16.xpose.msra.mxu0 0
      %127 = vmatpush.bf16.xpose.msra.mxu0 0
      %128 = vmatpush.bf16.xpose.msra.mxu0 0
      %129 = vmatpush.bf16.xpose.msra.mxu0 0
      %130 = vmatpush.bf16.xpose.msra.mxu0 0
      %131 = vmatpush.bf16.xpose.msra.mxu0 0
      %132 = vmatpush.bf16.xpose.msra.mxu0 0
      %133 = vmatpush.bf16.xpose.msra.mxu0 %v124
      %134 = vmatmul.bf16.gmra.mxu0 %v121
      %v135 = vpop.f32.mrf.mxu0
      %v136 = vadd.f32 0.0, %v135
      %v137 = vpop.f32.mrf.mxu0
      %138 = vdwg.mxu0
      %v139 = vmul.f32 %v136, 0.25
      %vm140 = vcmask 36864
      %v141 = vsel %vm140, %v139, -inf
      %142 = vmax.xlane.f32.xlu0 %v141
      %v143 = vpop.xlane.xlu0 %142
      %v144 = vsub.f32 %v139, %v143
      %v145 = vmul.f32 %v144, 1.442695
      %v146 = vpow.pop %v145
      %v147 = vsel %vm140, %v146, 0.0
      %148 = vadd.xlane.f32.xlu0 %v147
      %v149 = vpop.xlane.xlu0 %148
      %v150 = vrcp.pop %v149
      %v151 = vmul.f32 %v146, %v150
      %v152 = vpack.c.bf16 %v151, %v151
      %153 = vrot.lane.b32.xlu0 %v116, 64
      %v154 = vpop.permute.xlu0 %153
      %vm155 = vcmask 39936
      %v157 = vsel %vm155, %v152, 0
      %vm159 = vcmask 1041408
      %vm160 = vcmask 1042432
      %v161 = vsel %vm159, 4294967295, 65535
      %v162 = vsel %vm160, %v161, 0
      %v164 = vand.u32 %v154, %v162
      %166 = vmatpush.bf16.msra.mxu0 0
      %167 = vmatpush.bf16.msra.mxu0 0
      %168 = vmatpush.bf16.msra.mxu0 0
      %169 = vmatpush.bf16.msra.mxu0 0
      %170 = vmatpush.bf16.msra.mxu0 0
      %171 = vmatpush.bf16.msra.mxu0 0
      %172 = vmatpush.bf16.msra.mxu0 0
      %173 = vmatpush.bf16.msra.mxu0 %v164
      %174 = vmatmul.bf16.gmra.mxu0 %v157
      %v175 = vpop.f32.mrf.mxu0
      %v176 = vadd.f32 0.0, %v175
      %v177 = vpop.f32.mrf.mxu0
      %178 = vdwg.mxu0
      %179 = vrot.lane.b32.xlu0 %v116, 112
      %v180 = vpop.permute.xlu0 %179
      %181 = vrot.lane.b32.xlu0 %v116, 80
      %v182 = vpop.permute.xlu0 %181
      %v184 = vsel %vm119, %v180, 0
      %v187 = vsel %vm119, %v182, 0
      %189 = vmatpush.bf16.xpose.msra.mxu0 0
      %190 = vmatpush.bf16.xpose.msra.mxu0 0
      %191 = vmatpush.bf16.xpose.msra.mxu0 0
      %192 = vmatpush.bf16.xpose.msra.mxu0 0
      %193 = vmatpush.bf16.xpose.msra.mxu0 0
      %194 = vmatpush.bf16.xpose.msra.mxu0 0
      %195 = vmatpush.bf16.xpose.msra.mxu0 0
      %196 = vmatpush.bf16.xpose.msra.mxu0 %v187
      %197 = vmatmul.bf16.gmra.mxu0 %v184
      %v198 = vpop.f32.mrf.mxu0
      %v199 = vadd.f32 0.0, %v198
      %v200 = vpop.f32.mrf.mxu0
      %201 = vdwg.mxu0
      %v202 = vmul.f32 %v199, 0.25
      %v203 = vsel %vm140, %v202, -inf
      %204 = vmax.xlane.f32.xlu0 %v203
      %v205 = vpop.xlane.xlu0 %204
      %v206 = vsub.f32 %v202, %v205
      %v207 = vmul.f32 %v206, 1.442695
      %v208 = vpow.pop %v207
      %v209 = vsel %vm140, %v208, 0.0
      %210 = vadd.xlane.f32.xlu0 %v209
      %v211 = vpop.xlane.xlu0 %210
      %v212 = vrcp.pop %v211
      %v213 = vmul.f32 %v208, %v212
      %v214 = vpack.c.bf16 %v213, %v213
      %215 = vrot.lane.b32.xlu0 %v116, 48
      %v216 = vpop.permute.xlu0 %215
      %v218 = vsel %vm155, %v214, 0
      %v221 = vand.u32 %v216, %v162
      %223 = vmatpush.bf16.msra.mxu0 0
      %224 = vmatpush.bf16.msra.mxu0 0
      %225 = vmatpush.bf16.msra.mxu0 0
      %226 = vmatpush.bf16.msra.mxu0 0
      %227 = vmatpush.bf16.msra.mxu0 0
      %228 = vmatpush.bf16.msra.mxu0 0
      %229 = vmatpush.bf16.msra.mxu0 0
      %230 = vmatpush.bf16.msra.mxu0 %v221
      %231 = vmatmul.bf16.gmra.mxu0 %v218
      %v232 = vpop.f32.mrf.mxu0
      %v233 = vadd.f32 0.0, %v232
      %v234 = vpop.f32.mrf.mxu0
      %235 = vdwg.mxu0
      %237 = vrot.lane.b32.xlu0 %v233, 16
      %v238 = vpop.permute.xlu0 %237
      %v240 = vsel %vm119, %v176, %v238
      %v241 = vpack.c.bf16 %v240, %v240
      %vm242 = vcmask 256000
      %vm243 = vsmask.f32 2304
      %vm244 = vmand %vm242, %vm243
      %v245 = vld [vmem:[%s111] sm:$0x7]
      %v246 = vsel %vm244, %v241, %v245
      %247 = vst [vmem:[%s111] sm:$0x7] %v246
      %p248 = scmp.lt.s32.totalorder %s12, 1
      %s249 = scalar_select %p248, %s12, 1
      %s250 = smul.addr %s249, 4
      %s251 = scalar_lea.vmem %s1, %s250
      // Predicated region
      $region25: #{_lambda_.27} parent=23 // pred_check
        %p252 = pneg %p56
      $region26: #{_lambda_.27} parent=23 // pred_check_branch
        %254 = sbr.rel (%p252) target = $region28
      $region27: #{_lambda_.27} parent=23 // pred_region
        _
      $region28: #{_lambda_.27} parent=23 // pred_fallthru
        _
    $region24: #{_lambda_.27} parent=5 // pred_fallthru
      _
    %p255 = scmp.le.s32.totalorder 2, %s7
    // Predicated region
    $region29: #{_lambda_.27} parent=5 // pred_check
      %p256 = pneg %p255
    $region30: #{_lambda_.27} parent=5 // pred_check_branch
      %258 = sbr.rel (%p256) target = $region32
    $region31: #{_lambda_.27} parent=5 // pred_region
      %s259 = ssub.s32 %s7, 2
      // Predicated region
      $region33: #{_lambda_.27} parent=31 // pred_check
        %p260 = pneg %p62
      $region34: #{_lambda_.27} parent=31 // pred_check_branch
        %262 = sbr.rel (%p260) target = $region36
      $region35: #{_lambda_.27} parent=31 // pred_region
        %p263 = scmp.lt.s32.totalorder %s13, 1
        %s264 = scalar_select %p263, %s13, 1
        %s265 = smul.addr %s264, 4
        %s266 = scalar_lea.vmem %s1, %s265
      $region36: #{_lambda_.27} parent=31 // pred_fallthru
        _
    $region32: #{_lambda_.27} parent=5 // pred_fallthru
      _
  $region6: #{_lambda_.27} parent=0 // loop_footer
    %s11 = sadd.s32 1, %s7
  $region7: #{_lambda_.27} parent=0 // loop_footer_branch
    %6 = sbr.rel target = $region3
  $region8: #{_lambda_.27} parent=0 // loop_exit
    _

// kernel: _lambda_.28
$region0: #{_lambda_.28}
  #allocation0 [shape = 'u32[]', space=smem, size = 0x4, offset = 0x4, fixed_abs, tag = 'smem constant byte address 0x4 - core index']
  #allocation1 [shape = 'u32[72,128]{1,0:T(1,128)}', space=vmem, size = 0x9000, scoped, tag = 'internal scratch']
  #allocation2 [shape = 'f32[10,32]{1,0:T(8,128)}', space=vmem, size = 0x2000, scoped, tag = 'scratch operand']
  %s0 = inlined_call_operand.vmem [shape: bf16[10,32], index: 0, kind: input, shape index: {}]
  %s1 = inlined_call_operand.vmem [shape: bf16[32,32], index: 1, kind: input, shape index: {}]
  %s2 = inlined_call_operand.vmem [shape: f32[1,32], index: 2, kind: input, shape index: {}]
  %s3 = inlined_call_operand.vmem [shape: bf16[10,32], index: 3, kind: input, shape index: {}]
  %s4 = inlined_call_operand.vmem [shape: bf16[10,32], index: 4, kind: output, shape index: {}]
  %s5 = sld [smem:[#allocation0]]
  $region34: #{_lambda_.28} parent=0
    _
  %s7 = ssub.s32 1, %s5
  %s8 = scalar_select 0, %s7, %s5
  // Predicated region
  $region2: #{_lambda_.28} parent=0 // pred_check
    _
  $region3: #{_lambda_.28} parent=0 // pred_check_branch
    %10 = sbr.rel (0) target = $region5
  $region4: #{_lambda_.28} parent=0 // pred_region
    _
  $region5: #{_lambda_.28} parent=0 // pred_fallthru
    _
  // Predicated region
  $region6: #{_lambda_.28} parent=0 // pred_check
    _
  $region7: #{_lambda_.28} parent=0 // pred_check_branch
    %12 = sbr.rel (0) target = $region9
  $region8: #{_lambda_.28} parent=0 // pred_region
    _
  $region9: #{_lambda_.28} parent=0 // pred_fallthru
    _
  // Predicated region
  $region10: #{_lambda_.28} parent=0 // pred_check
    _
  $region11: #{_lambda_.28} parent=0 // pred_check_branch
    %14 = sbr.rel (0) target = $region13
  $region12: #{_lambda_.28} parent=0 // pred_region
    _
  $region13: #{_lambda_.28} parent=0 // pred_fallthru
    _
  // Predicated region
  $region14: #{_lambda_.28} parent=0 // pred_check
    _
  $region15: #{_lambda_.28} parent=0 // pred_check_branch
    %16 = sbr.rel (0) target = $region17
  $region16: #{_lambda_.28} parent=0 // pred_region
    _
  $region17: #{_lambda_.28} parent=0 // pred_fallthru
    _
  %p18 = scmp.eq.s32.totalorder 0, 0
  // Predicated region
  $region18: #{_lambda_.28} parent=0 // pred_check
    %p19 = pneg %p18
  $region19: #{_lambda_.28} parent=0 // pred_check_branch
    %21 = sbr.rel (%p19) target = $region21
  $region20: #{_lambda_.28} parent=0 // pred_region
    %vm22 = vcmask 261120
    %23 = vst.msk [vmem:[#allocation2] sm:$0xff] %vm22, 0.0
    %vm24 = vcmask 254976
    %25 = vst.msk [vmem:[#allocation2 + $0x8] sm:$0x3] %vm24, 0.0
  $region21: #{_lambda_.28} parent=0 // pred_fallthru
    _
  %v26 = vld [vmem:[%s0] sm:$0xf]
  %v27 = vld [vmem:[%s0 + $0x4] sm:$0x1]
  %v28 = vld [vmem:[#allocation2] sm:$0xff]
  %v29 = vld [vmem:[#allocation2 + $0x8] sm:$0x3]
  %v30 = vld [vmem:[%s1] sm:$0xf]
  %v31 = vld [vmem:[%s1 + $0x4] sm:$0xf]
  %v32 = vld [vmem:[%s1 + $0x8] sm:$0xf]
  %v33 = vld [vmem:[%s1 + $0xc] sm:$0xf]
  %v36 = vunpack.c.l.b16 %v26
  %v37 = vunpack.c.l.b16 %v27
  %v38 = vpack.c.b16 %v37, %v36
  %v43 = vunpack.c.l.b16 %v30
  %v44 = vunpack.c.l.b16 %v31
  %v45 = vunpack.c.l.b16 %v32
  %v46 = vunpack.c.l.b16 %v33
  %v47 = vpack.c.b16 %v44, %v43
  %v48 = vpack.c.b16 %v46, %v45
  %vm51 = vcmask 261120
  %v53 = vsel %vm51, %v38, 0
  %55 = vmatpush.bf16.msra.mxu0 0
  %56 = vmatpush.bf16.msra.mxu0 0
  %57 = vmatpush.bf16.msra.mxu0 0
  %58 = vmatpush.bf16.msra.mxu0 0
  %59 = vmatpush.bf16.msra.mxu0 0
  %60 = vmatpush.bf16.msra.mxu0 0
  %61 = vmatpush.bf16.msra.mxu0 %v48
  %62 = vmatpush.bf16.msra.mxu0 %v47
  %63 = vmatmul.bf16.gmra.mxu0 %v53
  %v64 = vpop.f32.mrf.mxu0
  %v65 = vadd.f32 0.0, %v64
  %v66 = vpop.f32.mrf.mxu0
  %v67 = vadd.f32 0.0, %v66
  %68 = vdwg.mxu0
  %v69 = vadd.f32 %v28, %v65
  %v70 = vadd.f32 %v29, %v67
  %71 = vst.msk [vmem:[#allocation2] sm:$0xff] %vm51, %v69
  %vm72 = vcmask 254976
  %73 = vst.msk [vmem:[#allocation2 + $0x8] sm:$0x3] %vm72, %v70
  // Predicated region
  $region22: #{_lambda_.28} parent=0 // pred_check
    %p74 = pneg %p18
  $region23: #{_lambda_.28} parent=0 // pred_check_branch
    %76 = sbr.rel (%p74) target = $region25
  $region24: #{_lambda_.28} parent=0 // pred_region
    %v77 = vld [vmem:[#allocation2] sm:$0xff]
    %v78 = vld [vmem:[#allocation2 + $0x8] sm:$0x3]
    %v79 = vld [vmem:[%s2] sm:$0x1]
    %v81 = vperm.slane %v79, 0
    %v83 = vadd.f32 %v77, %v81
    %v84 = vadd.f32 %v78, %v81
    %v85 = vld [vmem:[%s3] sm:$0xf]
    %v86 = vld [vmem:[%s3 + $0x4] sm:$0x1]
    %v87 = vunpack.c.l.bf16 %v85
    %v88 = vunpack.c.l.bf16 %v86
    %v89 = vadd.f32 %v83, %v87
    %v90 = vadd.f32 %v84, %v88
    %v91 = vpack.c.bf16 %v89, %v89
    %v92 = vpack.c.bf16 %v90, %v90
    %vm93 = vcmask 257024
    %94 = vst.msk [vmem:[%s4] sm:$0xf] %vm93, %v91
    %vm95 = vcmask 253952
    %96 = vst.msk [vmem:[%s4 + $0x4] sm:$0x1] %vm95, %v92
  $region25: #{_lambda_.28} parent=0 // pred_fallthru
    _
  // Predicated region
  $region26: #{_lambda_.28} parent=0 // pred_check
    _
  $region27: #{_lambda_.28} parent=0 // pred_check_branch
    %98 = sbr.rel (0) target = $region29
  $region28: #{_lambda_.28} parent=0 // pred_region
    _
  $region29: #{_lambda_.28} parent=0 // pred_fallthru
    _
  // Predicated region
  $region30: #{_lambda_.28} parent=0 // pred_check
    _
  $region31: #{_lambda_.28} parent=0 // pred_check_branch
    %100 = sbr.rel (0) target = $region33
  $region32: #{_lambda_.28} parent=0 // pred_region
    _
  $region33: #{_lambda_.28} parent=0 // pred_fallthru
    _

// kernel: _lambda_.30
$region0: #{_lambda_.30}
  #allocation0 [shape = 'u32[]', space=smem, size = 0x4, offset = 0x4, fixed_abs, tag = 'smem constant byte address 0x4 - core index']
  #allocation1 [shape = 'u32[72,128]{1,0:T(1,128)}', space=vmem, size = 0x9000, scoped, tag = 'internal scratch']
  #allocation2 [shape = 'f32[10,32]{1,0:T(8,128)}', space=vmem, size = 0x2000, scoped, tag = 'scratch operand']
  %s0 = inlined_call_operand.vmem [shape: bf16[10,128], index: 0, kind: input, shape index: {}]
  %s1 = inlined_call_operand.vmem [shape: bf16[128,32], index: 1, kind: input, shape index: {}]
  %s2 = inlined_call_operand.vmem [shape: f32[1,32], index: 2, kind: input, shape index: {}]
  %s3 = inlined_call_operand.vmem [shape: bf16[10,32], index: 3, kind: input, shape index: {}]
  %s4 = inlined_call_operand.vmem [shape: bf16[10,32], index: 4, kind: output, shape index: {}]
  %s5 = sld [smem:[#allocation0]]
  $region34: #{_lambda_.30} parent=0
    _
  %s7 = ssub.s32 1, %s5
  %s8 = scalar_select 0, %s7, %s5
  // Predicated region
  $region2: #{_lambda_.30} parent=0 // pred_check
    _
  $region3: #{_lambda_.30} parent=0 // pred_check_branch
    %10 = sbr.rel (0) target = $region5
  $region4: #{_lambda_.30} parent=0 // pred_region
    _
  $region5: #{_lambda_.30} parent=0 // pred_fallthru
    _
  // Predicated region
  $region6: #{_lambda_.30} parent=0 // pred_check
    _
  $region7: #{_lambda_.30} parent=0 // pred_check_branch
    %12 = sbr.rel (0) target = $region9
  $region8: #{_lambda_.30} parent=0 // pred_region
    _
  $region9: #{_lambda_.30} parent=0 // pred_fallthru
    _
  // Predicated region
  $region10: #{_lambda_.30} parent=0 // pred_check
    _
  $region11: #{_lambda_.30} parent=0 // pred_check_branch
    %14 = sbr.rel (0) target = $region13
  $region12: #{_lambda_.30} parent=0 // pred_region
    _
  $region13: #{_lambda_.30} parent=0 // pred_fallthru
    _
  // Predicated region
  $region14: #{_lambda_.30} parent=0 // pred_check
    _
  $region15: #{_lambda_.30} parent=0 // pred_check_branch
    %16 = sbr.rel (0) target = $region17
  $region16: #{_lambda_.30} parent=0 // pred_region
    _
  $region17: #{_lambda_.30} parent=0 // pred_fallthru
    _
  %p17 = scmp.eq.s32.totalorder 0, 0
  // Predicated region
  $region18: #{_lambda_.30} parent=0 // pred_check
    %p18 = pneg %p17
  $region19: #{_lambda_.30} parent=0 // pred_check_branch
    %20 = sbr.rel (%p18) target = $region21
  $region20: #{_lambda_.30} parent=0 // pred_region
    %vm21 = vcmask 261120
    %22 = vst.msk [vmem:[#allocation2] sm:$0xff] %vm21, 0.0
    %vm23 = vcmask 254976
    %24 = vst.msk [vmem:[#allocation2 + $0x8] sm:$0x3] %vm23, 0.0
  $region21: #{_lambda_.30} parent=0 // pred_fallthru
    _
  %v25 = vld [vmem:[%s0] sm:$0xf]
  %v26 = vld [vmem:[%s0 + $0x4] sm:$0x1]
  %v27 = vld [vmem:[#allocation2] sm:$0xff]
  %v28 = vld [vmem:[#allocation2 + $0x8] sm:$0x3]
  %v29 = vld [vmem:[%s1] sm:$0xf]
  %v30 = vld [vmem:[%s1 + $0x4] sm:$0xf]
  %v31 = vld [vmem:[%s1 + $0x8] sm:$0xf]
  %v32 = vld [vmem:[%s1 + $0xc] sm:$0xf]
  %v33 = vld [vmem:[%s1 + $0x10] sm:$0xf]
  %v34 = vld [vmem:[%s1 + $0x14] sm:$0xf]
  %v35 = vld [vmem:[%s1 + $0x18] sm:$0xf]
  %v36 = vld [vmem:[%s1 + $0x1c] sm:$0xf]
  %v37 = vld [vmem:[%s1 + $0x20] sm:$0xf]
  %v38 = vld [vmem:[%s1 + $0x24] sm:$0xf]
  %v39 = vld [vmem:[%s1 + $0x28] sm:$0xf]
  %v40 = vld [vmem:[%s1 + $0x2c] sm:$0xf]
  %v41 = vld [vmem:[%s1 + $0x30] sm:$0xf]
  %v42 = vld [vmem:[%s1 + $0x34] sm:$0xf]
  %v43 = vld [vmem:[%s1 + $0x38] sm:$0xf]
  %v44 = vld [vmem:[%s1 + $0x3c] sm:$0xf]
  %v47 = vunpack.c.l.b16 %v25
  %v48 = vunpack.c.l.b16 %v26
  %v49 = vpack.c.b16 %v48, %v47
  %v67 = vunpack.c.l.b16 %v29
  %v68 = vunpack.c.l.b16 %v30
  %v69 = vunpack.c.l.b16 %v31
  %v70 = vunpack.c.l.b16 %v32
  %v71 = vunpack.c.l.b16 %v33
  %v72 = vunpack.c.l.b16 %v34
  %v73 = vunpack.c.l.b16 %v35
  %v74 = vunpack.c.l.b16 %v36
  %v75 = vunpack.c.l.b16 %v37
  %v76 = vunpack.c.l.b16 %v38
  %v77 = vunpack.c.l.b16 %v39
  %v78 = vunpack.c.l.b16 %v40
  %v79 = vunpack.c.l.b16 %v41
  %v80 = vunpack.c.l.b16 %v42
  %v81 = vunpack.c.l.b16 %v43
  %v82 = vunpack.c.l.b16 %v44
  %v83 = vpack.c.b16 %v68, %v67
  %v84 = vpack.c.b16 %v70, %v69
  %v85 = vpack.c.b16 %v72, %v71
  %v86 = vpack.c.b16 %v74, %v73
  %v87 = vpack.c.b16 %v76, %v75
  %v88 = vpack.c.b16 %v78, %v77
  %v89 = vpack.c.b16 %v80, %v79
  %v90 = vpack.c.b16 %v82, %v81
  %99 = vmatpush.bf16.msra.mxu0 %v90
  %100 = vmatpush.bf16.msra.mxu0 %v89
  %101 = vmatpush.bf16.msra.mxu0 %v88
  %102 = vmatpush.bf16.msra.mxu0 %v87
  %103 = vmatpush.bf16.msra.mxu0 %v86
  %104 = vmatpush.bf16.msra.mxu0 %v85
  %105 = vmatpush.bf16.msra.mxu0 %v84
  %106 = vmatpush.bf16.msra.mxu0 %v83
  %107 = vmatmul.bf16.gmra.mxu0 %v49
  %v108 = vpop.f32.mrf.mxu0
  %v109 = vadd.f32 0.0, %v108
  %v110 = vpop.f32.mrf.mxu0
  %v111 = vadd.f32 0.0, %v110
  %112 = vdwg.mxu0
  %v113 = vadd.f32 %v27, %v109
  %v114 = vadd.f32 %v28, %v111
  %vm115 = vcmask 261120
  %116 = vst.msk [vmem:[#allocation2] sm:$0xff] %vm115, %v113
  %vm117 = vcmask 254976
  %118 = vst.msk [vmem:[#allocation2 + $0x8] sm:$0x3] %vm117, %v114
  // Predicated region
  $region22: #{_lambda_.30} parent=0 // pred_check
    %p119 = pneg %p17
  $region23: #{_lambda_.30} parent=0 // pred_check_branch
    %121 = sbr.rel (%p119) target = $region25
  $region24: #{_lambda_.30} parent=0 // pred_region
    %v122 = vld [vmem:[#allocation2] sm:$0xff]
    %v123 = vld [vmem:[#allocation2 + $0x8] sm:$0x3]
    %v124 = vld [vmem:[%s2] sm:$0x1]
    %v126 = vperm.slane %v124, 0
    %v128 = vadd.f32 %v122, %v126
    %v129 = vadd.f32 %v123, %v126
    %v130 = vld [vmem:[%s3] sm:$0xf]
    %v131 = vld [vmem:[%s3 + $0x4] sm:$0x1]
    %v132 = vunpack.c.l.bf16 %v130
    %v133 = vunpack.c.l.bf16 %v131
    %v134 = vadd.f32 %v128, %v132
    %v135 = vadd.f32 %v129, %v133
    %v136 = vpack.c.bf16 %v134, %v134
    %v137 = vpack.c.bf16 %v135, %v135
    %vm138 = vcmask 257024
    %139 = vst.msk [vmem:[%s4] sm:$0xf] %vm138, %v136
    %vm140 = vcmask 253952
    %141 = vst.msk [vmem:[%s4 + $0x4] sm:$0x1] %vm140, %v137
  $region25: #{_lambda_.30} parent=0 // pred_fallthru
    _
  // Predicated region
  $region26: #{_lambda_.30} parent=0 // pred_check
    _
  $region27: #{_lambda_.30} parent=0 // pred_check_branch
    %143 = sbr.rel (0) target = $region29
  $region28: #{_lambda_.30} parent=0 // pred_region
    _
  $region29: #{_lambda_.30} parent=0 // pred_fallthru
    _
  // Predicated region
  $region30: #{_lambda_.30} parent=0 // pred_check
    _
  $region31: #{_lambda_.30} parent=0 // pred_check_branch
    %145 = sbr.rel (0) target = $region33
  $region32: #{_lambda_.30} parent=0 // pred_region
    _
  $region33: #{_lambda_.30} parent=0 // pred_fallthru
    _

// kernel: _lambda_.36
$region0: #{_lambda_.36}
  #allocation0 [shape = 'u32[]', space=smem, size = 0x4, offset = 0x4, fixed_abs, tag = 'smem constant byte address 0x4 - core index']
  #allocation1 [shape = 'u32[72,128]{1,0:T(1,128)}', space=vmem, size = 0x9000, scoped, tag = 'internal scratch']
  #allocation2 [shape = 'f32[2,32]{1,0:T(2,128)}', space=vmem, size = 0x400, scoped, tag = 'scratch operand']
  %s0 = inlined_call_operand.vmem [shape: bf16[2,32], index: 0, kind: input, shape index: {}]
  %s1 = inlined_call_operand.vmem [shape: bf16[32,32], index: 1, kind: input, shape index: {}]
  %s2 = inlined_call_operand.vmem [shape: f32[1,32], index: 2, kind: input, shape index: {}]
  %s3 = inlined_call_operand.vmem [shape: f32[1,32], index: 3, kind: input, shape index: {}]
  %s4 = inlined_call_operand.vmem [shape: f32[1,32], index: 4, kind: input, shape index: {}]
  %s5 = inlined_call_operand.hbm [shape: f32[2,32], index: 5, kind: output, shape index: {}]
  %s6 = sld [smem:[#allocation0]]
  $region38: #{_lambda_.36} parent=0
    _
  %s8 = ssub.s32 1, %s6
  %s9 = scalar_select 0, %s8, %s6
  $region1: #{_lambda_.36} parent=0
    #allocation3 [shape = 'u8[1024]{0}', space=vmem, size = 0x400, scoped, tag = 'output window, operand 0, single buffered']
    #allocation4 [shape = 's32[1]{0}', space=sflag, size = 0x4, scoped, tag = 'scoped memory for _lambda_.36']
    %10 = vsyncpa [#allocation4], 0
    // Predicated region
    $region2: #{_lambda_.36} parent=1 // pred_check
      _
    $region3: #{_lambda_.36} parent=1 // pred_check_branch
      %12 = sbr.rel (0) target = $region5
    $region4: #{_lambda_.36} parent=1 // pred_region
      _
    $region5: #{_lambda_.36} parent=1 // pred_fallthru
      _
    // Predicated region
    $region6: #{_lambda_.36} parent=1 // pred_check
      _
    $region7: #{_lambda_.36} parent=1 // pred_check_branch
      %14 = sbr.rel (0) target = $region9
    $region8: #{_lambda_.36} parent=1 // pred_region
      _
    $region9: #{_lambda_.36} parent=1 // pred_fallthru
      _
    // Predicated region
    $region10: #{_lambda_.36} parent=1 // pred_check
      _
    $region11: #{_lambda_.36} parent=1 // pred_check_branch
      %16 = sbr.rel (0) target = $region13
    $region12: #{_lambda_.36} parent=1 // pred_region
      _
    $region13: #{_lambda_.36} parent=1 // pred_fallthru
      _
    // Predicated region
    $region14: #{_lambda_.36} parent=1 // pred_check
      _
    $region15: #{_lambda_.36} parent=1 // pred_check_branch
      %18 = sbr.rel (0) target = $region17
    $region16: #{_lambda_.36} parent=1 // pred_region
      _
    $region17: #{_lambda_.36} parent=1 // pred_fallthru
      _
    // Predicated region
    $region18: #{_lambda_.36} parent=1 // pred_check
      _
    $region19: #{_lambda_.36} parent=1 // pred_check_branch
      %20 = sbr.rel (0) target = $region21
    $region20: #{_lambda_.36} parent=1 // pred_region
      _
    $region21: #{_lambda_.36} parent=1 // pred_fallthru
      _
    %p22 = scmp.eq.s32.totalorder 0, 0
    // Predicated region
    $region22: #{_lambda_.36} parent=1 // pred_check
      %p23 = pneg %p22
    $region23: #{_lambda_.36} parent=1 // pred_check_branch
      %25 = sbr.rel (%p23) target = $region25
    $region24: #{_lambda_.36} parent=1 // pred_region
      %vm26 = vcmask 254976
      %27 = vst.msk [vmem:[#allocation2] sm:$0x3] %vm26, 0.0
    $region25: #{_lambda_.36} parent=1 // pred_fallthru
      _
    %v28 = vld [vmem:[%s0] sm:$0x1]
    %v29 = vunpack.c.l.bf16 %v28
    %vm30 = vcmask 254976
    %v31 = vsel %vm30, %v29, 0.0
    %32 = vadd.xlane.f32.xlu0 %v31
    %v33 = vpop.xlane.xlu0 %32
    %v34 = vrcp.pop 32.0
    %v35 = vmul.f32 32.0, %v34
    %v36 = vsub.f32 1.0, %v35
    %v37 = vmul.f32 %v34, %v36
    %v38 = vadd.f32 %v34, %v37
    %vm39 = vweird.f32 %v34
    %v40 = vsel %vm39, %v34, %v38
    %v41 = vmul.f32 %v33, %v40
    %v42 = vsub.f32 %v29, %v41
    %v43 = vmul.f32 %v42, %v42
    %v44 = vsel %vm30, %v43, 0.0
    %45 = vadd.xlane.f32.xlu0 %v44
    %v46 = vpop.xlane.xlu0 %45
    %v47 = vmul.f32 %v46, %v40
    %v48 = vadd.f32 %v47, 1e-05
    %v49 = vrsqrt.pop %v48
    %v50 = vmul.f32 %v49, %v48
    %v51 = vmul.f32 %v50, %v49
    %v52 = vmul.f32 0.5, %v51
    %v53 = vsub.f32 1.5, %v52
    %v54 = vmul.f32 %v49, %v53
    %vm55 = vweird.f32 %v48
    %vm56 = vweird.f32 %v49
    %vm57 = vmor %vm55, %vm56
    %v58 = vsel %vm57, %v49, %v54
    %v59 = vmul.f32 %v42, %v58
    %v60 = vld [vmem:[%s3] sm:$0x1]
    %v62 = vperm.slane %v60, 0
    %v64 = vmul.f32 %v59, %v62
    %v65 = vld [vmem:[%s4] sm:$0x1]
    %v67 = vperm.slane %v65, 0
    %v69 = vadd.f32 %v64, %v67
    %v70 = vpack.c.bf16 %v69, %v69
    %v71 = vld [vmem:[#allocation2] sm:$0x3]
    %v72 = vld [vmem:[%s1] sm:$0xf]
    %v73 = vld [vmem:[%s1 + $0x4] sm:$0xf]
    %v74 = vld [vmem:[%s1 + $0x8] sm:$0xf]
    %v75 = vld [vmem:[%s1 + $0xc] sm:$0xf]
    %v80 = vunpack.c.l.b16 %v72
    %v81 = vunpack.c.l.b16 %v73
    %v82 = vunpack.c.l.b16 %v74
    %v83 = vunpack.c.l.b16 %v75
    %v84 = vpack.c.b16 %v81, %v80
    %v85 = vpack.c.b16 %v83, %v82
    %vm88 = vcmask 261120
    %v90 = vsel %vm88, %v70, 0
    %92 = vmatpush.bf16.msra.mxu0 0
    %93 = vmatpush.bf16.msra.mxu0 0
    %94 = vmatpush.bf16.msra.mxu0 0
    %95 = vmatpush.bf16.msra.mxu0 0
    %96 = vmatpush.bf16.msra.mxu0 0
    %97 = vmatpush.bf16.msra.mxu0 0
    %98 = vmatpush.bf16.msra.mxu0 %v85
    %99 = vmatpush.bf16.msra.mxu0 %v84
    %100 = vmatmul.bf16.gmra.mxu0 %v90
    %v101 = vpop.f32.mrf.mxu0
    %v102 = vadd.f32 0.0, %v101
    %v103 = vpop.f32.mrf.mxu0
    %104 = vdwg.mxu0
    %v105 = vadd.f32 %v71, %v102
    %106 = vst.msk [vmem:[#allocation2] sm:$0x3] %vm30, %v105
    // Predicated region
    $region26: #{_lambda_.36} parent=1 // pred_check
      %p107 = pneg %p22
    $region27: #{_lambda_.36} parent=1 // pred_check_branch
      %109 = sbr.rel (%p107) target = $region29
    $region28: #{_lambda_.36} parent=1 // pred_region
      %v110 = vld [vmem:[#allocation2] sm:$0x3]
      %v111 = vld [vmem:[%s2] sm:$0x1]
      %v113 = vperm.slane %v111, 0
      %v115 = vadd.f32 %v110, %v113
      %v116 = vmul.f32 %v115, %v115
      %v117 = vsel %vm30, %v116, 0.0
      %118 = vadd.xlane.f32.xlu0 %v117
      %v119 = vpop.xlane.xlu0 %118
      %v120 = vmax.f32 %v119, 1e-24
      %v121 = vrsqrt.pop %v120
      %v122 = vmul.f32 %v121, %v120
      %v123 = vmul.f32 %v122, %v121
      %v124 = vmul.f32 0.5, %v123
      %v125 = vsub.f32 1.5, %v124
      %v126 = vmul.f32 %v121, %v125
      %vm127 = vweird.f32 %v120
      %vm128 = vweird.f32 %v121
      %vm129 = vmor %vm127, %vm128
      %v130 = vsel %vm129, %v121, %v126
      %v131 = vmul.f32 %v115, %v130
      %132 = vst.msk [vmem:[#allocation3] sm:$0x3] %vm30, %v131
    $region29: #{_lambda_.36} parent=1 // pred_fallthru
      _
    // Predicated region
    $region30: #{_lambda_.36} parent=1 // pred_check
      _
    $region31: #{_lambda_.36} parent=1 // pred_check_branch
      %134 = sbr.rel (0) target = $region33
    $region32: #{_lambda_.36} parent=1 // pred_region
      %136 = vsyncadd [#allocation4], 0
      %s138 = sshll.u32 [#allocation3], 4
      %s139 = int_to_ptr.vmem [resolvable:$true] %s138
      %s140 = sshll.u32 %s5, 4
      %s141 = int_to_ptr.hbm [resolvable:$true] %s140
      %143 = dma.vmem_to_hbm [thread:$0]  %s139, 32, %s141, [#allocation4]
    $region33: #{_lambda_.36} parent=1 // pred_fallthru
      _
    // Predicated region
    $region34: #{_lambda_.36} parent=1 // pred_check
      _
    $region35: #{_lambda_.36} parent=1 // pred_check_branch
      %145 = sbr.rel (0) target = $region37
    $region36: #{_lambda_.36} parent=1 // pred_region
      %147 = dma.done [#allocation4], 32
    $region37: #{_lambda_.36} parent=1 // pred_fallthru
      _
    %148 = vsyncpa [#allocation4], 1

// kernel: _lambda_.29
$region0: #{_lambda_.29}
  #allocation0 [shape = 'u32[]', space=smem, size = 0x4, offset = 0x4, fixed_abs, tag = 'smem constant byte address 0x4 - core index']
  #allocation1 [shape = 'u32[72,128]{1,0:T(1,128)}', space=vmem, size = 0x9000, scoped, tag = 'internal scratch']
  #allocation2 [shape = 'f32[10,128]{1,0:T(8,128)}', space=vmem, size = 0x2000, scoped, tag = 'scratch operand']
  %s0 = inlined_call_operand.vmem [shape: bf16[10,32], index: 0, kind: input, shape index: {}]
  %s1 = inlined_call_operand.vmem [shape: bf16[32,128], index: 1, kind: input, shape index: {}]
  %s2 = inlined_call_operand.vmem [shape: f32[1,128], index: 2, kind: input, shape index: {}]
  %s3 = inlined_call_operand.vmem [shape: f32[1,32], index: 3, kind: input, shape index: {}]
  %s4 = inlined_call_operand.vmem [shape: f32[1,32], index: 4, kind: input, shape index: {}]
  %s5 = inlined_call_operand.vmem [shape: bf16[10,128], index: 5, kind: output, shape index: {}]
  %s6 = sld [smem:[#allocation0]]
  $region38: #{_lambda_.29} parent=0
    _
  %s8 = ssub.s32 1, %s6
  %s9 = scalar_select 0, %s8, %s6
  // Predicated region
  $region2: #{_lambda_.29} parent=0 // pred_check
    _
  $region3: #{_lambda_.29} parent=0 // pred_check_branch
    %11 = sbr.rel (0) target = $region5
  $region4: #{_lambda_.29} parent=0 // pred_region
    _
  $region5: #{_lambda_.29} parent=0 // pred_fallthru
    _
  // Predicated region
  $region6: #{_lambda_.29} parent=0 // pred_check
    _
  $region7: #{_lambda_.29} parent=0 // pred_check_branch
    %13 = sbr.rel (0) target = $region9
  $region8: #{_lambda_.29} parent=0 // pred_region
    _
  $region9: #{_lambda_.29} parent=0 // pred_fallthru
    _
  // Predicated region
  $region10: #{_lambda_.29} parent=0 // pred_check
    _
  $region11: #{_lambda_.29} parent=0 // pred_check_branch
    %15 = sbr.rel (0) target = $region13
  $region12: #{_lambda_.29} parent=0 // pred_region
    _
  $region13: #{_lambda_.29} parent=0 // pred_fallthru
    _
  // Predicated region
  $region14: #{_lambda_.29} parent=0 // pred_check
    _
  $region15: #{_lambda_.29} parent=0 // pred_check_branch
    %17 = sbr.rel (0) target = $region17
  $region16: #{_lambda_.29} parent=0 // pred_region
    _
  $region17: #{_lambda_.29} parent=0 // pred_fallthru
    _
  // Predicated region
  $region18: #{_lambda_.29} parent=0 // pred_check
    _
  $region19: #{_lambda_.29} parent=0 // pred_check_branch
    %19 = sbr.rel (0) target = $region21
  $region20: #{_lambda_.29} parent=0 // pred_region
    _
  $region21: #{_lambda_.29} parent=0 // pred_fallthru
    _
  %p21 = scmp.eq.s32.totalorder 0, 0
  // Predicated region
  $region22: #{_lambda_.29} parent=0 // pred_check
    %p22 = pneg %p21
  $region23: #{_lambda_.29} parent=0 // pred_check_branch
    %24 = sbr.rel (%p22) target = $region25
  $region24: #{_lambda_.29} parent=0 // pred_region
    %25 = vst [vmem:[#allocation2] sm:$0xff] 0.0
    %26 = vst [vmem:[#allocation2 + $0x8] sm:$0x3] 0.0
  $region25: #{_lambda_.29} parent=0 // pred_fallthru
    _
  %v27 = vld [vmem:[%s0] sm:$0xf]
  %v28 = vld [vmem:[%s0 + $0x4] sm:$0x1]
  %v29 = vunpack.c.l.bf16 %v27
  %v30 = vunpack.c.l.bf16 %v28
  %vm31 = vcmask 261120
  %v32 = vsel %vm31, %v29, 0.0
  %33 = vadd.xlane.f32.xlu0 %v32
  %v34 = vpop.xlane.xlu0 %33
  %vm35 = vcmask 254976
  %v36 = vsel %vm35, %v30, 0.0
  %37 = vadd.xlane.f32.xlu0 %v36
  %v38 = vpop.xlane.xlu0 %37
  %v39 = vrcp.pop 32.0
  %v40 = vmul.f32 32.0, %v39
  %v41 = vsub.f32 1.0, %v40
  %v42 = vmul.f32 %v39, %v41
  %v43 = vadd.f32 %v39, %v42
  %vm44 = vweird.f32 %v39
  %v45 = vsel %vm44, %v39, %v43
  %v46 = vmul.f32 %v34, %v45
  %v47 = vmul.f32 %v38, %v45
  %v48 = vsub.f32 %v29, %v46
  %v49 = vsub.f32 %v30, %v47
  %v50 = vmul.f32 %v48, %v48
  %v51 = vmul.f32 %v49, %v49
  %v52 = vsel %vm31, %v50, 0.0
  %53 = vadd.xlane.f32.xlu0 %v52
  %v54 = vpop.xlane.xlu0 %53
  %v55 = vsel %vm35, %v51, 0.0
  %56 = vadd.xlane.f32.xlu0 %v55
  %v57 = vpop.xlane.xlu0 %56
  %v58 = vmul.f32 %v54, %v45
  %v59 = vmul.f32 %v57, %v45
  %v60 = vadd.f32 %v58, 1e-05
  %v61 = vadd.f32 %v59, 1e-05
  %v62 = vrsqrt.pop %v60
  %v63 = vmul.f32 %v62, %v60
  %v64 = vmul.f32 %v63, %v62
  %v65 = vmul.f32 0.5, %v64
  %v66 = vsub.f32 1.5, %v65
  %v67 = vmul.f32 %v62, %v66
  %vm68 = vweird.f32 %v60
  %vm69 = vweird.f32 %v62
  %vm70 = vmor %vm68, %vm69
  %v71 = vsel %vm70, %v62, %v67
  %v72 = vrsqrt.pop %v61
  %v73 = vmul.f32 %v72, %v61
  %v74 = vmul.f32 %v73, %v72
  %v75 = vmul.f32 0.5, %v74
  %v76 = vsub.f32 1.5, %v75
  %v77 = vmul.f32 %v72, %v76
  %vm78 = vweird.f32 %v61
  %vm79 = vweird.f32 %v72
  %vm80 = vmor %vm78, %vm79
  %v81 = vsel %vm80, %v72, %v77
  %v82 = vmul.f32 %v48, %v71
  %v83 = vmul.f32 %v49, %v81
  %v84 = vld [vmem:[%s3] sm:$0x1]
  %v86 = vperm.slane %v84, 0
  %v88 = vmul.f32 %v82, %v86
  %v89 = vmul.f32 %v83, %v86
  %v90 = vld [vmem:[%s4] sm:$0x1]
  %v92 = vperm.slane %v90, 0
  %v94 = vadd.f32 %v88, %v92
  %v95 = vadd.f32 %v89, %v92
  %v96 = vpack.c.bf16 %v95, %v94
  %v97 = vld [vmem:[#allocation2] sm:$0xff]
  %v98 = vld [vmem:[#allocation2 + $0x8] sm:$0x3]
  %v99 = vld [vmem:[%s1] sm:$0xf]
  %v100 = vld [vmem:[%s1 + $0x4] sm:$0xf]
  %v101 = vld [vmem:[%s1 + $0x8] sm:$0xf]
  %v102 = vld [vmem:[%s1 + $0xc] sm:$0xf]
  %v107 = vunpack.c.l.b16 %v99
  %v108 = vunpack.c.l.b16 %v100
  %v109 = vunpack.c.l.b16 %v101
  %v110 = vunpack.c.l.b16 %v102
  %v111 = vpack.c.b16 %v108, %v107
  %v112 = vpack.c.b16 %v110, %v109
  %v116 = vsel %vm31, %v96, 0
  %118 = vmatpush.bf16.msra.mxu0 0
  %119 = vmatpush.bf16.msra.mxu0 0
  %120 = vmatpush.bf16.msra.mxu0 0
  %121 = vmatpush.bf16.msra.mxu0 0
  %122 = vmatpush.bf16.msra.mxu0 0
  %123 = vmatpush.bf16.msra.mxu0 0
  %124 = vmatpush.bf16.msra.mxu0 %v112
  %125 = vmatpush.bf16.msra.mxu0 %v111
  %126 = vmatmul.bf16.gmra.mxu0 %v116
  %v127 = vpop.f32.mrf.mxu0
  %v128 = vadd.f32 0.0, %v127
  %v129 = vpop.f32.mrf.mxu0
  %v130 = vadd.f32 0.0, %v129
  %131 = vdwg.mxu0
  %v132 = vadd.f32 %v97, %v128
  %v133 = vadd.f32 %v98, %v130
  %134 = vst [vmem:[#allocation2] sm:$0xff] %v132
  %135 = vst [vmem:[#allocation2 + $0x8] sm:$0x3] %v133
  // Predicated region
  $region26: #{_lambda_.29} parent=0 // pred_check
    %p136 = pneg %p21
  $region27: #{_lambda_.29} parent=0 // pred_check_branch
    %138 = sbr.rel (%p136) target = $region29
  $region28: #{_lambda_.29} parent=0 // pred_region
    %v139 = vld [vmem:[#allocation2] sm:$0xff]
    %v140 = vld [vmem:[#allocation2 + $0x8] sm:$0x3]
    %v141 = vld [vmem:[%s2] sm:$0x1]
    %v143 = vperm.slane %v141, 0
    %v145 = vadd.f32 %v139, %v143
    %v146 = vadd.f32 %v140, %v143
    %v147 = vmul.f32 %v145, 0.5
    %v148 = vmul.f32 %v146, 0.5
    %v149 = vmul.f32 %v145, 0.044715
    %v150 = vmul.f32 %v146, 0.044715
    %v151 = vmul.f32 %v149, %v145
    %v152 = vmul.f32 %v150, %v146
    %v153 = vmul.f32 %v151, %v145
    %v154 = vmul.f32 %v152, %v146
    %v155 = vadd.f32 %v145, %v153
    %v156 = vadd.f32 %v146, %v154
    %v157 = vmul.f32 %v155, 0.7978846
    %v158 = vmul.f32 %v156, 0.7978846
    %v159 = vtanh.pop %v157
    %v160 = vtanh.pop %v158
    %v161 = vadd.f32 %v159, 1.0
    %v162 = vadd.f32 %v160, 1.0
    %v163 = vmul.f32 %v147, %v161
    %v164 = vmul.f32 %v148, %v162
    %v165 = vpack.c.bf16 %v163, %v163
    %v166 = vpack.c.bf16 %v164, %v164
    %167 = vst [vmem:[%s5] sm:$0xf] %v165
    %168 = vst [vmem:[%s5 + $0x4] sm:$0x1] %v166
  $region29: #{_lambda_.29} parent=0 // pred_fallthru
    _
  // Predicated region
  $region30: #{_lambda_.29} parent=0 // pred_check
    _
  $region31: #{_lambda_.29} parent=0 // pred_check_branch
    %170 = sbr.rel (0) target = $region33
  $region32: #{_lambda_.29} parent=0 // pred_region
    _
  $region33: #{_lambda_.29} parent=0 // pred_fallthru
    _
  // Predicated region
  $region34: #{_lambda_.29} parent=0 // pred_check
    _
  $region35: #{_lambda_.29} parent=0 // pred_check_branch
    %172 = sbr.rel (0) target = $region37
  $region36: #{_lambda_.29} parent=0 // pred_region
    _
  $region37: #{_lambda_.29} parent=0 // pred_fallthru
    _

// kernel: _lambda_.39
$region0: #{_lambda_.39}
  #allocation0 [shape = 'u32[]', space=smem, size = 0x4, offset = 0x4, fixed_abs, tag = 'smem constant byte address 0x4 - core index']
  #allocation1 [shape = 'u32[72,128]{1,0:T(1,128)}', space=vmem, size = 0x9000, scoped, tag = 'internal scratch']
  #allocation2 [shape = 'f32[16,32]{1,0:T(8,128)}', space=vmem, size = 0x2000, scoped, tag = 'scratch operand']
  %s0 = inlined_call_operand.vmem [shape: bf16[16,32], index: 0, kind: input, shape index: {}]
  %s1 = inlined_call_operand.vmem [shape: bf16[32,32], index: 1, kind: input, shape index: {}]
  %s2 = inlined_call_operand.vmem [shape: f32[1,32], index: 2, kind: input, shape index: {}]
  %s3 = inlined_call_operand.vmem [shape: bf16[16,32], index: 3, kind: input, shape index: {}]
  %s4 = inlined_call_operand.vmem [shape: bf16[16,32], index: 4, kind: output, shape index: {}]
  %s5 = sld [smem:[#allocation0]]
  $region34: #{_lambda_.39} parent=0
    _
  %s7 = ssub.s32 1, %s5
  %s8 = scalar_select 0, %s7, %s5
  // Predicated region
  $region2: #{_lambda_.39} parent=0 // pred_check
    _
  $region3: #{_lambda_.39} parent=0 // pred_check_branch
    %10 = sbr.rel (0) target = $region5
  $region4: #{_lambda_.39} parent=0 // pred_region
    _
  $region5: #{_lambda_.39} parent=0 // pred_fallthru
    _
  // Predicated region
  $region6: #{_lambda_.39} parent=0 // pred_check
    _
  $region7: #{_lambda_.39} parent=0 // pred_check_branch
    %12 = sbr.rel (0) target = $region9
  $region8: #{_lambda_.39} parent=0 // pred_region
    _
  $region9: #{_lambda_.39} parent=0 // pred_fallthru
    _
  // Predicated region
  $region10: #{_lambda_.39} parent=0 // pred_check
    _
  $region11: #{_lambda_.39} parent=0 // pred_check_branch
    %14 = sbr.rel (0) target = $region13
  $region12: #{_lambda_.39} parent=0 // pred_region
    _
  $region13: #{_lambda_.39} parent=0 // pred_fallthru
    _
  // Predicated region
  $region14: #{_lambda_.39} parent=0 // pred_check
    _
  $region15: #{_lambda_.39} parent=0 // pred_check_branch
    %16 = sbr.rel (0) target = $region17
  $region16: #{_lambda_.39} parent=0 // pred_region
    _
  $region17: #{_lambda_.39} parent=0 // pred_fallthru
    _
  %p18 = scmp.eq.s32.totalorder 0, 0
  // Predicated region
  $region18: #{_lambda_.39} parent=0 // pred_check
    %p19 = pneg %p18
  $region19: #{_lambda_.39} parent=0 // pred_check_branch
    %21 = sbr.rel (%p19) target = $region21
  $region20: #{_lambda_.39} parent=0 // pred_region
    %vm22 = vcmask 261120
    %23 = vst.msk [vmem:[#allocation2] sm:$0xff] %vm22, 0.0
    %24 = vst.msk [vmem:[#allocation2 + $0x8] sm:$0xff] %vm22, 0.0
  $region21: #{_lambda_.39} parent=0 // pred_fallthru
    _
  %v25 = vld [vmem:[%s0] sm:$0xf]
  %v26 = vld [vmem:[%s0 + $0x4] sm:$0xf]
  %v27 = vld [vmem:[#allocation2] sm:$0xff]
  %v28 = vld [vmem:[#allocation2 + $0x8] sm:$0xff]
  %v29 = vld [vmem:[%s1] sm:$0xf]
  %v30 = vld [vmem:[%s1 + $0x4] sm:$0xf]
  %v31 = vld [vmem:[%s1 + $0x8] sm:$0xf]
  %v32 = vld [vmem:[%s1 + $0xc] sm:$0xf]
  %v35 = vunpack.c.l.b16 %v25
  %v36 = vunpack.c.l.b16 %v26
  %v37 = vpack.c.b16 %v36, %v35
  %v42 = vunpack.c.l.b16 %v29
  %v43 = vunpack.c.l.b16 %v30
  %v44 = vunpack.c.l.b16 %v31
  %v45 = vunpack.c.l.b16 %v32
  %v46 = vpack.c.b16 %v43, %v42
  %v47 = vpack.c.b16 %v45, %v44
  %vm50 = vcmask 261120
  %v52 = vsel %vm50, %v37, 0
  %54 = vmatpush.bf16.msra.mxu0 0
  %55 = vmatpush.bf16.msra.mxu0 0
  %56 = vmatpush.bf16.msra.mxu0 0
  %57 = vmatpush.bf16.msra.mxu0 0
  %58 = vmatpush.bf16.msra.mxu0 0
  %59 = vmatpush.bf16.msra.mxu0 0
  %60 = vmatpush.bf16.msra.mxu0 %v47
  %61 = vmatpush.bf16.msra.mxu0 %v46
  %62 = vmatmul.bf16.gmra.mxu0 %v52
  %v63 = vpop.f32.mrf.mxu0
  %v64 = vadd.f32 0.0, %v63
  %v65 = vpop.f32.mrf.mxu0
  %v66 = vadd.f32 0.0, %v65
  %67 = vdwg.mxu0
  %v68 = vadd.f32 %v27, %v64
  %v69 = vadd.f32 %v28, %v66
  %70 = vst.msk [vmem:[#allocation2] sm:$0xff] %vm50, %v68
  %71 = vst.msk [vmem:[#allocation2 + $0x8] sm:$0xff] %vm50, %v69
  // Predicated region
  $region22: #{_lambda_.39} parent=0 // pred_check
    %p72 = pneg %p18
  $region23: #{_lambda_.39} parent=0 // pred_check_branch
    %74 = sbr.rel (%p72) target = $region25
  $region24: #{_lambda_.39} parent=0 // pred_region
    %v75 = vld [vmem:[#allocation2] sm:$0xff]
    %v76 = vld [vmem:[#allocation2 + $0x8] sm:$0xff]
    %v77 = vld [vmem:[%s2] sm:$0x1]
    %v79 = vperm.slane %v77, 0
    %v81 = vadd.f32 %v75, %v79
    %v82 = vadd.f32 %v76, %v79
    %v83 = vld [vmem:[%s3] sm:$0xf]
    %v84 = vld [vmem:[%s3 + $0x4] sm:$0xf]
    %v85 = vunpack.c.l.bf16 %v83
    %v86 = vunpack.c.l.bf16 %v84
    %v87 = vadd.f32 %v81, %v85
    %v88 = vadd.f32 %v82, %v86
    %v89 = vpack.c.bf16 %v87, %v87
    %v90 = vpack.c.bf16 %v88, %v88
    %vm91 = vcmask 257024
    %92 = vst.msk [vmem:[%s4] sm:$0xf] %vm91, %v89
    %93 = vst.msk [vmem:[%s4 + $0x4] sm:$0xf] %vm91, %v90
  $region25: #{_lambda_.39} parent=0 // pred_fallthru
    _
  // Predicated region
  $region26: #{_lambda_.39} parent=0 // pred_check
    _
  $region27: #{_lambda_.39} parent=0 // pred_check_branch
    %95 = sbr.rel (0) target = $region29
  $region28: #{_lambda_.39} parent=0 // pred_region
    _
  $region29: #{_lambda_.39} parent=0 // pred_fallthru
    _
  // Predicated region
  $region30: #{_lambda_.39} parent=0 // pred_check
    _
  $region31: #{_lambda_.39} parent=0 // pred_check_branch
    %97 = sbr.rel (0) target = $region33
  $region32: #{_lambda_.39} parent=0 // pred_region
    _
  $region33: #{_lambda_.39} parent=0 // pred_fallthru
    _

// kernel: _lambda_.38
$region0: #{_lambda_.38}
  #allocation0 [shape = 'u32[]', space=smem, size = 0x4, offset = 0x4, fixed_abs, tag = 'smem constant byte address 0x4 - core index']
  #allocation1 [shape = 'u32[72,128]{1,0:T(1,128)}', space=vmem, size = 0x9000, scoped, tag = 'internal scratch']
  %s0 = inlined_call_operand.vmem [shape: bf16[2,8,96], index: 0, kind: input, shape index: {}]
  %s1 = inlined_call_operand.vmem [shape: bf16[2,8,32], index: 1, kind: output, shape index: {}]
  %s2 = sld [smem:[#allocation0]]
  $region37: #{_lambda_.38} parent=0
    _
  %s4 = ssub.s32 1, %s2
  %s5 = scalar_select 0, %s4, %s2
  loop: start=0, step=1, limit=4
  $region2: #{_lambda_.38} parent=0 // loop_pre_header
    _
  $region3: #{_lambda_.38} parent=0 // loop_header
    %s7 = sphi 0, %s11
    %p8 = scmp.ge.s32.totalorder %s7, 4
    %s17 = sphi 0, %s19
    %s20 = sphi 0, %s17
    %s21 = sphi 0, %s20
    %s37 = sphi 0, %s21
    %s43 = sphi 0, %s45
    %s46 = sphi 0, %s43
    %s47 = sphi 0, %s46
    %s63 = sphi 0, %s47
  $region4: #{_lambda_.38} parent=0 // loop_header_branch
    %10 = sbr.rel (%p8) target = $region8
  $region5: #{_lambda_.38} parent=0 // loop_body
    %s12 = ssub.s32 %s7, 1
    %s13 = ssub.s32 %s7, 2
    %s14 = sadd.s32 %s7, 1
    %s15 = ssub.s32 %s7, %s14
    %p16 = scmp.eq.s32.totalorder %s15, 0
    %s18 = sadd.s32 %s17, 1
    %s19 = scalar_select %p16, %s17, %s18
    %p22 = pneg %p16
    %p23 = scmp.eq.s32.totalorder %s7, 1
    %p24 = por %p22, %p23
    %p25 = scmp.ne.s32.totalorder %s17, %s20
    %p26 = scmp.eq.s32.totalorder %s7, 0
    %p27 = por %p25, %p26
    %p28 = scmp.ne.s32.totalorder %s17, %s20
    %p29 = scmp.eq.s32.totalorder %s12, 1
    %p30 = por %p28, %p29
    %p31 = scmp.ne.s32.totalorder %s20, %s21
    %p32 = scmp.eq.s32.totalorder %s12, 0
    %p33 = por %p31, %p32
    %p34 = scmp.ne.s32.totalorder %s20, %s21
    %p35 = scmp.eq.s32.totalorder %s13, 1
    %p36 = por %p34, %p35
    %p38 = scmp.ne.s32.totalorder %s21, %s37
    %p39 = scmp.eq.s32.totalorder %s13, 0
    %p40 = por %p38, %p39
    %s41 = ssub.s32 %s7, %s14
    %p42 = scmp.eq.s32.totalorder %s41, 0
    %s44 = sadd.s32 %s43, 1
    %s45 = scalar_select %p42, %s43, %s44
    %p48 = pneg %p42
    %p49 = scmp.eq.s32.totalorder %s7, 1
    %p50 = por %p48, %p49
    %p51 = scmp.ne.s32.totalorder %s43, %s46
    %p52 = scmp.eq.s32.totalorder %s7, 0
    %p53 = por %p51, %p52
    %p54 = scmp.ne.s32.totalorder %s43, %s46
    %p55 = scmp.eq.s32.totalorder %s12, 1
    %p56 = por %p54, %p55
    %p57 = scmp.ne.s32.totalorder %s46, %s47
    %p58 = scmp.eq.s32.totalorder %s12, 0
    %p59 = por %p57, %p58
    %p60 = scmp.ne.s32.totalorder %s46, %s47
    %p61 = scmp.eq.s32.totalorder %s13, 1
    %p62 = por %p60, %p61
    %p64 = scmp.ne.s32.totalorder %s47, %s63
    %p65 = scmp.eq.s32.totalorder %s13, 0
    %p66 = por %p64, %p65
    %p67 = scmp.le.s32.totalorder 1, %s7
    %p68 = scmp.lt.s32.totalorder %s7, 3
    %p69 = pnand %p67, %p68
    %p70 = pneg %p69
    // Predicated region
    $region9: #{_lambda_.38} parent=5 // pred_check
      _
    $region10: #{_lambda_.38} parent=5 // pred_check_branch
      %72 = sbr.rel (%p69) target = $region12
    $region11: #{_lambda_.38} parent=5 // pred_region
      %s73 = ssub.s32 %s7, 1
    $region12: #{_lambda_.38} parent=5 // pred_fallthru
      _
    %p74 = scmp.lt.s32.totalorder %s7, 2
    // Predicated region
    $region13: #{_lambda_.38} parent=5 // pred_check
      %p75 = pneg %p74
    $region14: #{_lambda_.38} parent=5 // pred_check_branch
      %77 = sbr.rel (%p75) target = $region16
    $region15: #{_lambda_.38} parent=5 // pred_region
      // Predicated region
      $region17: #{_lambda_.38} parent=15 // pred_check
        %p78 = pneg %p27
      $region18: #{_lambda_.38} parent=15 // pred_check_branch
        %80 = sbr.rel (%p78) target = $region20
      $region19: #{_lambda_.38} parent=15 // pred_region
        %p81 = scmp.lt.s32.totalorder %s7, 1
        %s82 = scalar_select %p81, %s7, 1
        %s83 = smul.addr %s82, 4
        %s84 = scalar_lea.vmem %s0, %s83
      $region20: #{_lambda_.38} parent=15 // pred_fallthru
        _
    $region16: #{_lambda_.38} parent=5 // pred_fallthru
      _
    %p85 = scmp.le.s32.totalorder 1, %s7
    %p86 = scmp.lt.s32.totalorder %s7, 3
    %p87 = pnand %p85, %p86
    %p88 = pneg %p87
    // Predicated region
    $region21: #{_lambda_.38} parent=5 // pred_check
      _
    $region22: #{_lambda_.38} parent=5 // pred_check_branch
      %90 = sbr.rel (%p87) target = $region24
    $region23: #{_lambda_.38} parent=5 // pred_region
      %s91 = ssub.s32 %s7, 1
      %p92 = scmp.lt.s32.totalorder %s12, 1
      %s93 = scalar_select %p92, %s12, 1
      %s94 = smul.addr %s93, 4
      %s95 = scalar_lea.vmem %s0, %s94
      %p96 = pneg %p33
      %p97 = pneg %p30
      %p98 = pneg %p59
      %p99 = pneg %p56
      %p100 = scmp.lt.s32.totalorder %s12, 1
      %s101 = scalar_select %p100, %s12, 1
      %s102 = smul.addr %s101, 4
      %s103 = scalar_lea.vmem %s1, %s102
      %p104 = scmp.lt.s32.totalorder %s12, 1
      %s105 = scalar_select %p104, %s12, 1
      %s106 = smul.addr %s105, 4
      %s107 = scalar_lea.vmem %s0, %s106
      %p108 = scmp.lt.s32.totalorder %s12, 1
      %s109 = scalar_select %p108, %s12, 1
      %s110 = smul.addr %s109, 4
      %s111 = scalar_lea.vmem %s1, %s110
      %v113 = vld [vmem:[%s107] sm:$0xf]
      %v114 = vlaneseq
      %v115 = vshrl.u32 %v114, 7
      %v116 = vlaneseq
      %v117 = vand.u32 %v116, 127
      %vm118 = vcmp.gt.s32.totalorder %v117, %v115
      %v119 = vsel %vm118, -inf, 0.0
      %v121 = vunpack.c.l.b16 %v113
      %v122 = vpack.c.b16 %v121, %v121
      %123 = vrot.lane.b32.xlu0 %v122, 96
      %v124 = vpop.permute.xlu0 %123
      %vm125 = vcmask 130048
      %v127 = vsel %vm125, %v113, 0
      %v130 = vsel %vm125, %v124, 0
      %132 = vmatpush.bf16.xpose.msra.mxu0 0
      %133 = vmatpush.bf16.xpose.msra.mxu0 0
      %134 = vmatpush.bf16.xpose.msra.mxu0 0
      %135 = vmatpush.bf16.xpose.msra.mxu0 0
      %136 = vmatpush.bf16.xpose.msra.mxu0 0
      %137 = vmatpush.bf16.xpose.msra.mxu0 0
      %138 = vmatpush.bf16.xpose.msra.mxu0 0
      %139 = vmatpush.bf16.xpose.msra.mxu0 %v130
      %140 = vmatmul.bf16.gmra.mxu0 %v127
      %v141 = vpop.f32.mrf.mxu0
      %v142 = vadd.f32 0.0, %v141
      %v143 = vpop.f32.mrf.mxu0
      %144 = vdwg.mxu0
      %v145 = vmul.f32 %v142, 0.25
      %v146 = vadd.f32 %v145, %v119
      %vm147 = vcmask 64512
      %v148 = vsel %vm147, %v146, -inf
      %149 = vmax.xlane.f32.xlu0 %v148
      %v150 = vpop.xlane.xlu0 %149
      %v151 = vsub.f32 %v146, %v150
      %v152 = vmul.f32 %v151, 1.442695
      %v153 = vpow.pop %v152
      %v154 = vsel %vm147, %v153, 0.0
      %155 = vadd.xlane.f32.xlu0 %v154
      %v156 = vpop.xlane.xlu0 %155
      %v157 = vrcp.pop %v156
      %v158 = vmul.f32 %v153, %v157
      %v159 = vpack.c.bf16 %v158, %v158
      %160 = vrot.lane.b32.xlu0 %v122, 64
      %v161 = vpop.permute.xlu0 %160
      %v163 = vsel %vm147, %v159, 0
      %vm165 = vcmask 1043456
      %v167 = vsel %vm165, %v161, 0
      %169 = vmatpush.bf16.msra.mxu0 0
      %170 = vmatpush.bf16.msra.mxu0 0
      %171 = vmatpush.bf16.msra.mxu0 0
      %172 = vmatpush.bf16.msra.mxu0 0
      %173 = vmatpush.bf16.msra.mxu0 0
      %174 = vmatpush.bf16.msra.mxu0 0
      %175 = vmatpush.bf16.msra.mxu0 0
      %176 = vmatpush.bf16.msra.mxu0 %v167
      %177 = vmatmul.bf16.gmra.mxu0 %v163
      %v178 = vpop.f32.mrf.mxu0
      %v179 = vadd.f32 0.0, %v178
      %v180 = vpop.f32.mrf.mxu0
      %181 = vdwg.mxu0
      %182 = vrot.lane.b32.xlu0 %v122, 112
      %v183 = vpop.permute.xlu0 %182
      %184 = vrot.lane.b32.xlu0 %v122, 80
      %v185 = vpop.permute.xlu0 %184
      %v187 = vsel %vm125, %v183, 0
      %v190 = vsel %vm125, %v185, 0
      %192 = vmatpush.bf16.xpose.msra.mxu0 0
      %193 = vmatpush.bf16.xpose.msra.mxu0 0
      %194 = vmatpush.bf16.xpose.msra.mxu0 0
      %195 = vmatpush.bf16.xpose.msra.mxu0 0
      %196 = vmatpush.bf16.xpose.msra.mxu0 0
      %197 = vmatpush.bf16.xpose.msra.mxu0 0
      %198 = vmatpush.bf16.xpose.msra.mxu0 0
      %199 = vmatpush.bf16.xpose.msra.mxu0 %v190
      %200 = vmatmul.bf16.gmra.mxu0 %v187
      %v201 = vpop.f32.mrf.mxu0
      %v202 = vadd.f32 0.0, %v201
      %v203 = vpop.f32.mrf.mxu0
      %204 = vdwg.mxu0
      %v205 = vmul.f32 %v202, 0.25
      %v206 = vadd.f32 %v205, %v119
      %v207 = vsel %vm147, %v206, -inf
      %208 = vmax.xlane.f32.xlu0 %v207
      %v209 = vpop.xlane.xlu0 %208
      %v210 = vsub.f32 %v206, %v209
      %v211 = vmul.f32 %v210, 1.442695
      %v212 = vpow.pop %v211
      %v213 = vsel %vm147, %v212, 0.0
      %214 = vadd.xlane.f32.xlu0 %v213
      %v215 = vpop.xlane.xlu0 %214
      %v216 = vrcp.pop %v215
      %v217 = vmul.f32 %v212, %v216
      %v218 = vpack.c.bf16 %v217, %v217
      %219 = vrot.lane.b32.xlu0 %v122, 48
      %v220 = vpop.permute.xlu0 %219
      %v222 = vsel %vm147, %v218, 0
      %v225 = vsel %vm165, %v220, 0
      %227 = vmatpush.bf16.msra.mxu0 0
      %228 = vmatpush.bf16.msra.mxu0 0
      %229 = vmatpush.bf16.msra.mxu0 0
      %230 = vmatpush.bf16.msra.mxu0 0
      %231 = vmatpush.bf16.msra.mxu0 0
      %232 = vmatpush.bf16.msra.mxu0 0
      %233 = vmatpush.bf16.msra.mxu0 0
      %234 = vmatpush.bf16.msra.mxu0 %v225
      %235 = vmatmul.bf16.gmra.mxu0 %v222
      %v236 = vpop.f32.mrf.mxu0
      %v237 = vadd.f32 0.0, %v236
      %v238 = vpop.f32.mrf.mxu0
      %239 = vdwg.mxu0
      %241 = vrot.lane.b32.xlu0 %v237, 16
      %v242 = vpop.permute.xlu0 %241
      %v244 = vsel %vm125, %v179, %v242
      %v245 = vpack.c.bf16 %v244, %v244
      %vm246 = vcmask 257024
      %247 = vst.msk [vmem:[%s111] sm:$0xf] %vm246, %v245
      %p248 = scmp.lt.s32.totalorder %s12, 1
      %s249 = scalar_select %p248, %s12, 1
      %s250 = smul.addr %s249, 4
      %s251 = scalar_lea.vmem %s1, %s250
      // Predicated region
      $region25: #{_lambda_.38} parent=23 // pred_check
        %p252 = pneg %p56
      $region26: #{_lambda_.38} parent=23 // pred_check_branch
        %254 = sbr.rel (%p252) target = $region28
      $region27: #{_lambda_.38} parent=23 // pred_region
        _
      $region28: #{_lambda_.38} parent=23 // pred_fallthru
        _
    $region24: #{_lambda_.38} parent=5 // pred_fallthru
      _
    %p255 = scmp.le.s32.totalorder 2, %s7
    // Predicated region
    $region29: #{_lambda_.38} parent=5 // pred_check
      %p256 = pneg %p255
    $region30: #{_lambda_.38} parent=5 // pred_check_branch
      %258 = sbr.rel (%p256) target = $region32
    $region31: #{_lambda_.38} parent=5 // pred_region
      %s259 = ssub.s32 %s7, 2
      // Predicated region
      $region33: #{_lambda_.38} parent=31 // pred_check
        %p260 = pneg %p62
      $region34: #{_lambda_.38} parent=31 // pred_check_branch
        %262 = sbr.rel (%p260) target = $region36
      $region35: #{_lambda_.38} parent=31 // pred_region
        %p263 = scmp.lt.s32.totalorder %s13, 1
        %s264 = scalar_select %p263, %s13, 1
        %s265 = smul.addr %s264, 4
        %s266 = scalar_lea.vmem %s1, %s265
      $region36: #{_lambda_.38} parent=31 // pred_fallthru
        _
    $region32: #{_lambda_.38} parent=5 // pred_fallthru
      _
  $region6: #{_lambda_.38} parent=0 // loop_footer
    %s11 = sadd.s32 1, %s7
  $region7: #{_lambda_.38} parent=0 // loop_footer_branch
    %6 = sbr.rel target = $region3
  $region8: #{_lambda_.38} parent=0 // loop_exit
    _

// kernel: _lambda_.37
$region0: #{_lambda_.37}
  #allocation0 [shape = 'u32[]', space=smem, size = 0x4, offset = 0x4, fixed_abs, tag = 'smem constant byte address 0x4 - core index']
  #allocation1 [shape = 'u32[72,128]{1,0:T(1,128)}', space=vmem, size = 0x9000, scoped, tag = 'internal scratch']
  #allocation2 [shape = 'f32[16,96]{1,0:T(8,128)}', space=vmem, size = 0x2000, scoped, tag = 'scratch operand']
  %s0 = inlined_call_operand.vmem [shape: bf16[16,32], index: 0, kind: input, shape index: {}]
  %s1 = inlined_call_operand.vmem [shape: bf16[32,96], index: 1, kind: input, shape index: {}]
  %s2 = inlined_call_operand.vmem [shape: f32[1,96], index: 2, kind: input, shape index: {}]
  %s3 = inlined_call_operand.vmem [shape: f32[1,32], index: 3, kind: input, shape index: {}]
  %s4 = inlined_call_operand.vmem [shape: f32[1,32], index: 4, kind: input, shape index: {}]
  %s5 = inlined_call_operand.vmem [shape: bf16[16,96], index: 5, kind: output, shape index: {}]
  %s6 = sld [smem:[#allocation0]]
  $region38: #{_lambda_.37} parent=0
    _
  %s8 = ssub.s32 1, %s6
  %s9 = scalar_select 0, %s8, %s6
  // Predicated region
  $region2: #{_lambda_.37} parent=0 // pred_check
    _
  $region3: #{_lambda_.37} parent=0 // pred_check_branch
    %11 = sbr.rel (0) target = $region5
  $region4: #{_lambda_.37} parent=0 // pred_region
    _
  $region5: #{_lambda_.37} parent=0 // pred_fallthru
    _
  // Predicated region
  $region6: #{_lambda_.37} parent=0 // pred_check
    _
  $region7: #{_lambda_.37} parent=0 // pred_check_branch
    %13 = sbr.rel (0) target = $region9
  $region8: #{_lambda_.37} parent=0 // pred_region
    _
  $region9: #{_lambda_.37} parent=0 // pred_fallthru
    _
  // Predicated region
  $region10: #{_lambda_.37} parent=0 // pred_check
    _
  $region11: #{_lambda_.37} parent=0 // pred_check_branch
    %15 = sbr.rel (0) target = $region13
  $region12: #{_lambda_.37} parent=0 // pred_region
    _
  $region13: #{_lambda_.37} parent=0 // pred_fallthru
    _
  // Predicated region
  $region14: #{_lambda_.37} parent=0 // pred_check
    _
  $region15: #{_lambda_.37} parent=0 // pred_check_branch
    %17 = sbr.rel (0) target = $region17
  $region16: #{_lambda_.37} parent=0 // pred_region
    _
  $region17: #{_lambda_.37} parent=0 // pred_fallthru
    _
  // Predicated region
  $region18: #{_lambda_.37} parent=0 // pred_check
    _
  $region19: #{_lambda_.37} parent=0 // pred_check_branch
    %19 = sbr.rel (0) target = $region21
  $region20: #{_lambda_.37} parent=0 // pred_region
    _
  $region21: #{_lambda_.37} parent=0 // pred_fallthru
    _
  %p21 = scmp.eq.s32.totalorder 0, 0
  // Predicated region
  $region22: #{_lambda_.37} parent=0 // pred_check
    %p22 = pneg %p21
  $region23: #{_lambda_.37} parent=0 // pred_check_branch
    %24 = sbr.rel (%p22) target = $region25
  $region24: #{_lambda_.37} parent=0 // pred_region
    %vm25 = vcmask 785408
    %26 = vst.msk [vmem:[#allocation2] sm:$0xff] %vm25, 0.0
    %27 = vst.msk [vmem:[#allocation2 + $0x8] sm:$0xff] %vm25, 0.0
  $region25: #{_lambda_.37} parent=0 // pred_fallthru
    _
  %v28 = vld [vmem:[%s0] sm:$0xf]
  %v29 = vld [vmem:[%s0 + $0x4] sm:$0xf]
  %v30 = vunpack.c.l.bf16 %v28
  %v31 = vunpack.c.l.bf16 %v29
  %vm32 = vcmask 261120
  %v33 = vsel %vm32, %v30, 0.0
  %34 = vadd.xlane.f32.xlu0 %v33
  %v35 = vpop.xlane.xlu0 %34
  %v36 = vsel %vm32, %v31, 0.0
  %37 = vadd.xlane.f32.xlu0 %v36
  %v38 = vpop.xlane.xlu0 %37
  %v39 = vrcp.pop 32.0
  %v40 = vmul.f32 32.0, %v39
  %v41 = vsub.f32 1.0, %v40
  %v42 = vmul.f32 %v39, %v41
  %v43 = vadd.f32 %v39, %v42
  %vm44 = vweird.f32 %v39
  %v45 = vsel %vm44, %v39, %v43
  %v46 = vmul.f32 %v35, %v45
  %v47 = vmul.f32 %v38, %v45
  %v48 = vsub.f32 %v30, %v46
  %v49 = vsub.f32 %v31, %v47
  %v50 = vmul.f32 %v48, %v48
  %v51 = vmul.f32 %v49, %v49
  %v52 = vsel %vm32, %v50, 0.0
  %53 = vadd.xlane.f32.xlu0 %v52
  %v54 = vpop.xlane.xlu0 %53
  %v55 = vsel %vm32, %v51, 0.0
  %56 = vadd.xlane.f32.xlu0 %v55
  %v57 = vpop.xlane.xlu0 %56
  %v58 = vmul.f32 %v54, %v45
  %v59 = vmul.f32 %v57, %v45
  %v60 = vadd.f32 %v58, 1e-05
  %v61 = vadd.f32 %v59, 1e-05
  %v62 = vrsqrt.pop %v60
  %v63 = vmul.f32 %v62, %v60
  %v64 = vmul.f32 %v63, %v62
  %v65 = vmul.f32 0.5, %v64
  %v66 = vsub.f32 1.5, %v65
  %v67 = vmul.f32 %v62, %v66
  %vm68 = vweird.f32 %v60
  %vm69 = vweird.f32 %v62
  %vm70 = vmor %vm68, %vm69
  %v71 = vsel %vm70, %v62, %v67
  %v72 = vrsqrt.pop %v61
  %v73 = vmul.f32 %v72, %v61
  %v74 = vmul.f32 %v73, %v72
  %v75 = vmul.f32 0.5, %v74
  %v76 = vsub.f32 1.5, %v75
  %v77 = vmul.f32 %v72, %v76
  %vm78 = vweird.f32 %v61
  %vm79 = vweird.f32 %v72
  %vm80 = vmor %vm78, %vm79
  %v81 = vsel %vm80, %v72, %v77
  %v82 = vmul.f32 %v48, %v71
  %v83 = vmul.f32 %v49, %v81
  %v84 = vld [vmem:[%s3] sm:$0x1]
  %v86 = vperm.slane %v84, 0
  %v88 = vmul.f32 %v82, %v86
  %v89 = vmul.f32 %v83, %v86
  %v90 = vld [vmem:[%s4] sm:$0x1]
  %v92 = vperm.slane %v90, 0
  %v94 = vadd.f32 %v88, %v92
  %v95 = vadd.f32 %v89, %v92
  %v96 = vpack.c.bf16 %v95, %v94
  %v97 = vld [vmem:[#allocation2] sm:$0xff]
  %v98 = vld [vmem:[#allocation2 + $0x8] sm:$0xff]
  %v99 = vld [vmem:[%s1] sm:$0xf]
  %v100 = vld [vmem:[%s1 + $0x4] sm:$0xf]
  %v101 = vld [vmem:[%s1 + $0x8] sm:$0xf]
  %v102 = vld [vmem:[%s1 + $0xc] sm:$0xf]
  %v107 = vunpack.c.l.b16 %v99
  %v108 = vunpack.c.l.b16 %v100
  %v109 = vunpack.c.l.b16 %v101
  %v110 = vunpack.c.l.b16 %v102
  %v111 = vpack.c.b16 %v108, %v107
  %v112 = vpack.c.b16 %v110, %v109
  %v116 = vsel %vm32, %v96, 0
  %118 = vmatpush.bf16.msra.mxu0 0
  %119 = vmatpush.bf16.msra.mxu0 0
  %120 = vmatpush.bf16.msra.mxu0 0
  %121 = vmatpush.bf16.msra.mxu0 0
  %122 = vmatpush.bf16.msra.mxu0 0
  %123 = vmatpush.bf16.msra.mxu0 0
  %124 = vmatpush.bf16.msra.mxu0 %v112
  %125 = vmatpush.bf16.msra.mxu0 %v111
  %126 = vmatmul.bf16.gmra.mxu0 %v116
  %v127 = vpop.f32.mrf.mxu0
  %v128 = vadd.f32 0.0, %v127
  %v129 = vpop.f32.mrf.mxu0
  %v130 = vadd.f32 0.0, %v129
  %131 = vdwg.mxu0
  %v132 = vadd.f32 %v97, %v128
  %v133 = vadd.f32 %v98, %v130
  %vm134 = vcmask 785408
  %135 = vst.msk [vmem:[#allocation2] sm:$0xff] %vm134, %v132
  %136 = vst.msk [vmem:[#allocation2 + $0x8] sm:$0xff] %vm134, %v133
  // Predicated region
  $region26: #{_lambda_.37} parent=0 // pred_check
    %p137 = pneg %p21
  $region27: #{_lambda_.37} parent=0 // pred_check_branch
    %139 = sbr.rel (%p137) target = $region29
  $region28: #{_lambda_.37} parent=0 // pred_region
    %v140 = vld [vmem:[#allocation2] sm:$0xff]
    %v141 = vld [vmem:[#allocation2 + $0x8] sm:$0xff]
    %v142 = vld [vmem:[%s2] sm:$0x1]
    %v144 = vperm.slane %v142, 0
    %v146 = vadd.f32 %v140, %v144
    %v147 = vadd.f32 %v141, %v144
    %v148 = vpack.c.bf16 %v146, %v146
    %v149 = vpack.c.bf16 %v147, %v147
    %vm150 = vcmask 781312
    %151 = vst.msk [vmem:[%s5] sm:$0xf] %vm150, %v148
    %152 = vst.msk [vmem:[%s5 + $0x4] sm:$0xf] %vm150, %v149
  $region29: #{_lambda_.37} parent=0 // pred_fallthru
    _
  // Predicated region
  $region30: #{_lambda_.37} parent=0 // pred_check
    _
  $region31: #{_lambda_.37} parent=0 // pred_check_branch
    %154 = sbr.rel (0) target = $region33
  $region32: #{_lambda_.37} parent=0 // pred_region
    _
  $region33: #{_lambda_.37} parent=0 // pred_fallthru
    _
  // Predicated region
  $region34: #{_lambda_.37} parent=0 // pred_check
    _
  $region35: #{_lambda_.37} parent=0 // pred_check_branch
    %156 = sbr.rel (0) target = $region37
  $region36: #{_lambda_.37} parent=0 // pred_region
    _
  $region37: #{_lambda_.37} parent=0 // pred_fallthru
    _

// kernel: _lambda_.40
$region0: #{_lambda_.40}
  #allocation0 [shape = 'u32[]', space=smem, size = 0x4, offset = 0x4, fixed_abs, tag = 'smem constant byte address 0x4 - core index']
  #allocation1 [shape = 'u32[72,128]{1,0:T(1,128)}', space=vmem, size = 0x9000, scoped, tag = 'internal scratch']
  #allocation2 [shape = 'f32[16,128]{1,0:T(8,128)}', space=vmem, size = 0x2000, scoped, tag = 'scratch operand']
  %s0 = inlined_call_operand.vmem [shape: bf16[16,32], index: 0, kind: input, shape index: {}]
  %s1 = inlined_call_operand.vmem [shape: bf16[32,128], index: 1, kind: input, shape index: {}]
  %s2 = inlined_call_operand.vmem [shape: f32[1,128], index: 2, kind: input, shape index: {}]
  %s3 = inlined_call_operand.vmem [shape: f32[1,32], index: 3, kind: input, shape index: {}]
  %s4 = inlined_call_operand.vmem [shape: f32[1,32], index: 4, kind: input, shape index: {}]
  %s5 = inlined_call_operand.vmem [shape: bf16[16,128], index: 5, kind: output, shape index: {}]
  %s6 = sld [smem:[#allocation0]]
  $region38: #{_lambda_.40} parent=0
    _
  %s8 = ssub.s32 1, %s6
  %s9 = scalar_select 0, %s8, %s6
  // Predicated region
  $region2: #{_lambda_.40} parent=0 // pred_check
    _
  $region3: #{_lambda_.40} parent=0 // pred_check_branch
    %11 = sbr.rel (0) target = $region5
  $region4: #{_lambda_.40} parent=0 // pred_region
    _
  $region5: #{_lambda_.40} parent=0 // pred_fallthru
    _
  // Predicated region
  $region6: #{_lambda_.40} parent=0 // pred_check
    _
  $region7: #{_lambda_.40} parent=0 // pred_check_branch
    %13 = sbr.rel (0) target = $region9
  $region8: #{_lambda_.40} parent=0 // pred_region
    _
  $region9: #{_lambda_.40} parent=0 // pred_fallthru
    _
  // Predicated region
  $region10: #{_lambda_.40} parent=0 // pred_check
    _
  $region11: #{_lambda_.40} parent=0 // pred_check_branch
    %15 = sbr.rel (0) target = $region13
  $region12: #{_lambda_.40} parent=0 // pred_region
    _
  $region13: #{_lambda_.40} parent=0 // pred_fallthru
    _
  // Predicated region
  $region14: #{_lambda_.40} parent=0 // pred_check
    _
  $region15: #{_lambda_.40} parent=0 // pred_check_branch
    %17 = sbr.rel (0) target = $region17
  $region16: #{_lambda_.40} parent=0 // pred_region
    _
  $region17: #{_lambda_.40} parent=0 // pred_fallthru
    _
  // Predicated region
  $region18: #{_lambda_.40} parent=0 // pred_check
    _
  $region19: #{_lambda_.40} parent=0 // pred_check_branch
    %19 = sbr.rel (0) target = $region21
  $region20: #{_lambda_.40} parent=0 // pred_region
    _
  $region21: #{_lambda_.40} parent=0 // pred_fallthru
    _
  %p21 = scmp.eq.s32.totalorder 0, 0
  // Predicated region
  $region22: #{_lambda_.40} parent=0 // pred_check
    %p22 = pneg %p21
  $region23: #{_lambda_.40} parent=0 // pred_check_branch
    %24 = sbr.rel (%p22) target = $region25
  $region24: #{_lambda_.40} parent=0 // pred_region
    %25 = vst [vmem:[#allocation2] sm:$0xff] 0.0
    %26 = vst [vmem:[#allocation2 + $0x8] sm:$0xff] 0.0
  $region25: #{_lambda_.40} parent=0 // pred_fallthru
    _
  %v27 = vld [vmem:[%s0] sm:$0xf]
  %v28 = vld [vmem:[%s0 + $0x4] sm:$0xf]
  %v29 = vunpack.c.l.bf16 %v27
  %v30 = vunpack.c.l.bf16 %v28
  %vm31 = vcmask 261120
  %v32 = vsel %vm31, %v29, 0.0
  %33 = vadd.xlane.f32.xlu0 %v32
  %v34 = vpop.xlane.xlu0 %33
  %v35 = vsel %vm31, %v30, 0.0
  %36 = vadd.xlane.f32.xlu0 %v35
  %v37 = vpop.xlane.xlu0 %36
  %v38 = vrcp.pop 32.0
  %v39 = vmul.f32 32.0, %v38
  %v40 = vsub.f32 1.0, %v39
  %v41 = vmul.f32 %v38, %v40
  %v42 = vadd.f32 %v38, %v41
  %vm43 = vweird.f32 %v38
  %v44 = vsel %vm43, %v38, %v42
  %v45 = vmul.f32 %v34, %v44
  %v46 = vmul.f32 %v37, %v44
  %v47 = vsub.f32 %v29, %v45
  %v48 = vsub.f32 %v30, %v46
  %v49 = vmul.f32 %v47, %v47
  %v50 = vmul.f32 %v48, %v48
  %v51 = vsel %vm31, %v49, 0.0
  %52 = vadd.xlane.f32.xlu0 %v51
  %v53 = vpop.xlane.xlu0 %52
  %v54 = vsel %vm31, %v50, 0.0
  %55 = vadd.xlane.f32.xlu0 %v54
  %v56 = vpop.xlane.xlu0 %55
  %v57 = vmul.f32 %v53, %v44
  %v58 = vmul.f32 %v56, %v44
  %v59 = vadd.f32 %v57, 1e-05
  %v60 = vadd.f32 %v58, 1e-05
  %v61 = vrsqrt.pop %v59
  %v62 = vmul.f32 %v61, %v59
  %v63 = vmul.f32 %v62, %v61
  %v64 = vmul.f32 0.5, %v63
  %v65 = vsub.f32 1.5, %v64
  %v66 = vmul.f32 %v61, %v65
  %vm67 = vweird.f32 %v59
  %vm68 = vweird.f32 %v61
  %vm69 = vmor %vm67, %vm68
  %v70 = vsel %vm69, %v61, %v66
  %v71 = vrsqrt.pop %v60
  %v72 = vmul.f32 %v71, %v60
  %v73 = vmul.f32 %v72, %v71
  %v74 = vmul.f32 0.5, %v73
  %v75 = vsub.f32 1.5, %v74
  %v76 = vmul.f32 %v71, %v75
  %vm77 = vweird.f32 %v60
  %vm78 = vweird.f32 %v71
  %vm79 = vmor %vm77, %vm78
  %v80 = vsel %vm79, %v71, %v76
  %v81 = vmul.f32 %v47, %v70
  %v82 = vmul.f32 %v48, %v80
  %v83 = vld [vmem:[%s3] sm:$0x1]
  %v85 = vperm.slane %v83, 0
  %v87 = vmul.f32 %v81, %v85
  %v88 = vmul.f32 %v82, %v85
  %v89 = vld [vmem:[%s4] sm:$0x1]
  %v91 = vperm.slane %v89, 0
  %v93 = vadd.f32 %v87, %v91
  %v94 = vadd.f32 %v88, %v91
  %v95 = vpack.c.bf16 %v94, %v93
  %v96 = vld [vmem:[#allocation2] sm:$0xff]
  %v97 = vld [vmem:[#allocation2 + $0x8] sm:$0xff]
  %v98 = vld [vmem:[%s1] sm:$0xf]
  %v99 = vld [vmem:[%s1 + $0x4] sm:$0xf]
  %v100 = vld [vmem:[%s1 + $0x8] sm:$0xf]
  %v101 = vld [vmem:[%s1 + $0xc] sm:$0xf]
  %v106 = vunpack.c.l.b16 %v98
  %v107 = vunpack.c.l.b16 %v99
  %v108 = vunpack.c.l.b16 %v100
  %v109 = vunpack.c.l.b16 %v101
  %v110 = vpack.c.b16 %v107, %v106
  %v111 = vpack.c.b16 %v109, %v108
  %v115 = vsel %vm31, %v95, 0
  %117 = vmatpush.bf16.msra.mxu0 0
  %118 = vmatpush.bf16.msra.mxu0 0
  %119 = vmatpush.bf16.msra.mxu0 0
  %120 = vmatpush.bf16.msra.mxu0 0
  %121 = vmatpush.bf16.msra.mxu0 0
  %122 = vmatpush.bf16.msra.mxu0 0
  %123 = vmatpush.bf16.msra.mxu0 %v111
  %124 = vmatpush.bf16.msra.mxu0 %v110
  %125 = vmatmul.bf16.gmra.mxu0 %v115
  %v126 = vpop.f32.mrf.mxu0
  %v127 = vadd.f32 0.0, %v126
  %v128 = vpop.f32.mrf.mxu0
  %v129 = vadd.f32 0.0, %v128
  %130 = vdwg.mxu0
  %v131 = vadd.f32 %v96, %v127
  %v132 = vadd.f32 %v97, %v129
  %133 = vst [vmem:[#allocation2] sm:$0xff] %v131
  %134 = vst [vmem:[#allocation2 + $0x8] sm:$0xff] %v132
  // Predicated region
  $region26: #{_lambda_.40} parent=0 // pred_check
    %p135 = pneg %p21
  $region27: #{_lambda_.40} parent=0 // pred_check_branch
    %137 = sbr.rel (%p135) target = $region29
  $region28: #{_lambda_.40} parent=0 // pred_region
    %v138 = vld [vmem:[#allocation2] sm:$0xff]
    %v139 = vld [vmem:[#allocation2 + $0x8] sm:$0xff]
    %v140 = vld [vmem:[%s2] sm:$0x1]
    %v142 = vperm.slane %v140, 0
    %v144 = vadd.f32 %v138, %v142
    %v145 = vadd.f32 %v139, %v142
    %v146 = vmul.f32 %v144, 0.5
    %v147 = vmul.f32 %v145, 0.5
    %v148 = vmul.f32 %v144, 0.044715
    %v149 = vmul.f32 %v145, 0.044715
    %v150 = vmul.f32 %v148, %v144
    %v151 = vmul.f32 %v149, %v145
    %v152 = vmul.f32 %v150, %v144
    %v153 = vmul.f32 %v151, %v145
    %v154 = vadd.f32 %v144, %v152
    %v155 = vadd.f32 %v145, %v153
    %v156 = vmul.f32 %v154, 0.7978846
    %v157 = vmul.f32 %v155, 0.7978846
    %v158 = vtanh.pop %v156
    %v159 = vtanh.pop %v157
    %v160 = vadd.f32 %v158, 1.0
    %v161 = vadd.f32 %v159, 1.0
    %v162 = vmul.f32 %v146, %v160
    %v163 = vmul.f32 %v147, %v161
    %v164 = vpack.c.bf16 %v162, %v162
    %v165 = vpack.c.bf16 %v163, %v163
    %166 = vst [vmem:[%s5] sm:$0xf] %v164
    %167 = vst [vmem:[%s5 + $0x4] sm:$0xf] %v165
  $region29: #{_lambda_.40} parent=0 // pred_fallthru
    _
  // Predicated region
  $region30: #{_lambda_.40} parent=0 // pred_check
    _
  $region31: #{_lambda_.40} parent=0 // pred_check_branch
    %169 = sbr.rel (0) target = $region33
  $region32: #{_lambda_.40} parent=0 // pred_region
    _
  $region33: #{_lambda_.40} parent=0 // pred_fallthru
    _
  // Predicated region
  $region34: #{_lambda_.40} parent=0 // pred_check
    _
  $region35: #{_lambda_.40} parent=0 // pred_check_branch
    %171 = sbr.rel (0) target = $region37
  $region36: #{_lambda_.40} parent=0 // pred_region
    _
  $region37: #{_lambda_.40} parent=0 // pred_fallthru
    _

// kernel: _lambda_.41
$region0: #{_lambda_.41}
  #allocation0 [shape = 'u32[]', space=smem, size = 0x4, offset = 0x4, fixed_abs, tag = 'smem constant byte address 0x4 - core index']
  #allocation1 [shape = 'u32[72,128]{1,0:T(1,128)}', space=vmem, size = 0x9000, scoped, tag = 'internal scratch']
  #allocation2 [shape = 'f32[16,32]{1,0:T(8,128)}', space=vmem, size = 0x2000, scoped, tag = 'scratch operand']
  %s0 = inlined_call_operand.vmem [shape: bf16[16,128], index: 0, kind: input, shape index: {}]
  %s1 = inlined_call_operand.vmem [shape: bf16[128,32], index: 1, kind: input, shape index: {}]
  %s2 = inlined_call_operand.vmem [shape: f32[1,32], index: 2, kind: input, shape index: {}]
  %s3 = inlined_call_operand.vmem [shape: bf16[16,32], index: 3, kind: input, shape index: {}]
  %s4 = inlined_call_operand.vmem [shape: bf16[16,32], index: 4, kind: output, shape index: {}]
  %s5 = sld [smem:[#allocation0]]
  $region34: #{_lambda_.41} parent=0
    _
  %s7 = ssub.s32 1, %s5
  %s8 = scalar_select 0, %s7, %s5
  // Predicated region
  $region2: #{_lambda_.41} parent=0 // pred_check
    _
  $region3: #{_lambda_.41} parent=0 // pred_check_branch
    %10 = sbr.rel (0) target = $region5
  $region4: #{_lambda_.41} parent=0 // pred_region
    _
  $region5: #{_lambda_.41} parent=0 // pred_fallthru
    _
  // Predicated region
  $region6: #{_lambda_.41} parent=0 // pred_check
    _
  $region7: #{_lambda_.41} parent=0 // pred_check_branch
    %12 = sbr.rel (0) target = $region9
  $region8: #{_lambda_.41} parent=0 // pred_region
    _
  $region9: #{_lambda_.41} parent=0 // pred_fallthru
    _
  // Predicated region
  $region10: #{_lambda_.41} parent=0 // pred_check
    _
  $region11: #{_lambda_.41} parent=0 // pred_check_branch
    %14 = sbr.rel (0) target = $region13
  $region12: #{_lambda_.41} parent=0 // pred_region
    _
  $region13: #{_lambda_.41} parent=0 // pred_fallthru
    _
  // Predicated region
  $region14: #{_lambda_.41} parent=0 // pred_check
    _
  $region15: #{_lambda_.41} parent=0 // pred_check_branch
    %16 = sbr.rel (0) target = $region17
  $region16: #{_lambda_.41} parent=0 // pred_region
    _
  $region17: #{_lambda_.41} parent=0 // pred_fallthru
    _
  %p17 = scmp.eq.s32.totalorder 0, 0
  // Predicated region
  $region18: #{_lambda_.41} parent=0 // pred_check
    %p18 = pneg %p17
  $region19: #{_lambda_.41} parent=0 // pred_check_branch
    %20 = sbr.rel (%p18) target = $region21
  $region20: #{_lambda_.41} parent=0 // pred_region
    %vm21 = vcmask 261120
    %22 = vst.msk [vmem:[#allocation2] sm:$0xff] %vm21, 0.0
    %23 = vst.msk [vmem:[#allocation2 + $0x8] sm:$0xff] %vm21, 0.0
  $region21: #{_lambda_.41} parent=0 // pred_fallthru
    _
  %v24 = vld [vmem:[%s0] sm:$0xf]
  %v25 = vld [vmem:[%s0 + $0x4] sm:$0xf]
  %v26 = vld [vmem:[#allocation2] sm:$0xff]
  %v27 = vld [vmem:[#allocation2 + $0x8] sm:$0xff]
  %v28 = vld [vmem:[%s1] sm:$0xf]
  %v29 = vld [vmem:[%s1 + $0x4] sm:$0xf]
  %v30 = vld [vmem:[%s1 + $0x8] sm:$0xf]
  %v31 = vld [vmem:[%s1 + $0xc] sm:$0xf]
  %v32 = vld [vmem:[%s1 + $0x10] sm:$0xf]
  %v33 = vld [vmem:[%s1 + $0x14] sm:$0xf]
  %v34 = vld [vmem:[%s1 + $0x18] sm:$0xf]
  %v35 = vld [vmem:[%s1 + $0x1c] sm:$0xf]
  %v36 = vld [vmem:[%s1 + $0x20] sm:$0xf]
  %v37 = vld [vmem:[%s1 + $0x24] sm:$0xf]
  %v38 = vld [vmem:[%s1 + $0x28] sm:$0xf]
  %v39 = vld [vmem:[%s1 + $0x2c] sm:$0xf]
  %v40 = vld [vmem:[%s1 + $0x30] sm:$0xf]
  %v41 = vld [vmem:[%s1 + $0x34] sm:$0xf]
  %v42 = vld [vmem:[%s1 + $0x38] sm:$0xf]
  %v43 = vld [vmem:[%s1 + $0x3c] sm:$0xf]
  %v46 = vunpack.c.l.b16 %v24
  %v47 = vunpack.c.l.b16 %v25
  %v48 = vpack.c.b16 %v47, %v46
  %v66 = vunpack.c.l.b16 %v28
  %v67 = vunpack.c.l.b16 %v29
  %v68 = vunpack.c.l.b16 %v30
  %v69 = vunpack.c.l.b16 %v31
  %v70 = vunpack.c.l.b16 %v32
  %v71 = vunpack.c.l.b16 %v33
  %v72 = vunpack.c.l.b16 %v34
  %v73 = vunpack.c.l.b16 %v35
  %v74 = vunpack.c.l.b16 %v36
  %v75 = vunpack.c.l.b16 %v37
  %v76 = vunpack.c.l.b16 %v38
  %v77 = vunpack.c.l.b16 %v39
  %v78 = vunpack.c.l.b16 %v40
  %v79 = vunpack.c.l.b16 %v41
  %v80 = vunpack.c.l.b16 %v42
  %v81 = vunpack.c.l.b16 %v43
  %v82 = vpack.c.b16 %v67, %v66
  %v83 = vpack.c.b16 %v69, %v68
  %v84 = vpack.c.b16 %v71, %v70
  %v85 = vpack.c.b16 %v73, %v72
  %v86 = vpack.c.b16 %v75, %v74
  %v87 = vpack.c.b16 %v77, %v76
  %v88 = vpack.c.b16 %v79, %v78
  %v89 = vpack.c.b16 %v81, %v80
  %98 = vmatpush.bf16.msra.mxu0 %v89
  %99 = vmatpush.bf16.msra.mxu0 %v88
  %100 = vmatpush.bf16.msra.mxu0 %v87
  %101 = vmatpush.bf16.msra.mxu0 %v86
  %102 = vmatpush.bf16.msra.mxu0 %v85
  %103 = vmatpush.bf16.msra.mxu0 %v84
  %104 = vmatpush.bf16.msra.mxu0 %v83
  %105 = vmatpush.bf16.msra.mxu0 %v82
  %106 = vmatmul.bf16.gmra.mxu0 %v48
  %v107 = vpop.f32.mrf.mxu0
  %v108 = vadd.f32 0.0, %v107
  %v109 = vpop.f32.mrf.mxu0
  %v110 = vadd.f32 0.0, %v109
  %111 = vdwg.mxu0
  %v112 = vadd.f32 %v26, %v108
  %v113 = vadd.f32 %v27, %v110
  %vm114 = vcmask 261120
  %115 = vst.msk [vmem:[#allocation2] sm:$0xff] %vm114, %v112
  %116 = vst.msk [vmem:[#allocation2 + $0x8] sm:$0xff] %vm114, %v113
  // Predicated region
  $region22: #{_lambda_.41} parent=0 // pred_check
    %p117 = pneg %p17
  $region23: #{_lambda_.41} parent=0 // pred_check_branch
    %119 = sbr.rel (%p117) target = $region25
  $region24: #{_lambda_.41} parent=0 // pred_region
    %v120 = vld [vmem:[#allocation2] sm:$0xff]
    %v121 = vld [vmem:[#allocation2 + $0x8] sm:$0xff]
    %v122 = vld [vmem:[%s2] sm:$0x1]
    %v124 = vperm.slane %v122, 0
    %v126 = vadd.f32 %v120, %v124
    %v127 = vadd.f32 %v121, %v124
    %v128 = vld [vmem:[%s3] sm:$0xf]
    %v129 = vld [vmem:[%s3 + $0x4] sm:$0xf]
    %v130 = vunpack.c.l.bf16 %v128
    %v131 = vunpack.c.l.bf16 %v129
    %v132 = vadd.f32 %v126, %v130
    %v133 = vadd.f32 %v127, %v131
    %v134 = vpack.c.bf16 %v132, %v132
    %v135 = vpack.c.bf16 %v133, %v133
    %vm136 = vcmask 257024
    %137 = vst.msk [vmem:[%s4] sm:$0xf] %vm136, %v134
    %138 = vst.msk [vmem:[%s4 + $0x4] sm:$0xf] %vm136, %v135
  $region25: #{_lambda_.41} parent=0 // pred_fallthru
    _
  // Predicated region
  $region26: #{_lambda_.41} parent=0 // pred_check
    _
  $region27: #{_lambda_.41} parent=0 // pred_check_branch
    %140 = sbr.rel (0) target = $region29
  $region28: #{_lambda_.41} parent=0 // pred_region
    _
  $region29: #{_lambda_.41} parent=0 // pred_fallthru
    _
  // Predicated region
  $region30: #{_lambda_.41} parent=0 // pred_check
    _
  $region31: #{_lambda_.41} parent=0 // pred_check_branch
    %142 = sbr.rel (0) target = $region33
  $region32: #{_lambda_.41} parent=0 // pred_region
    _
  $region33: #{_lambda_.41} parent=0 // pred_fallthru
    _

</llo_original>
